<compile_context>
chip_gen: v7x
topology: tpu7x:2x2x1
jax: 0.10.0
libtpu: 0.0.40
codegen_flags: <defaults>
</compile_context>

<pallas_src>
import jax
import jax.numpy as jnp
from jax.experimental import pallas as pl
from jax.experimental.pallas import tpu as pltpu


def conv3x3_bn_relu_pallas(x, w_hwio, bias, gamma, beta, run_mean, run_var,
                           eps=1e-5):
    """Fused 3x3 'same' conv (stride 1) + BatchNorm(inference) + ReLU.

    x:       (N, H, W, Cin)    float32, NHWC
    w_hwio:  (3, 3, Cin, Cout) float32, HWIO
    bias, gamma, beta, run_mean, run_var: (Cout,) float32
    returns: (N, H, W, Cout)   float32
    """
    N, H, W, Cin = map(int, x.shape)
    K = int(w_hwio.shape[0])
    Cout = int(w_hwio.shape[3])
    assert K == 3 and int(w_hwio.shape[1]) == 3, "kernel is specialized for 3x3"
    assert W % 8 == 0, "width must be a multiple of 8 (sublane tiling)"
    assert Cin % 128 == 0 and Cout % 128 == 0, "channels must be lane-dense"
    HW = H * W

    # ---- operand prep (wrapper side, tiny) ---------------------------------
    # W2[ky, kx*Cin + ci, co] = w_hwio[ky, kx, ci, co]   (bf16 MXU feed)
    w2 = w_hwio.astype(jnp.bfloat16).reshape(K, K * Cin, Cout)

    # BatchNorm(inference) + conv bias folded into per-channel scale/shift (f32).
    inv_std = jax.lax.rsqrt(run_var.astype(jnp.float32) + eps)
    scale = (gamma * inv_std).reshape(1, Cout).astype(jnp.float32)
    shift = (beta + (bias - run_mean) * gamma * inv_std).reshape(1, Cout)
    shift = shift.astype(jnp.float32)

    # 0/1 edge masks over the flattened pixel index (shape (H*W, 1)): kill the
    # column that wraps across an image row when the LHS is rolled by +/-1.
    col = jnp.arange(HW, dtype=jnp.int32) % W
    keep_l = (col != 0).astype(jnp.float32).reshape(HW, 1)        # kx = 0 slab
    keep_r = (col != W - 1).astype(jnp.float32).reshape(HW, 1)    # kx = 2 slab

    def kernel(x_ref, w_ref, scale_ref, shift_ref, keepl_ref, keepr_ref,
               o_ref, xw_ref):
        # ---- width-im2col halo build (once per image) -----------------------
        #   xw[yp*W + x, kx*Cin + ci] = zero_padded_x[yp - 1, x - 1 + kx, ci]
        # All stores are full-width, sublane/lane aligned; the +/-1 pixel shifts
        # go through the XLU (pltpu.roll) instead of masked sub-slice stores,
        # and the f32 -> bf16 cast happens here (x arrives as f32).
        xv = x_ref[0].reshape(HW, Cin)                      # f32, free view (W % 8 == 0)
        left = pltpu.roll(xv, 1, 0) * keepl_ref[...]        # x[.., x-1, ..], 0 at x == 0
        right = pltpu.roll(xv, HW - 1, 0) * keepr_ref[...]  # x[.., x+1, ..], 0 at x == W-1

        zrow = jnp.zeros((W, K * Cin), jnp.bfloat16)
        xw_ref[0:W, :] = zrow                                # top padding row
        xw_ref[(H + 1) * W:(H + 2) * W, :] = zrow            # bottom padding row
        xw_ref[W:(H + 1) * W, 0:Cin] = left.astype(jnp.bfloat16)             # kx = 0
        xw_ref[W:(H + 1) * W, Cin:2 * Cin] = xv.astype(jnp.bfloat16)         # kx = 1
        xw_ref[W:(H + 1) * W, 2 * Cin:3 * Cin] = right.astype(jnp.bfloat16)  # kx = 2

        # ---- 3 MXU matmuls (M=H*W, K=3*Cin, N=Cout), f32 VMEM accumulation --
        # o_ref (f32, full image x Cout) is the accumulator; each LHS tap slice
        # is an aligned static view of the 2-D scratch.
        o_ref[0] = jnp.dot(xw_ref[0:HW, :], w_ref[0],
                           preferred_element_type=jnp.float32)
        o_ref[0] = o_ref[0] + jnp.dot(xw_ref[W:W + HW, :], w_ref[1],
                                      preferred_element_type=jnp.float32)
        acc = o_ref[0] + jnp.dot(xw_ref[2 * W:2 * W + HW, :], w_ref[2],
                                 preferred_element_type=jnp.float32)
        # folded BatchNorm (+ conv bias) and ReLU, f32 epilogue, fused with the
        # last accumulate.
        o_ref[0] = jnp.maximum(acc * scale_ref[...] + shift_ref[...], 0.0)

    out = pl.pallas_call(
        kernel,
        out_shape=jax.ShapeDtypeStruct((N, HW, Cout), jnp.float32),
        grid=(N,),
        in_specs=[
            pl.BlockSpec((1, H, W, Cin), lambda n: (n, 0, 0, 0)),
            pl.BlockSpec((K, K * Cin, Cout), lambda n: (0, 0, 0)),
            pl.BlockSpec((1, Cout), lambda n: (0, 0)),
            pl.BlockSpec((1, Cout), lambda n: (0, 0)),
            pl.BlockSpec((HW, 1), lambda n: (0, 0)),
            pl.BlockSpec((HW, 1), lambda n: (0, 0)),
        ],
        out_specs=pl.BlockSpec((1, HW, Cout), lambda n: (n, 0, 0)),
        scratch_shapes=[pltpu.VMEM(((H + 2) * W, K * Cin), jnp.bfloat16)],
        compiler_params=pltpu.CompilerParams(
            dimension_semantics=("parallel",)),
    )(x, w2, scale, shift, keep_l, keep_r)

    return out.reshape(N, H, W, Cout)


if __name__ == "__main__":
    N, Cin, H, W = 2, 256, 16, 16
    Cout, K = 256, 3

    key = jax.random.PRNGKey(0)
    k1, k2, k3, k4, k5, k6, k7 = jax.random.split(key, 7)

    # module input (NCHW as the PyTorch module expects)
    x_nchw = jax.random.uniform(k1, (N, Cin, H, W), jnp.float32)

    # Conv2d(256, 256, 3, padding=1) parameters (PyTorch-style uniform init)
    fan_in = Cin * K * K
    bound = 1.0 / (fan_in ** 0.5)
    w_oihw = jax.random.uniform(k2, (Cout, Cin, K, K), jnp.float32, -bound, bound)
    bias = jax.random.uniform(k3, (Cout,), jnp.float32, -bound, bound)

    # BatchNorm2d(256, affine=True) parameters / running stats (non-trivial to
    # exercise the fold; PyTorch fresh-module defaults would be 1/0/0/1).
    gamma = 0.5 + jax.random.uniform(k4, (Cout,), jnp.float32)
    beta = 0.1 * jax.random.normal(k5, (Cout,), jnp.float32)
    run_mean = 0.1 * jax.random.normal(k6, (Cout,), jnp.float32)
    run_var = 0.5 + jax.random.uniform(k7, (Cout,), jnp.float32)

    # layout boundary: NCHW -> NHWC, OIHW -> HWIO
    x = jnp.transpose(x_nchw, (0, 2, 3, 1))
    w_hwio = jnp.transpose(w_oihw, (2, 3, 1, 0))

    fwd = jax.jit(conv3x3_bn_relu_pallas)
    y = fwd(x, w_hwio, bias, gamma, beta, run_mean, run_var)
    jax.block_until_ready(y)

    # Numerical sanity check vs XLA conv on the same bf16-rounded operands.
    xq = x.astype(jnp.bfloat16).astype(jnp.float32)
    wq = w_hwio.astype(jnp.bfloat16).astype(jnp.float32)
    conv = jax.lax.conv_general_dilated(
        xq, wq, window_strides=(1, 1), padding='SAME',
        dimension_numbers=('NHWC', 'HWIO', 'NHWC')) + bias
    ref = jnp.maximum((conv - run_mean) * (gamma / jnp.sqrt(run_var + 1e-5))
                      + beta, 0.0)

    assert y.shape == (N, H, W, Cout), y.shape
    assert bool(jnp.all(jnp.isfinite(y)))
    err = float(jnp.max(jnp.abs(y - ref)))
    assert err < 5e-3, f"max abs error vs reference: {err}"
    print("KERNEL_OK")
</pallas_src>

<mosaic_0001>
module attributes {stable_mosaic.version = 11 : i64} {
  func.func @kernel(%arg0: i32, %arg1: memref<1x16x16x256xf32, #tpu.memory_space<vmem>>, %arg2: memref<3x768x256xbf16, #tpu.memory_space<vmem>>, %arg3: memref<1x256xf32, #tpu.memory_space<vmem>>, %arg4: memref<1x256xf32, #tpu.memory_space<vmem>>, %arg5: memref<256x1xf32, #tpu.memory_space<vmem>>, %arg6: memref<256x1xf32, #tpu.memory_space<vmem>>, %arg7: memref<1x256x256xf32, #tpu.memory_space<vmem>>, %arg8: memref<288x768xbf16, #tpu.memory_space<vmem>>) attributes {dimension_semantics = [#tpu.dimension_semantics<parallel>], iteration_bounds = array<i64: 2>, scalar_prefetch = 0 : i64, scratch_operands = 1 : i64, tpu.core_type = #tpu.core_type<tc>, window_params = [{transform_indices = @transform_0, window_bounds = array<i64: 1, 16, 16, 256>}, {pipeline_mode = #tpu.pipeline_mode<synchronous>, transform_indices = @transform_1, window_bounds = array<i64: 3, 768, 256>}, {pipeline_mode = #tpu.pipeline_mode<synchronous>, transform_indices = @transform_2, window_bounds = array<i64: 1, 256>}, {pipeline_mode = #tpu.pipeline_mode<synchronous>, transform_indices = @transform_3, window_bounds = array<i64: 1, 256>}, {pipeline_mode = #tpu.pipeline_mode<synchronous>, transform_indices = @transform_4, window_bounds = array<i64: 256, 1>}, {pipeline_mode = #tpu.pipeline_mode<synchronous>, transform_indices = @transform_5, window_bounds = array<i64: 256, 1>}, {transform_indices = @transform_6, window_bounds = array<i64: 1, 256, 256>}]} {
    %c0 = arith.constant 0 : index
    %c0_0 = arith.constant 0 : index
    %c0_1 = arith.constant 0 : index
    %c0_2 = arith.constant 0 : index
    %0 = vector.load %arg1[%c0, %c0_0, %c0_1, %c0_2] : memref<1x16x16x256xf32, #tpu.memory_space<vmem>>, vector<1x16x16x256xf32>
    %1 = vector.shape_cast %0 : vector<1x16x16x256xf32> to vector<16x16x256xf32>
    %2 = vector.shape_cast %1 : vector<16x16x256xf32> to vector<256x256xf32>
    %c1_i32 = arith.constant 1 : i32
    %3 = tpu.dynamic_rotate %2 by %c1_i32 dim 0 : vector<256x256xf32>, i32 -> vector<256x256xf32>
    %c0_3 = arith.constant 0 : index
    %c0_4 = arith.constant 0 : index
    %4 = vector.load %arg5[%c0_3, %c0_4] : memref<256x1xf32, #tpu.memory_space<vmem>>, vector<256x1xf32>
    %5 = vector.broadcast %4 : vector<256x1xf32> to vector<256x256xf32>
    %6 = arith.mulf %3, %5 : vector<256x256xf32>
    %c255_i32 = arith.constant 255 : i32
    %7 = tpu.dynamic_rotate %2 by %c255_i32 dim 0 : vector<256x256xf32>, i32 -> vector<256x256xf32>
    %c0_5 = arith.constant 0 : index
    %c0_6 = arith.constant 0 : index
    %8 = vector.load %arg6[%c0_5, %c0_6] : memref<256x1xf32, #tpu.memory_space<vmem>>, vector<256x1xf32>
    %9 = vector.broadcast %8 : vector<256x1xf32> to vector<256x256xf32>
    %10 = arith.mulf %7, %9 : vector<256x256xf32>
    %cst = arith.constant 0.000000e+00 : bf16
    %11 = vector.broadcast %cst : bf16 to vector<16x768xbf16>
    %c0_7 = arith.constant 0 : index
    %c0_8 = arith.constant 0 : index
    %12 = vector.load %arg8[%c0_7, %c0_8] : memref<288x768xbf16, #tpu.memory_space<vmem>>, vector<16x768xbf16>
    tpu.vector_store %arg8[%c0_7, %c0_8], %11 {strides = array<i32>} : memref<288x768xbf16, #tpu.memory_space<vmem>>, vector<16x768xbf16>,
    %c272 = arith.constant 272 : index
    %c0_9 = arith.constant 0 : index
    %13 = vector.load %arg8[%c272, %c0_9] : memref<288x768xbf16, #tpu.memory_space<vmem>>, vector<16x768xbf16>
    tpu.vector_store %arg8[%c272, %c0_9], %11 {strides = array<i32>} : memref<288x768xbf16, #tpu.memory_space<vmem>>, vector<16x768xbf16>,
    %14 = arith.truncf %6 : vector<256x256xf32> to vector<256x256xbf16>
    %c16 = arith.constant 16 : index
    %c0_10 = arith.constant 0 : index
    %15 = vector.load %arg8[%c16, %c0_10] : memref<288x768xbf16, #tpu.memory_space<vmem>>, vector<256x256xbf16>
    tpu.vector_store %arg8[%c16, %c0_10], %14 {strides = array<i32>} : memref<288x768xbf16, #tpu.memory_space<vmem>>, vector<256x256xbf16>,
    %16 = arith.truncf %2 : vector<256x256xf32> to vector<256x256xbf16>
    %c16_11 = arith.constant 16 : index
    %c256 = arith.constant 256 : index
    %17 = vector.load %arg8[%c16_11, %c256] : memref<288x768xbf16, #tpu.memory_space<vmem>>, vector<256x256xbf16>
    tpu.vector_store %arg8[%c16_11, %c256], %16 {strides = array<i32>} : memref<288x768xbf16, #tpu.memory_space<vmem>>, vector<256x256xbf16>,
    %18 = arith.truncf %10 : vector<256x256xf32> to vector<256x256xbf16>
    %c16_12 = arith.constant 16 : index
    %c512 = arith.constant 512 : index
    %19 = vector.load %arg8[%c16_12, %c512] : memref<288x768xbf16, #tpu.memory_space<vmem>>, vector<256x256xbf16>
    tpu.vector_store %arg8[%c16_12, %c512], %18 {strides = array<i32>} : memref<288x768xbf16, #tpu.memory_space<vmem>>, vector<256x256xbf16>,
    %c0_13 = arith.constant 0 : index
    %c0_14 = arith.constant 0 : index
    %20 = vector.load %arg8[%c0_13, %c0_14] : memref<288x768xbf16, #tpu.memory_space<vmem>>, vector<256x768xbf16>
    %c0_15 = arith.constant 0 : index
    %c0_16 = arith.constant 0 : index
    %c0_17 = arith.constant 0 : index
    %21 = vector.load %arg2[%c0_15, %c0_16, %c0_17] : memref<3x768x256xbf16, #tpu.memory_space<vmem>>, vector<1x768x256xbf16>
    %22 = vector.shape_cast %21 : vector<1x768x256xbf16> to vector<768x256xbf16>
    %cst_18 = arith.constant dense<0.000000e+00> : vector<256x256xf32>
    %23 = tpu.matmul %20, %22, %cst_18 {dimension_numbers = #tpu.dot_dimension_numbers<[1], [0], [0], [1], [0, 0, 1, 1], [], []>} : vector<256x768xbf16>, vector<768x256xbf16>, vector<256x256xf32> -> vector<256x256xf32>
    %c0_19 = arith.constant 0 : index
    %c0_20 = arith.constant 0 : index
    %c0_21 = arith.constant 0 : index
    %24 = vector.load %arg7[%c0_19, %c0_20, %c0_21] : memref<1x256x256xf32, #tpu.memory_space<vmem>>, vector<1x256x256xf32>
    %25 = vector.shape_cast %24 : vector<1x256x256xf32> to vector<256x256xf32>
    %26 = vector.shape_cast %23 : vector<256x256xf32> to vector<1x256x256xf32>
    tpu.vector_store %arg7[%c0_19, %c0_20, %c0_21], %26 {strides = array<i32>} : memref<1x256x256xf32, #tpu.memory_space<vmem>>, vector<1x256x256xf32>,
    %c0_22 = arith.constant 0 : index
    %c0_23 = arith.constant 0 : index
    %c0_24 = arith.constant 0 : index
    %27 = vector.load %arg7[%c0_22, %c0_23, %c0_24] : memref<1x256x256xf32, #tpu.memory_space<vmem>>, vector<1x256x256xf32>
    %28 = vector.shape_cast %27 : vector<1x256x256xf32> to vector<256x256xf32>
    %c16_25 = arith.constant 16 : index
    %c0_26 = arith.constant 0 : index
    %29 = vector.load %arg8[%c16_25, %c0_26] : memref<288x768xbf16, #tpu.memory_space<vmem>>, vector<256x768xbf16>
    %c1 = arith.constant 1 : index
    %c0_27 = arith.constant 0 : index
    %c0_28 = arith.constant 0 : index
    %30 = vector.load %arg2[%c1, %c0_27, %c0_28] : memref<3x768x256xbf16, #tpu.memory_space<vmem>>, vector<1x768x256xbf16>
    %31 = vector.shape_cast %30 : vector<1x768x256xbf16> to vector<768x256xbf16>
    %cst_29 = arith.constant dense<0.000000e+00> : vector<256x256xf32>
    %32 = tpu.matmul %29, %31, %cst_29 {dimension_numbers = #tpu.dot_dimension_numbers<[1], [0], [0], [1], [0, 0, 1, 1], [], []>} : vector<256x768xbf16>, vector<768x256xbf16>, vector<256x256xf32> -> vector<256x256xf32>
    %33 = arith.addf %28, %32 : vector<256x256xf32>
    %c0_30 = arith.constant 0 : index
    %c0_31 = arith.constant 0 : index
    %c0_32 = arith.constant 0 : index
    %34 = vector.load %arg7[%c0_30, %c0_31, %c0_32] : memref<1x256x256xf32, #tpu.memory_space<vmem>>, vector<1x256x256xf32>
    %35 = vector.shape_cast %34 : vector<1x256x256xf32> to vector<256x256xf32>
    %36 = vector.shape_cast %33 : vector<256x256xf32> to vector<1x256x256xf32>
    tpu.vector_store %arg7[%c0_30, %c0_31, %c0_32], %36 {strides = array<i32>} : memref<1x256x256xf32, #tpu.memory_space<vmem>>, vector<1x256x256xf32>,
    %c0_33 = arith.constant 0 : index
    %c0_34 = arith.constant 0 : index
    %c0_35 = arith.constant 0 : index
    %37 = vector.load %arg7[%c0_33, %c0_34, %c0_35] : memref<1x256x256xf32, #tpu.memory_space<vmem>>, vector<1x256x256xf32>
    %38 = vector.shape_cast %37 : vector<1x256x256xf32> to vector<256x256xf32>
    %c32 = arith.constant 32 : index
    %c0_36 = arith.constant 0 : index
    %39 = vector.load %arg8[%c32, %c0_36] : memref<288x768xbf16, #tpu.memory_space<vmem>>, vector<256x768xbf16>
    %c2 = arith.constant 2 : index
    %c0_37 = arith.constant 0 : index
    %c0_38 = arith.constant 0 : index
    %40 = vector.load %arg2[%c2, %c0_37, %c0_38] : memref<3x768x256xbf16, #tpu.memory_space<vmem>>, vector<1x768x256xbf16>
    %41 = vector.shape_cast %40 : vector<1x768x256xbf16> to vector<768x256xbf16>
    %cst_39 = arith.constant dense<0.000000e+00> : vector<256x256xf32>
    %42 = tpu.matmul %39, %41, %cst_39 {dimension_numbers = #tpu.dot_dimension_numbers<[1], [0], [0], [1], [0, 0, 1, 1], [], []>} : vector<256x768xbf16>, vector<768x256xbf16>, vector<256x256xf32> -> vector<256x256xf32>
    %43 = arith.addf %38, %42 : vector<256x256xf32>
    %c0_40 = arith.constant 0 : index
    %c0_41 = arith.constant 0 : index
    %44 = vector.load %arg3[%c0_40, %c0_41] : memref<1x256xf32, #tpu.memory_space<vmem>>, vector<1x256xf32>
    %45 = vector.broadcast %44 : vector<1x256xf32> to vector<256x256xf32>
    %46 = arith.mulf %43, %45 : vector<256x256xf32>
    %c0_42 = arith.constant 0 : index
    %c0_43 = arith.constant 0 : index
    %47 = vector.load %arg4[%c0_42, %c0_43] : memref<1x256xf32, #tpu.memory_space<vmem>>, vector<1x256xf32>
    %48 = vector.broadcast %47 : vector<1x256xf32> to vector<256x256xf32>
    %49 = arith.addf %46, %48 : vector<256x256xf32>
    %cst_44 = arith.constant 0.000000e+00 : f32
    %50 = vector.broadcast %cst_44 : f32 to vector<256x256xf32>
    %51 = arith.maximumf %49, %50 : vector<256x256xf32>
    %c0_45 = arith.constant 0 : index
    %c0_46 = arith.constant 0 : index
    %c0_47 = arith.constant 0 : index
    %52 = vector.load %arg7[%c0_45, %c0_46, %c0_47] : memref<1x256x256xf32, #tpu.memory_space<vmem>>, vector<1x256x256xf32>
    %53 = vector.shape_cast %52 : vector<1x256x256xf32> to vector<256x256xf32>
    %54 = vector.shape_cast %51 : vector<256x256xf32> to vector<1x256x256xf32>
    tpu.vector_store %arg7[%c0_45, %c0_46, %c0_47], %54 {strides = array<i32>} : memref<1x256x256xf32, #tpu.memory_space<vmem>>, vector<1x256x256xf32>,
    return
  }
  func.func @transform_0(%arg0: i32) -> (i32, i32, i32, i32) {
    %c0_i32 = arith.constant 0 : i32
    %c0_i32_0 = arith.constant 0 : i32
    %c0_i32_1 = arith.constant 0 : i32
    %c0_i32_2 = arith.constant 0 : i32
    return %arg0, %c0_i32, %c0_i32_0, %c0_i32_1 : i32, i32, i32, i32
  }
  func.func @transform_1(%arg0: i32) -> (i32, i32, i32) {
    %c0_i32 = arith.constant 0 : i32
    %c0_i32_0 = arith.constant 0 : i32
    %c0_i32_1 = arith.constant 0 : i32
    %c0_i32_2 = arith.constant 0 : i32
    return %c0_i32, %c0_i32_0, %c0_i32_1 : i32, i32, i32
  }
  func.func @transform_2(%arg0: i32) -> (i32, i32) {
    %c0_i32 = arith.constant 0 : i32
    %c0_i32_0 = arith.constant 0 : i32
    %c0_i32_1 = arith.constant 0 : i32
    return %c0_i32, %c0_i32_0 : i32, i32
  }
  func.func @transform_3(%arg0: i32) -> (i32, i32) {
    %c0_i32 = arith.constant 0 : i32
    %c0_i32_0 = arith.constant 0 : i32
    %c0_i32_1 = arith.constant 0 : i32
    return %c0_i32, %c0_i32_0 : i32, i32
  }
  func.func @transform_4(%arg0: i32) -> (i32, i32) {
    %c0_i32 = arith.constant 0 : i32
    %c0_i32_0 = arith.constant 0 : i32
    %c0_i32_1 = arith.constant 0 : i32
    return %c0_i32, %c0_i32_0 : i32, i32
  }
  func.func @transform_5(%arg0: i32) -> (i32, i32) {
    %c0_i32 = arith.constant 0 : i32
    %c0_i32_0 = arith.constant 0 : i32
    %c0_i32_1 = arith.constant 0 : i32
    return %c0_i32, %c0_i32_0 : i32, i32
  }
  func.func @transform_6(%arg0: i32) -> (i32, i32, i32) {
    %c0_i32 = arith.constant 0 : i32
    %c0_i32_0 = arith.constant 0 : i32
    %c0_i32_1 = arith.constant 0 : i32
    return %arg0, %c0_i32, %c0_i32_0 : i32, i32, i32
  }
}

</mosaic_0001>

<llo_original>
// kernel: conv3x3_bn_relu_pallas.1
$region0: #{conv3x3_bn_relu_pallas.1}
  #allocation0 [shape = 'u32[]', space=smem, size = 0x4, offset = 0x4, fixed_abs, tag = 'smem constant byte address 0x4 - core index']
  #allocation1 [shape = 'u32[144,128]{1,0:T(1,128)}', space=vmem, size = 0x12000, scoped, tag = 'internal scratch']
  #allocation2 [shape = 'bf16[288,768]{1,0:T(16,128)(2,1)}', space=vmem, size = 0x6c000, scoped, tag = 'scratch operand']
  %s0 = inlined_call_operand.vmem [shape: f32[2,16,16,256], index: 0, kind: input, shape index: {}]
  %s1 = inlined_call_operand.vmem [shape: bf16[3,768,256], index: 1, kind: input, shape index: {}]
  %s2 = inlined_call_operand.vmem [shape: f32[1,256], index: 2, kind: input, shape index: {}]
  %s3 = inlined_call_operand.vmem [shape: f32[1,256], index: 3, kind: input, shape index: {}]
  %s4 = inlined_call_operand.vmem [shape: f32[256,1], index: 4, kind: input, shape index: {}]
  %s5 = inlined_call_operand.vmem [shape: f32[256,1], index: 5, kind: input, shape index: {}]
  %s6 = inlined_call_operand.hbm [shape: f32[2,256,256], index: 6, kind: output, shape index: {}]
  %s7 = sld [smem:[#allocation0]]
  $region57: #{conv3x3_bn_relu_pallas.1} parent=0
    _
  %s9 = ssub.s32 1, %s7
  %s10 = scalar_select 0, %s9, %s7
  $region1: #{conv3x3_bn_relu_pallas.1} parent=0
    #allocation3 [shape = 'u8[524288]{0}', space=vmem, size = 0x80000, scoped, tag = 'output window, operand 0']
    #allocation4 [shape = 's32[2]{0}', space=sflag, size = 0x8, scoped, tag = 'scoped memory for conv3x3_bn_relu_pallas.1']
    %11 = vsyncpa [#allocation4], 0
    %s12 = scalar_lea.sflag [#allocation4], 1
    %13 = vsyncpa %s12, 0
    loop: start=0, step=1, limit=4
    $region2: #{conv3x3_bn_relu_pallas.1} parent=1 // loop_pre_header
      _
    $region3: #{conv3x3_bn_relu_pallas.1} parent=1 // loop_header
      %s15 = sphi 0, %s19
      %p16 = scmp.ge.s32.totalorder %s15, 4
      %s25 = sphi 0, %s27
      %s28 = sphi 0, %s25
      %s29 = sphi 0, %s28
      %s45 = sphi 0, %s29
      %s49 = sphi 0, %s49
      %s51 = sphi 0, %s49
      %s52 = sphi 0, %s51
      %s66 = sphi 0, %s52
      %s70 = sphi 0, %s70
      %s72 = sphi 0, %s70
      %s73 = sphi 0, %s72
      %s87 = sphi 0, %s73
      %s91 = sphi 0, %s91
      %s93 = sphi 0, %s91
      %s94 = sphi 0, %s93
      %s108 = sphi 0, %s94
      %s112 = sphi 0, %s112
      %s114 = sphi 0, %s112
      %s115 = sphi 0, %s114
      %s129 = sphi 0, %s115
      %s133 = sphi 0, %s133
      %s135 = sphi 0, %s133
      %s136 = sphi 0, %s135
      %s150 = sphi 0, %s136
      %s156 = sphi 0, %s158
      %s159 = sphi 0, %s156
      %s160 = sphi 0, %s159
      %s176 = sphi 0, %s160
    $region4: #{conv3x3_bn_relu_pallas.1} parent=1 // loop_header_branch
      %18 = sbr.rel (%p16) target = $region8
    $region5: #{conv3x3_bn_relu_pallas.1} parent=1 // loop_body
      %s20 = ssub.s32 %s15, 1
      %s21 = ssub.s32 %s15, 2
      %s22 = sadd.s32 %s15, 1
      %s23 = ssub.s32 %s15, %s22
      %p24 = scmp.eq.s32.totalorder %s23, 0
      %s26 = sadd.s32 %s25, 1
      %s27 = scalar_select %p24, %s25, %s26
      %p30 = pneg %p24
      %p31 = scmp.eq.s32.totalorder %s15, 1
      %p32 = por %p30, %p31
      %p33 = scmp.ne.s32.totalorder %s25, %s28
      %p34 = scmp.eq.s32.totalorder %s15, 0
      %p35 = por %p33, %p34
      %p36 = scmp.ne.s32.totalorder %s25, %s28
      %p37 = scmp.eq.s32.totalorder %s20, 1
      %p38 = por %p36, %p37
      %p39 = scmp.ne.s32.totalorder %s28, %s29
      %p40 = scmp.eq.s32.totalorder %s20, 0
      %p41 = por %p39, %p40
      %p42 = scmp.ne.s32.totalorder %s28, %s29
      %p43 = scmp.eq.s32.totalorder %s21, 1
      %p44 = por %p42, %p43
      %p46 = scmp.ne.s32.totalorder %s29, %s45
      %p47 = scmp.eq.s32.totalorder %s21, 0
      %p48 = por %p46, %p47
      %s50 = sadd.s32 %s49, 1
      %p53 = scmp.eq.s32.totalorder %s15, 1
      %p54 = scmp.ne.s32.totalorder %s49, %s51
      %p55 = scmp.eq.s32.totalorder %s15, 0
      %p56 = por %p54, %p55
      %p57 = scmp.ne.s32.totalorder %s49, %s51
      %p58 = scmp.eq.s32.totalorder %s20, 1
      %p59 = por %p57, %p58
      %p60 = scmp.ne.s32.totalorder %s51, %s52
      %p61 = scmp.eq.s32.totalorder %s20, 0
      %p62 = por %p60, %p61
      %p63 = scmp.ne.s32.totalorder %s51, %s52
      %p64 = scmp.eq.s32.totalorder %s21, 1
      %p65 = por %p63, %p64
      %p67 = scmp.ne.s32.totalorder %s52, %s66
      %p68 = scmp.eq.s32.totalorder %s21, 0
      %p69 = por %p67, %p68
      %s71 = sadd.s32 %s70, 1
      %p74 = scmp.eq.s32.totalorder %s15, 1
      %p75 = scmp.ne.s32.totalorder %s70, %s72
      %p76 = scmp.eq.s32.totalorder %s15, 0
      %p77 = por %p75, %p76
      %p78 = scmp.ne.s32.totalorder %s70, %s72
      %p79 = scmp.eq.s32.totalorder %s20, 1
      %p80 = por %p78, %p79
      %p81 = scmp.ne.s32.totalorder %s72, %s73
      %p82 = scmp.eq.s32.totalorder %s20, 0
      %p83 = por %p81, %p82
      %p84 = scmp.ne.s32.totalorder %s72, %s73
      %p85 = scmp.eq.s32.totalorder %s21, 1
      %p86 = por %p84, %p85
      %p88 = scmp.ne.s32.totalorder %s73, %s87
      %p89 = scmp.eq.s32.totalorder %s21, 0
      %p90 = por %p88, %p89
      %s92 = sadd.s32 %s91, 1
      %p95 = scmp.eq.s32.totalorder %s15, 1
      %p96 = scmp.ne.s32.totalorder %s91, %s93
      %p97 = scmp.eq.s32.totalorder %s15, 0
      %p98 = por %p96, %p97
      %p99 = scmp.ne.s32.totalorder %s91, %s93
      %p100 = scmp.eq.s32.totalorder %s20, 1
      %p101 = por %p99, %p100
      %p102 = scmp.ne.s32.totalorder %s93, %s94
      %p103 = scmp.eq.s32.totalorder %s20, 0
      %p104 = por %p102, %p103
      %p105 = scmp.ne.s32.totalorder %s93, %s94
      %p106 = scmp.eq.s32.totalorder %s21, 1
      %p107 = por %p105, %p106
      %p109 = scmp.ne.s32.totalorder %s94, %s108
      %p110 = scmp.eq.s32.totalorder %s21, 0
      %p111 = por %p109, %p110
      %s113 = sadd.s32 %s112, 1
      %p116 = scmp.eq.s32.totalorder %s15, 1
      %p117 = scmp.ne.s32.totalorder %s112, %s114
      %p118 = scmp.eq.s32.totalorder %s15, 0
      %p119 = por %p117, %p118
      %p120 = scmp.ne.s32.totalorder %s112, %s114
      %p121 = scmp.eq.s32.totalorder %s20, 1
      %p122 = por %p120, %p121
      %p123 = scmp.ne.s32.totalorder %s114, %s115
      %p124 = scmp.eq.s32.totalorder %s20, 0
      %p125 = por %p123, %p124
      %p126 = scmp.ne.s32.totalorder %s114, %s115
      %p127 = scmp.eq.s32.totalorder %s21, 1
      %p128 = por %p126, %p127
      %p130 = scmp.ne.s32.totalorder %s115, %s129
      %p131 = scmp.eq.s32.totalorder %s21, 0
      %p132 = por %p130, %p131
      %s134 = sadd.s32 %s133, 1
      %p137 = scmp.eq.s32.totalorder %s15, 1
      %p138 = scmp.ne.s32.totalorder %s133, %s135
      %p139 = scmp.eq.s32.totalorder %s15, 0
      %p140 = por %p138, %p139
      %p141 = scmp.ne.s32.totalorder %s133, %s135
      %p142 = scmp.eq.s32.totalorder %s20, 1
      %p143 = por %p141, %p142
      %p144 = scmp.ne.s32.totalorder %s135, %s136
      %p145 = scmp.eq.s32.totalorder %s20, 0
      %p146 = por %p144, %p145
      %p147 = scmp.ne.s32.totalorder %s135, %s136
      %p148 = scmp.eq.s32.totalorder %s21, 1
      %p149 = por %p147, %p148
      %p151 = scmp.ne.s32.totalorder %s136, %s150
      %p152 = scmp.eq.s32.totalorder %s21, 0
      %p153 = por %p151, %p152
      %s154 = ssub.s32 %s15, %s22
      %p155 = scmp.eq.s32.totalorder %s154, 0
      %s157 = sadd.s32 %s156, 1
      %s158 = scalar_select %p155, %s156, %s157
      %p161 = pneg %p155
      %p162 = scmp.eq.s32.totalorder %s15, 1
      %p163 = por %p161, %p162
      %p164 = scmp.ne.s32.totalorder %s156, %s159
      %p165 = scmp.eq.s32.totalorder %s15, 0
      %p166 = por %p164, %p165
      %p167 = scmp.ne.s32.totalorder %s156, %s159
      %p168 = scmp.eq.s32.totalorder %s20, 1
      %p169 = por %p167, %p168
      %p170 = scmp.ne.s32.totalorder %s159, %s160
      %p171 = scmp.eq.s32.totalorder %s20, 0
      %p172 = por %p170, %p171
      %p173 = scmp.ne.s32.totalorder %s159, %s160
      %p174 = scmp.eq.s32.totalorder %s21, 1
      %p175 = por %p173, %p174
      %p177 = scmp.ne.s32.totalorder %s160, %s176
      %p178 = scmp.eq.s32.totalorder %s21, 0
      %p179 = por %p177, %p178
      %p180 = scmp.le.s32.totalorder 1, %s15
      %p181 = scmp.lt.s32.totalorder %s15, 3
      %p182 = pnand %p180, %p181
      %p183 = pneg %p182
      // Predicated region
      $region9: #{conv3x3_bn_relu_pallas.1} parent=5 // pred_check
        _
      $region10: #{conv3x3_bn_relu_pallas.1} parent=5 // pred_check_branch
        %185 = sbr.rel (%p182) target = $region12
      $region11: #{conv3x3_bn_relu_pallas.1} parent=5 // pred_region
        %s186 = ssub.s32 %s15, 1
        // Predicated region
        $region13: #{conv3x3_bn_relu_pallas.1} parent=11 // pred_check
          %p187 = pneg %p62
        $region14: #{conv3x3_bn_relu_pallas.1} parent=11 // pred_check_branch
          %189 = sbr.rel (%p187) target = $region16
        $region15: #{conv3x3_bn_relu_pallas.1} parent=11 // pred_region
          _
        $region16: #{conv3x3_bn_relu_pallas.1} parent=11 // pred_fallthru
          _
        // Predicated region
        $region17: #{conv3x3_bn_relu_pallas.1} parent=11 // pred_check
          %p190 = pneg %p83
        $region18: #{conv3x3_bn_relu_pallas.1} parent=11 // pred_check_branch
          %192 = sbr.rel (%p190) target = $region20
        $region19: #{conv3x3_bn_relu_pallas.1} parent=11 // pred_region
          _
        $region20: #{conv3x3_bn_relu_pallas.1} parent=11 // pred_fallthru
          _
        // Predicated region
        $region21: #{conv3x3_bn_relu_pallas.1} parent=11 // pred_check
          %p193 = pneg %p104
        $region22: #{conv3x3_bn_relu_pallas.1} parent=11 // pred_check_branch
          %195 = sbr.rel (%p193) target = $region24
        $region23: #{conv3x3_bn_relu_pallas.1} parent=11 // pred_region
          _
        $region24: #{conv3x3_bn_relu_pallas.1} parent=11 // pred_fallthru
          _
        // Predicated region
        $region25: #{conv3x3_bn_relu_pallas.1} parent=11 // pred_check
          %p196 = pneg %p125
        $region26: #{conv3x3_bn_relu_pallas.1} parent=11 // pred_check_branch
          %198 = sbr.rel (%p196) target = $region28
        $region27: #{conv3x3_bn_relu_pallas.1} parent=11 // pred_region
          _
        $region28: #{conv3x3_bn_relu_pallas.1} parent=11 // pred_fallthru
          _
        // Predicated region
        $region29: #{conv3x3_bn_relu_pallas.1} parent=11 // pred_check
          %p199 = pneg %p146
        $region30: #{conv3x3_bn_relu_pallas.1} parent=11 // pred_check_branch
          %201 = sbr.rel (%p199) target = $region32
        $region31: #{conv3x3_bn_relu_pallas.1} parent=11 // pred_region
          _
        $region32: #{conv3x3_bn_relu_pallas.1} parent=11 // pred_fallthru
          _
      $region12: #{conv3x3_bn_relu_pallas.1} parent=5 // pred_fallthru
        _
      %p202 = scmp.lt.s32.totalorder %s15, 2
      // Predicated region
      $region33: #{conv3x3_bn_relu_pallas.1} parent=5 // pred_check
        %p203 = pneg %p202
      $region34: #{conv3x3_bn_relu_pallas.1} parent=5 // pred_check_branch
        %205 = sbr.rel (%p203) target = $region36
      $region35: #{conv3x3_bn_relu_pallas.1} parent=5 // pred_region
        // Predicated region
        $region37: #{conv3x3_bn_relu_pallas.1} parent=35 // pred_check
          %p206 = pneg %p35
        $region38: #{conv3x3_bn_relu_pallas.1} parent=35 // pred_check_branch
          %208 = sbr.rel (%p206) target = $region40
        $region39: #{conv3x3_bn_relu_pallas.1} parent=35 // pred_region
          %p209 = scmp.lt.s32.totalorder %s15, 1
          %s210 = scalar_select %p209, %s15, 1
          %s211 = smul.addr %s210, 64
          %s212 = smul.addr %s211, 8
          %s213 = scalar_lea.vmem %s0, %s212
        $region40: #{conv3x3_bn_relu_pallas.1} parent=35 // pred_fallthru
          _
      $region36: #{conv3x3_bn_relu_pallas.1} parent=5 // pred_fallthru
        _
      %p214 = scmp.le.s32.totalorder 1, %s15
      %p215 = scmp.lt.s32.totalorder %s15, 3
      %p216 = pnand %p214, %p215
      %p217 = pneg %p216
      // Predicated region
      $region41: #{conv3x3_bn_relu_pallas.1} parent=5 // pred_check
        _
      $region42: #{conv3x3_bn_relu_pallas.1} parent=5 // pred_check_branch
        %219 = sbr.rel (%p216) target = $region44
      $region43: #{conv3x3_bn_relu_pallas.1} parent=5 // pred_region
        %s220 = ssub.s32 %s15, 1
        %p221 = scmp.lt.s32.totalorder %s20, 1
        %s222 = scalar_select %p221, %s20, 1
        %s223 = smul.addr %s222, 64
        %s224 = smul.addr %s223, 8
        %s225 = scalar_lea.vmem %s0, %s224
        %p226 = pneg %p41
        %p227 = pneg %p38
        %p228 = pneg %p62
        %p229 = pneg %p59
        %p230 = pneg %p83
        %p231 = pneg %p80
        %p232 = pneg %p104
        %p233 = pneg %p101
        %p234 = pneg %p125
        %p235 = pneg %p122
        %p236 = pneg %p146
        %p237 = pneg %p143
        %p238 = pneg %p172
        %p239 = pneg %p169
        %s240 = sand.u32 %s159, 1
        %s241 = scalar_lea.sflag [#allocation4], %s240
        %s242 = sand.u32 %s159, 1
        %s243 = smul.addr %s242, 512
        %s244 = scalar_lea.vmem [#allocation3], %s243
        %p245 = scmp.lt.s32.totalorder %s20, 1
        %s246 = scalar_select %p245, %s20, 1
        %s247 = smul.addr %s246, 64
        %s248 = smul.addr %s247, 8
        %s249 = scalar_lea.vmem %s0, %s248
        %v251 = vld [vmem:[%s249] sm:$0xff]
        %v252 = vld [vmem:[%s249 + $0x8] sm:$0xff]
        %v253 = vld [vmem:[%s249 + $0x10] sm:$0xff]
        %v254 = vld [vmem:[%s249 + $0x18] sm:$0xff]
        %v255 = vld [vmem:[%s249 + $0x20] sm:$0xff]
        %v256 = vld [vmem:[%s249 + $0x28] sm:$0xff]
        %v257 = vld [vmem:[%s249 + $0x30] sm:$0xff]
        %v258 = vld [vmem:[%s249 + $0x38] sm:$0xff]
        %v259 = vld [vmem:[%s249 + $0x40] sm:$0xff]
        %v260 = vld [vmem:[%s249 + $0x48] sm:$0xff]
        %v261 = vld [vmem:[%s249 + $0x50] sm:$0xff]
        %v262 = vld [vmem:[%s249 + $0x58] sm:$0xff]
        %v263 = vld [vmem:[%s249 + $0x60] sm:$0xff]
        %v264 = vld [vmem:[%s249 + $0x68] sm:$0xff]
        %v265 = vld [vmem:[%s249 + $0x70] sm:$0xff]
        %v266 = vld [vmem:[%s249 + $0x78] sm:$0xff]
        %v267 = vld [vmem:[%s249 + $0x80] sm:$0xff]
        %v268 = vld [vmem:[%s249 + $0x88] sm:$0xff]
        %v269 = vld [vmem:[%s249 + $0x90] sm:$0xff]
        %v270 = vld [vmem:[%s249 + $0x98] sm:$0xff]
        %v271 = vld [vmem:[%s249 + $0xa0] sm:$0xff]
        %v272 = vld [vmem:[%s249 + $0xa8] sm:$0xff]
        %v273 = vld [vmem:[%s249 + $0xb0] sm:$0xff]
        %v274 = vld [vmem:[%s249 + $0xb8] sm:$0xff]
        %v275 = vld [vmem:[%s249 + $0xc0] sm:$0xff]
        %v276 = vld [vmem:[%s249 + $0xc8] sm:$0xff]
        %v277 = vld [vmem:[%s249 + $0xd0] sm:$0xff]
        %v278 = vld [vmem:[%s249 + $0xd8] sm:$0xff]
        %v279 = vld [vmem:[%s249 + $0xe0] sm:$0xff]
        %v280 = vld [vmem:[%s249 + $0xe8] sm:$0xff]
        %v281 = vld [vmem:[%s249 + $0xf0] sm:$0xff]
        %v282 = vld [vmem:[%s249 + $0xf8] sm:$0xff]
        %v283 = vld [vmem:[%s249 + $0x100] sm:$0xff]
        %v284 = vld [vmem:[%s249 + $0x108] sm:$0xff]
        %v285 = vld [vmem:[%s249 + $0x110] sm:$0xff]
        %v286 = vld [vmem:[%s249 + $0x118] sm:$0xff]
        %v287 = vld [vmem:[%s249 + $0x120] sm:$0xff]
        %v288 = vld [vmem:[%s249 + $0x128] sm:$0xff]
        %v289 = vld [vmem:[%s249 + $0x130] sm:$0xff]
        %v290 = vld [vmem:[%s249 + $0x138] sm:$0xff]
        %v291 = vld [vmem:[%s249 + $0x140] sm:$0xff]
        %v292 = vld [vmem:[%s249 + $0x148] sm:$0xff]
        %v293 = vld [vmem:[%s249 + $0x150] sm:$0xff]
        %v294 = vld [vmem:[%s249 + $0x158] sm:$0xff]
        %v295 = vld [vmem:[%s249 + $0x160] sm:$0xff]
        %v296 = vld [vmem:[%s249 + $0x168] sm:$0xff]
        %v297 = vld [vmem:[%s249 + $0x170] sm:$0xff]
        %v298 = vld [vmem:[%s249 + $0x178] sm:$0xff]
        %v299 = vld [vmem:[%s249 + $0x180] sm:$0xff]
        %v300 = vld [vmem:[%s249 + $0x188] sm:$0xff]
        %v301 = vld [vmem:[%s249 + $0x190] sm:$0xff]
        %v302 = vld [vmem:[%s249 + $0x198] sm:$0xff]
        %v303 = vld [vmem:[%s249 + $0x1a0] sm:$0xff]
        %v304 = vld [vmem:[%s249 + $0x1a8] sm:$0xff]
        %v305 = vld [vmem:[%s249 + $0x1b0] sm:$0xff]
        %v306 = vld [vmem:[%s249 + $0x1b8] sm:$0xff]
        %v307 = vld [vmem:[%s249 + $0x1c0] sm:$0xff]
        %v308 = vld [vmem:[%s249 + $0x1c8] sm:$0xff]
        %v309 = vld [vmem:[%s249 + $0x1d0] sm:$0xff]
        %v310 = vld [vmem:[%s249 + $0x1d8] sm:$0xff]
        %v311 = vld [vmem:[%s249 + $0x1e0] sm:$0xff]
        %v312 = vld [vmem:[%s249 + $0x1e8] sm:$0xff]
        %v313 = vld [vmem:[%s249 + $0x1f0] sm:$0xff]
        %v314 = vld [vmem:[%s249 + $0x1f8] sm:$0xff]
        %v315 = vrot.slane %v251, 7
        %v316 = vrot.slane %v252, 7
        %v317 = vrot.slane %v253, 7
        %v318 = vrot.slane %v254, 7
        %v319 = vrot.slane %v255, 7
        %v320 = vrot.slane %v256, 7
        %v321 = vrot.slane %v257, 7
        %v322 = vrot.slane %v258, 7
        %v323 = vrot.slane %v259, 7
        %v324 = vrot.slane %v260, 7
        %v325 = vrot.slane %v261, 7
        %v326 = vrot.slane %v262, 7
        %v327 = vrot.slane %v263, 7
        %v328 = vrot.slane %v264, 7
        %v329 = vrot.slane %v265, 7
        %v330 = vrot.slane %v266, 7
        %v331 = vrot.slane %v267, 7
        %v332 = vrot.slane %v268, 7
        %v333 = vrot.slane %v269, 7
        %v334 = vrot.slane %v270, 7
        %v335 = vrot.slane %v271, 7
        %v336 = vrot.slane %v272, 7
        %v337 = vrot.slane %v273, 7
        %v338 = vrot.slane %v274, 7
        %v339 = vrot.slane %v275, 7
        %v340 = vrot.slane %v276, 7
        %v341 = vrot.slane %v277, 7
        %v342 = vrot.slane %v278, 7
        %v343 = vrot.slane %v279, 7
        %v344 = vrot.slane %v280, 7
        %v345 = vrot.slane %v281, 7
        %v346 = vrot.slane %v282, 7
        %v347 = vrot.slane %v283, 7
        %v348 = vrot.slane %v284, 7
        %v349 = vrot.slane %v285, 7
        %v350 = vrot.slane %v286, 7
        %v351 = vrot.slane %v287, 7
        %v352 = vrot.slane %v288, 7
        %v353 = vrot.slane %v289, 7
        %v354 = vrot.slane %v290, 7
        %v355 = vrot.slane %v291, 7
        %v356 = vrot.slane %v292, 7
        %v357 = vrot.slane %v293, 7
        %v358 = vrot.slane %v294, 7
        %v359 = vrot.slane %v295, 7
        %v360 = vrot.slane %v296, 7
        %v361 = vrot.slane %v297, 7
        %v362 = vrot.slane %v298, 7
        %v363 = vrot.slane %v299, 7
        %v364 = vrot.slane %v300, 7
        %v365 = vrot.slane %v301, 7
        %v366 = vrot.slane %v302, 7
        %v367 = vrot.slane %v303, 7
        %v368 = vrot.slane %v304, 7
        %v369 = vrot.slane %v305, 7
        %v370 = vrot.slane %v306, 7
        %v371 = vrot.slane %v307, 7
        %v372 = vrot.slane %v308, 7
        %v373 = vrot.slane %v309, 7
        %v374 = vrot.slane %v310, 7
        %v375 = vrot.slane %v311, 7
        %v376 = vrot.slane %v312, 7
        %v377 = vrot.slane %v313, 7
        %v378 = vrot.slane %v314, 7
        %v379 = vlaneseq
        %v380 = vshrl.u32 %v379, 7
        %vm381 = vcmp.lt.s32.totalorder %v380, 1
        %v382 = vsel %vm381, %v375, %v377
        %v383 = vsel %vm381, %v376, %v378
        %v384 = vsel %vm381, %v373, %v375
        %v385 = vsel %vm381, %v374, %v376
        %v386 = vsel %vm381, %v371, %v373
        %v387 = vsel %vm381, %v372, %v374
        %v388 = vsel %vm381, %v369, %v371
        %v389 = vsel %vm381, %v370, %v372
        %v390 = vsel %vm381, %v367, %v369
        %v391 = vsel %vm381, %v368, %v370
        %v392 = vsel %vm381, %v365, %v367
        %v393 = vsel %vm381, %v366, %v368
        %v394 = vsel %vm381, %v363, %v365
        %v395 = vsel %vm381, %v364, %v366
        %v396 = vsel %vm381, %v361, %v363
        %v397 = vsel %vm381, %v362, %v364
        %v398 = vsel %vm381, %v359, %v361
        %v399 = vsel %vm381, %v360, %v362
        %v400 = vsel %vm381, %v357, %v359
        %v401 = vsel %vm381, %v358, %v360
        %v402 = vsel %vm381, %v355, %v357
        %v403 = vsel %vm381, %v356, %v358
        %v404 = vsel %vm381, %v353, %v355
        %v405 = vsel %vm381, %v354, %v356
        %v406 = vsel %vm381, %v351, %v353
        %v407 = vsel %vm381, %v352, %v354
        %v408 = vsel %vm381, %v349, %v351
        %v409 = vsel %vm381, %v350, %v352
        %v410 = vsel %vm381, %v347, %v349
        %v411 = vsel %vm381, %v348, %v350
        %v412 = vsel %vm381, %v345, %v347
        %v413 = vsel %vm381, %v346, %v348
        %v414 = vsel %vm381, %v343, %v345
        %v415 = vsel %vm381, %v344, %v346
        %v416 = vsel %vm381, %v341, %v343
        %v417 = vsel %vm381, %v342, %v344
        %v418 = vsel %vm381, %v339, %v341
        %v419 = vsel %vm381, %v340, %v342
        %v420 = vsel %vm381, %v337, %v339
        %v421 = vsel %vm381, %v338, %v340
        %v422 = vsel %vm381, %v335, %v337
        %v423 = vsel %vm381, %v336, %v338
        %v424 = vsel %vm381, %v333, %v335
        %v425 = vsel %vm381, %v334, %v336
        %v426 = vsel %vm381, %v331, %v333
        %v427 = vsel %vm381, %v332, %v334
        %v428 = vsel %vm381, %v329, %v331
        %v429 = vsel %vm381, %v330, %v332
        %v430 = vsel %vm381, %v327, %v329
        %v431 = vsel %vm381, %v328, %v330
        %v432 = vsel %vm381, %v325, %v327
        %v433 = vsel %vm381, %v326, %v328
        %v434 = vsel %vm381, %v323, %v325
        %v435 = vsel %vm381, %v324, %v326
        %v436 = vsel %vm381, %v321, %v323
        %v437 = vsel %vm381, %v322, %v324
        %v438 = vsel %vm381, %v319, %v321
        %v439 = vsel %vm381, %v320, %v322
        %v440 = vsel %vm381, %v317, %v319
        %v441 = vsel %vm381, %v318, %v320
        %v442 = vsel %vm381, %v315, %v317
        %v443 = vsel %vm381, %v316, %v318
        %v444 = vsel %vm381, %v377, %v315
        %v445 = vsel %vm381, %v378, %v316
        %v446 = vld [vmem:[%s4] sm:$0xff]
        %v447 = vld [vmem:[%s4 + $0x8] sm:$0xff]
        %v448 = vld [vmem:[%s4 + $0x10] sm:$0xff]
        %v449 = vld [vmem:[%s4 + $0x18] sm:$0xff]
        %v450 = vld [vmem:[%s4 + $0x20] sm:$0xff]
        %v451 = vld [vmem:[%s4 + $0x28] sm:$0xff]
        %v452 = vld [vmem:[%s4 + $0x30] sm:$0xff]
        %v453 = vld [vmem:[%s4 + $0x38] sm:$0xff]
        %v454 = vld [vmem:[%s4 + $0x40] sm:$0xff]
        %v455 = vld [vmem:[%s4 + $0x48] sm:$0xff]
        %v456 = vld [vmem:[%s4 + $0x50] sm:$0xff]
        %v457 = vld [vmem:[%s4 + $0x58] sm:$0xff]
        %v458 = vld [vmem:[%s4 + $0x60] sm:$0xff]
        %v459 = vld [vmem:[%s4 + $0x68] sm:$0xff]
        %v460 = vld [vmem:[%s4 + $0x70] sm:$0xff]
        %v461 = vld [vmem:[%s4 + $0x78] sm:$0xff]
        %v462 = vld [vmem:[%s4 + $0x80] sm:$0xff]
        %v463 = vld [vmem:[%s4 + $0x88] sm:$0xff]
        %v464 = vld [vmem:[%s4 + $0x90] sm:$0xff]
        %v465 = vld [vmem:[%s4 + $0x98] sm:$0xff]
        %v466 = vld [vmem:[%s4 + $0xa0] sm:$0xff]
        %v467 = vld [vmem:[%s4 + $0xa8] sm:$0xff]
        %v468 = vld [vmem:[%s4 + $0xb0] sm:$0xff]
        %v469 = vld [vmem:[%s4 + $0xb8] sm:$0xff]
        %v470 = vld [vmem:[%s4 + $0xc0] sm:$0xff]
        %v471 = vld [vmem:[%s4 + $0xc8] sm:$0xff]
        %v472 = vld [vmem:[%s4 + $0xd0] sm:$0xff]
        %v473 = vld [vmem:[%s4 + $0xd8] sm:$0xff]
        %v474 = vld [vmem:[%s4 + $0xe0] sm:$0xff]
        %v475 = vld [vmem:[%s4 + $0xe8] sm:$0xff]
        %v476 = vld [vmem:[%s4 + $0xf0] sm:$0xff]
        %v477 = vld [vmem:[%s4 + $0xf8] sm:$0xff]
        %479 = vset.pattern.permute.xlu0 0
        %480 = vperm.xlu0 %479, %v446
        %v481 = vpop.permute.xlu0 %480
        %484 = vset.pattern.permute.xlu0 0
        %485 = vperm.xlu0 %484, %v447
        %v486 = vpop.permute.xlu0 %485
        %489 = vset.pattern.permute.xlu0 0
        %490 = vperm.xlu0 %489, %v448
        %v491 = vpop.permute.xlu0 %490
        %494 = vset.pattern.permute.xlu0 0
        %495 = vperm.xlu0 %494, %v449
        %v496 = vpop.permute.xlu0 %495
        %499 = vset.pattern.permute.xlu0 0
        %500 = vperm.xlu0 %499, %v450
        %v501 = vpop.permute.xlu0 %500
        %504 = vset.pattern.permute.xlu0 0
        %505 = vperm.xlu0 %504, %v451
        %v506 = vpop.permute.xlu0 %505
        %509 = vset.pattern.permute.xlu0 0
        %510 = vperm.xlu0 %509, %v452
        %v511 = vpop.permute.xlu0 %510
        %514 = vset.pattern.permute.xlu0 0
        %515 = vperm.xlu0 %514, %v453
        %v516 = vpop.permute.xlu0 %515
        %519 = vset.pattern.permute.xlu0 0
        %520 = vperm.xlu0 %519, %v454
        %v521 = vpop.permute.xlu0 %520
        %524 = vset.pattern.permute.xlu0 0
        %525 = vperm.xlu0 %524, %v455
        %v526 = vpop.permute.xlu0 %525
        %529 = vset.pattern.permute.xlu0 0
        %530 = vperm.xlu0 %529, %v456
        %v531 = vpop.permute.xlu0 %530
        %534 = vset.pattern.permute.xlu0 0
        %535 = vperm.xlu0 %534, %v457
        %v536 = vpop.permute.xlu0 %535
        %539 = vset.pattern.permute.xlu0 0
        %540 = vperm.xlu0 %539, %v458
        %v541 = vpop.permute.xlu0 %540
        %544 = vset.pattern.permute.xlu0 0
        %545 = vperm.xlu0 %544, %v459
        %v546 = vpop.permute.xlu0 %545
        %549 = vset.pattern.permute.xlu0 0
        %550 = vperm.xlu0 %549, %v460
        %v551 = vpop.permute.xlu0 %550
        %554 = vset.pattern.permute.xlu0 0
        %555 = vperm.xlu0 %554, %v461
        %v556 = vpop.permute.xlu0 %555
        %559 = vset.pattern.permute.xlu0 0
        %560 = vperm.xlu0 %559, %v462
        %v561 = vpop.permute.xlu0 %560
        %564 = vset.pattern.permute.xlu0 0
        %565 = vperm.xlu0 %564, %v463
        %v566 = vpop.permute.xlu0 %565
        %569 = vset.pattern.permute.xlu0 0
        %570 = vperm.xlu0 %569, %v464
        %v571 = vpop.permute.xlu0 %570
        %574 = vset.pattern.permute.xlu0 0
        %575 = vperm.xlu0 %574, %v465
        %v576 = vpop.permute.xlu0 %575
        %579 = vset.pattern.permute.xlu0 0
        %580 = vperm.xlu0 %579, %v466
        %v581 = vpop.permute.xlu0 %580
        %584 = vset.pattern.permute.xlu0 0
        %585 = vperm.xlu0 %584, %v467
        %v586 = vpop.permute.xlu0 %585
        %589 = vset.pattern.permute.xlu0 0
        %590 = vperm.xlu0 %589, %v468
        %v591 = vpop.permute.xlu0 %590
        %594 = vset.pattern.permute.xlu0 0
        %595 = vperm.xlu0 %594, %v469
        %v596 = vpop.permute.xlu0 %595
        %599 = vset.pattern.permute.xlu0 0
        %600 = vperm.xlu0 %599, %v470
        %v601 = vpop.permute.xlu0 %600
        %604 = vset.pattern.permute.xlu0 0
        %605 = vperm.xlu0 %604, %v471
        %v606 = vpop.permute.xlu0 %605
        %609 = vset.pattern.permute.xlu0 0
        %610 = vperm.xlu0 %609, %v472
        %v611 = vpop.permute.xlu0 %610
        %614 = vset.pattern.permute.xlu0 0
        %615 = vperm.xlu0 %614, %v473
        %v616 = vpop.permute.xlu0 %615
        %619 = vset.pattern.permute.xlu0 0
        %620 = vperm.xlu0 %619, %v474
        %v621 = vpop.permute.xlu0 %620
        %624 = vset.pattern.permute.xlu0 0
        %625 = vperm.xlu0 %624, %v475
        %v626 = vpop.permute.xlu0 %625
        %629 = vset.pattern.permute.xlu0 0
        %630 = vperm.xlu0 %629, %v476
        %v631 = vpop.permute.xlu0 %630
        %634 = vset.pattern.permute.xlu0 0
        %635 = vperm.xlu0 %634, %v477
        %v636 = vpop.permute.xlu0 %635
        %v638 = vmul.f32 %v444, %v481
        %v639 = vmul.f32 %v445, %v481
        %v640 = vmul.f32 %v442, %v486
        %v641 = vmul.f32 %v443, %v486
        %v642 = vmul.f32 %v440, %v491
        %v643 = vmul.f32 %v441, %v491
        %v644 = vmul.f32 %v438, %v496
        %v645 = vmul.f32 %v439, %v496
        %v646 = vmul.f32 %v436, %v501
        %v647 = vmul.f32 %v437, %v501
        %v648 = vmul.f32 %v434, %v506
        %v649 = vmul.f32 %v435, %v506
        %v650 = vmul.f32 %v432, %v511
        %v651 = vmul.f32 %v433, %v511
        %v652 = vmul.f32 %v430, %v516
        %v653 = vmul.f32 %v431, %v516
        %v654 = vmul.f32 %v428, %v521
        %v655 = vmul.f32 %v429, %v521
        %v656 = vmul.f32 %v426, %v526
        %v657 = vmul.f32 %v427, %v526
        %v658 = vmul.f32 %v424, %v531
        %v659 = vmul.f32 %v425, %v531
        %v660 = vmul.f32 %v422, %v536
        %v661 = vmul.f32 %v423, %v536
        %v662 = vmul.f32 %v420, %v541
        %v663 = vmul.f32 %v421, %v541
        %v664 = vmul.f32 %v418, %v546
        %v665 = vmul.f32 %v419, %v546
        %v666 = vmul.f32 %v416, %v551
        %v667 = vmul.f32 %v417, %v551
        %v668 = vmul.f32 %v414, %v556
        %v669 = vmul.f32 %v415, %v556
        %v670 = vmul.f32 %v412, %v561
        %v671 = vmul.f32 %v413, %v561
        %v672 = vmul.f32 %v410, %v566
        %v673 = vmul.f32 %v411, %v566
        %v674 = vmul.f32 %v408, %v571
        %v675 = vmul.f32 %v409, %v571
        %v676 = vmul.f32 %v406, %v576
        %v677 = vmul.f32 %v407, %v576
        %v678 = vmul.f32 %v404, %v581
        %v679 = vmul.f32 %v405, %v581
        %v680 = vmul.f32 %v402, %v586
        %v681 = vmul.f32 %v403, %v586
        %v682 = vmul.f32 %v400, %v591
        %v683 = vmul.f32 %v401, %v591
        %v684 = vmul.f32 %v398, %v596
        %v685 = vmul.f32 %v399, %v596
        %v686 = vmul.f32 %v396, %v601
        %v687 = vmul.f32 %v397, %v601
        %v688 = vmul.f32 %v394, %v606
        %v689 = vmul.f32 %v395, %v606
        %v690 = vmul.f32 %v392, %v611
        %v691 = vmul.f32 %v393, %v611
        %v692 = vmul.f32 %v390, %v616
        %v693 = vmul.f32 %v391, %v616
        %v694 = vmul.f32 %v388, %v621
        %v695 = vmul.f32 %v389, %v621
        %v696 = vmul.f32 %v386, %v626
        %v697 = vmul.f32 %v387, %v626
        %v698 = vmul.f32 %v384, %v631
        %v699 = vmul.f32 %v385, %v631
        %v700 = vmul.f32 %v382, %v636
        %v701 = vmul.f32 %v383, %v636
        %v702 = vrot.slane %v251, 1
        %v703 = vrot.slane %v252, 1
        %v704 = vrot.slane %v253, 1
        %v705 = vrot.slane %v254, 1
        %v706 = vrot.slane %v255, 1
        %v707 = vrot.slane %v256, 1
        %v708 = vrot.slane %v257, 1
        %v709 = vrot.slane %v258, 1
        %v710 = vrot.slane %v259, 1
        %v711 = vrot.slane %v260, 1
        %v712 = vrot.slane %v261, 1
        %v713 = vrot.slane %v262, 1
        %v714 = vrot.slane %v263, 1
        %v715 = vrot.slane %v264, 1
        %v716 = vrot.slane %v265, 1
        %v717 = vrot.slane %v266, 1
        %v718 = vrot.slane %v267, 1
        %v719 = vrot.slane %v268, 1
        %v720 = vrot.slane %v269, 1
        %v721 = vrot.slane %v270, 1
        %v722 = vrot.slane %v271, 1
        %v723 = vrot.slane %v272, 1
        %v724 = vrot.slane %v273, 1
        %v725 = vrot.slane %v274, 1
        %v726 = vrot.slane %v275, 1
        %v727 = vrot.slane %v276, 1
        %v728 = vrot.slane %v277, 1
        %v729 = vrot.slane %v278, 1
        %v730 = vrot.slane %v279, 1
        %v731 = vrot.slane %v280, 1
        %v732 = vrot.slane %v281, 1
        %v733 = vrot.slane %v282, 1
        %v734 = vrot.slane %v283, 1
        %v735 = vrot.slane %v284, 1
        %v736 = vrot.slane %v285, 1
        %v737 = vrot.slane %v286, 1
        %v738 = vrot.slane %v287, 1
        %v739 = vrot.slane %v288, 1
        %v740 = vrot.slane %v289, 1
        %v741 = vrot.slane %v290, 1
        %v742 = vrot.slane %v291, 1
        %v743 = vrot.slane %v292, 1
        %v744 = vrot.slane %v293, 1
        %v745 = vrot.slane %v294, 1
        %v746 = vrot.slane %v295, 1
        %v747 = vrot.slane %v296, 1
        %v748 = vrot.slane %v297, 1
        %v749 = vrot.slane %v298, 1
        %v750 = vrot.slane %v299, 1
        %v751 = vrot.slane %v300, 1
        %v752 = vrot.slane %v301, 1
        %v753 = vrot.slane %v302, 1
        %v754 = vrot.slane %v303, 1
        %v755 = vrot.slane %v304, 1
        %v756 = vrot.slane %v305, 1
        %v757 = vrot.slane %v306, 1
        %v758 = vrot.slane %v307, 1
        %v759 = vrot.slane %v308, 1
        %v760 = vrot.slane %v309, 1
        %v761 = vrot.slane %v310, 1
        %v762 = vrot.slane %v311, 1
        %v763 = vrot.slane %v312, 1
        %v764 = vrot.slane %v313, 1
        %v765 = vrot.slane %v314, 1
        %vm766 = vcmp.lt.s32.totalorder %v380, 7
        %v767 = vsel %vm766, %v762, %v764
        %v768 = vsel %vm766, %v763, %v765
        %v769 = vsel %vm766, %v760, %v762
        %v770 = vsel %vm766, %v761, %v763
        %v771 = vsel %vm766, %v758, %v760
        %v772 = vsel %vm766, %v759, %v761
        %v773 = vsel %vm766, %v756, %v758
        %v774 = vsel %vm766, %v757, %v759
        %v775 = vsel %vm766, %v754, %v756
        %v776 = vsel %vm766, %v755, %v757
        %v777 = vsel %vm766, %v752, %v754
        %v778 = vsel %vm766, %v753, %v755
        %v779 = vsel %vm766, %v750, %v752
        %v780 = vsel %vm766, %v751, %v753
        %v781 = vsel %vm766, %v748, %v750
        %v782 = vsel %vm766, %v749, %v751
        %v783 = vsel %vm766, %v746, %v748
        %v784 = vsel %vm766, %v747, %v749
        %v785 = vsel %vm766, %v744, %v746
        %v786 = vsel %vm766, %v745, %v747
        %v787 = vsel %vm766, %v742, %v744
        %v788 = vsel %vm766, %v743, %v745
        %v789 = vsel %vm766, %v740, %v742
        %v790 = vsel %vm766, %v741, %v743
        %v791 = vsel %vm766, %v738, %v740
        %v792 = vsel %vm766, %v739, %v741
        %v793 = vsel %vm766, %v736, %v738
        %v794 = vsel %vm766, %v737, %v739
        %v795 = vsel %vm766, %v734, %v736
        %v796 = vsel %vm766, %v735, %v737
        %v797 = vsel %vm766, %v732, %v734
        %v798 = vsel %vm766, %v733, %v735
        %v799 = vsel %vm766, %v730, %v732
        %v800 = vsel %vm766, %v731, %v733
        %v801 = vsel %vm766, %v728, %v730
        %v802 = vsel %vm766, %v729, %v731
        %v803 = vsel %vm766, %v726, %v728
        %v804 = vsel %vm766, %v727, %v729
        %v805 = vsel %vm766, %v724, %v726
        %v806 = vsel %vm766, %v725, %v727
        %v807 = vsel %vm766, %v722, %v724
        %v808 = vsel %vm766, %v723, %v725
        %v809 = vsel %vm766, %v720, %v722
        %v810 = vsel %vm766, %v721, %v723
        %v811 = vsel %vm766, %v718, %v720
        %v812 = vsel %vm766, %v719, %v721
        %v813 = vsel %vm766, %v716, %v718
        %v814 = vsel %vm766, %v717, %v719
        %v815 = vsel %vm766, %v714, %v716
        %v816 = vsel %vm766, %v715, %v717
        %v817 = vsel %vm766, %v712, %v714
        %v818 = vsel %vm766, %v713, %v715
        %v819 = vsel %vm766, %v710, %v712
        %v820 = vsel %vm766, %v711, %v713
        %v821 = vsel %vm766, %v708, %v710
        %v822 = vsel %vm766, %v709, %v711
        %v823 = vsel %vm766, %v706, %v708
        %v824 = vsel %vm766, %v707, %v709
        %v825 = vsel %vm766, %v704, %v706
        %v826 = vsel %vm766, %v705, %v707
        %v827 = vsel %vm766, %v702, %v704
        %v828 = vsel %vm766, %v703, %v705
        %v829 = vsel %vm766, %v764, %v702
        %v830 = vsel %vm766, %v765, %v703
        %v831 = vld [vmem:[%s5] sm:$0xff]
        %v832 = vld [vmem:[%s5 + $0x8] sm:$0xff]
        %v833 = vld [vmem:[%s5 + $0x10] sm:$0xff]
        %v834 = vld [vmem:[%s5 + $0x18] sm:$0xff]
        %v835 = vld [vmem:[%s5 + $0x20] sm:$0xff]
        %v836 = vld [vmem:[%s5 + $0x28] sm:$0xff]
        %v837 = vld [vmem:[%s5 + $0x30] sm:$0xff]
        %v838 = vld [vmem:[%s5 + $0x38] sm:$0xff]
        %v839 = vld [vmem:[%s5 + $0x40] sm:$0xff]
        %v840 = vld [vmem:[%s5 + $0x48] sm:$0xff]
        %v841 = vld [vmem:[%s5 + $0x50] sm:$0xff]
        %v842 = vld [vmem:[%s5 + $0x58] sm:$0xff]
        %v843 = vld [vmem:[%s5 + $0x60] sm:$0xff]
        %v844 = vld [vmem:[%s5 + $0x68] sm:$0xff]
        %v845 = vld [vmem:[%s5 + $0x70] sm:$0xff]
        %v846 = vld [vmem:[%s5 + $0x78] sm:$0xff]
        %v847 = vld [vmem:[%s5 + $0x80] sm:$0xff]
        %v848 = vld [vmem:[%s5 + $0x88] sm:$0xff]
        %v849 = vld [vmem:[%s5 + $0x90] sm:$0xff]
        %v850 = vld [vmem:[%s5 + $0x98] sm:$0xff]
        %v851 = vld [vmem:[%s5 + $0xa0] sm:$0xff]
        %v852 = vld [vmem:[%s5 + $0xa8] sm:$0xff]
        %v853 = vld [vmem:[%s5 + $0xb0] sm:$0xff]
        %v854 = vld [vmem:[%s5 + $0xb8] sm:$0xff]
        %v855 = vld [vmem:[%s5 + $0xc0] sm:$0xff]
        %v856 = vld [vmem:[%s5 + $0xc8] sm:$0xff]
        %v857 = vld [vmem:[%s5 + $0xd0] sm:$0xff]
        %v858 = vld [vmem:[%s5 + $0xd8] sm:$0xff]
        %v859 = vld [vmem:[%s5 + $0xe0] sm:$0xff]
        %v860 = vld [vmem:[%s5 + $0xe8] sm:$0xff]
        %v861 = vld [vmem:[%s5 + $0xf0] sm:$0xff]
        %v862 = vld [vmem:[%s5 + $0xf8] sm:$0xff]
        %864 = vset.pattern.permute.xlu0 0
        %865 = vperm.xlu0 %864, %v831
        %v866 = vpop.permute.xlu0 %865
        %869 = vset.pattern.permute.xlu0 0
        %870 = vperm.xlu0 %869, %v832
        %v871 = vpop.permute.xlu0 %870
        %874 = vset.pattern.permute.xlu0 0
        %875 = vperm.xlu0 %874, %v833
        %v876 = vpop.permute.xlu0 %875
        %879 = vset.pattern.permute.xlu0 0
        %880 = vperm.xlu0 %879, %v834
        %v881 = vpop.permute.xlu0 %880
        %884 = vset.pattern.permute.xlu0 0
        %885 = vperm.xlu0 %884, %v835
        %v886 = vpop.permute.xlu0 %885
        %889 = vset.pattern.permute.xlu0 0
        %890 = vperm.xlu0 %889, %v836
        %v891 = vpop.permute.xlu0 %890
        %894 = vset.pattern.permute.xlu0 0
        %895 = vperm.xlu0 %894, %v837
        %v896 = vpop.permute.xlu0 %895
        %899 = vset.pattern.permute.xlu0 0
        %900 = vperm.xlu0 %899, %v838
        %v901 = vpop.permute.xlu0 %900
        %904 = vset.pattern.permute.xlu0 0
        %905 = vperm.xlu0 %904, %v839
        %v906 = vpop.permute.xlu0 %905
        %909 = vset.pattern.permute.xlu0 0
        %910 = vperm.xlu0 %909, %v840
        %v911 = vpop.permute.xlu0 %910
        %914 = vset.pattern.permute.xlu0 0
        %915 = vperm.xlu0 %914, %v841
        %v916 = vpop.permute.xlu0 %915
        %919 = vset.pattern.permute.xlu0 0
        %920 = vperm.xlu0 %919, %v842
        %v921 = vpop.permute.xlu0 %920
        %924 = vset.pattern.permute.xlu0 0
        %925 = vperm.xlu0 %924, %v843
        %v926 = vpop.permute.xlu0 %925
        %929 = vset.pattern.permute.xlu0 0
        %930 = vperm.xlu0 %929, %v844
        %v931 = vpop.permute.xlu0 %930
        %934 = vset.pattern.permute.xlu0 0
        %935 = vperm.xlu0 %934, %v845
        %v936 = vpop.permute.xlu0 %935
        %939 = vset.pattern.permute.xlu0 0
        %940 = vperm.xlu0 %939, %v846
        %v941 = vpop.permute.xlu0 %940
        %944 = vset.pattern.permute.xlu0 0
        %945 = vperm.xlu0 %944, %v847
        %v946 = vpop.permute.xlu0 %945
        %949 = vset.pattern.permute.xlu0 0
        %950 = vperm.xlu0 %949, %v848
        %v951 = vpop.permute.xlu0 %950
        %954 = vset.pattern.permute.xlu0 0
        %955 = vperm.xlu0 %954, %v849
        %v956 = vpop.permute.xlu0 %955
        %959 = vset.pattern.permute.xlu0 0
        %960 = vperm.xlu0 %959, %v850
        %v961 = vpop.permute.xlu0 %960
        %964 = vset.pattern.permute.xlu0 0
        %965 = vperm.xlu0 %964, %v851
        %v966 = vpop.permute.xlu0 %965
        %969 = vset.pattern.permute.xlu0 0
        %970 = vperm.xlu0 %969, %v852
        %v971 = vpop.permute.xlu0 %970
        %974 = vset.pattern.permute.xlu0 0
        %975 = vperm.xlu0 %974, %v853
        %v976 = vpop.permute.xlu0 %975
        %979 = vset.pattern.permute.xlu0 0
        %980 = vperm.xlu0 %979, %v854
        %v981 = vpop.permute.xlu0 %980
        %984 = vset.pattern.permute.xlu0 0
        %985 = vperm.xlu0 %984, %v855
        %v986 = vpop.permute.xlu0 %985
        %989 = vset.pattern.permute.xlu0 0
        %990 = vperm.xlu0 %989, %v856
        %v991 = vpop.permute.xlu0 %990
        %994 = vset.pattern.permute.xlu0 0
        %995 = vperm.xlu0 %994, %v857
        %v996 = vpop.permute.xlu0 %995
        %999 = vset.pattern.permute.xlu0 0
        %1000 = vperm.xlu0 %999, %v858
        %v1001 = vpop.permute.xlu0 %1000
        %1004 = vset.pattern.permute.xlu0 0
        %1005 = vperm.xlu0 %1004, %v859
        %v1006 = vpop.permute.xlu0 %1005
        %1009 = vset.pattern.permute.xlu0 0
        %1010 = vperm.xlu0 %1009, %v860
        %v1011 = vpop.permute.xlu0 %1010
        %1014 = vset.pattern.permute.xlu0 0
        %1015 = vperm.xlu0 %1014, %v861
        %v1016 = vpop.permute.xlu0 %1015
        %1019 = vset.pattern.permute.xlu0 0
        %1020 = vperm.xlu0 %1019, %v862
        %v1021 = vpop.permute.xlu0 %1020
        %v1023 = vmul.f32 %v827, %v866
        %v1024 = vmul.f32 %v828, %v866
        %v1025 = vmul.f32 %v825, %v871
        %v1026 = vmul.f32 %v826, %v871
        %v1027 = vmul.f32 %v823, %v876
        %v1028 = vmul.f32 %v824, %v876
        %v1029 = vmul.f32 %v821, %v881
        %v1030 = vmul.f32 %v822, %v881
        %v1031 = vmul.f32 %v819, %v886
        %v1032 = vmul.f32 %v820, %v886
        %v1033 = vmul.f32 %v817, %v891
        %v1034 = vmul.f32 %v818, %v891
        %v1035 = vmul.f32 %v815, %v896
        %v1036 = vmul.f32 %v816, %v896
        %v1037 = vmul.f32 %v813, %v901
        %v1038 = vmul.f32 %v814, %v901
        %v1039 = vmul.f32 %v811, %v906
        %v1040 = vmul.f32 %v812, %v906
        %v1041 = vmul.f32 %v809, %v911
        %v1042 = vmul.f32 %v810, %v911
        %v1043 = vmul.f32 %v807, %v916
        %v1044 = vmul.f32 %v808, %v916
        %v1045 = vmul.f32 %v805, %v921
        %v1046 = vmul.f32 %v806, %v921
        %v1047 = vmul.f32 %v803, %v926
        %v1048 = vmul.f32 %v804, %v926
        %v1049 = vmul.f32 %v801, %v931
        %v1050 = vmul.f32 %v802, %v931
        %v1051 = vmul.f32 %v799, %v936
        %v1052 = vmul.f32 %v800, %v936
        %v1053 = vmul.f32 %v797, %v941
        %v1054 = vmul.f32 %v798, %v941
        %v1055 = vmul.f32 %v795, %v946
        %v1056 = vmul.f32 %v796, %v946
        %v1057 = vmul.f32 %v793, %v951
        %v1058 = vmul.f32 %v794, %v951
        %v1059 = vmul.f32 %v791, %v956
        %v1060 = vmul.f32 %v792, %v956
        %v1061 = vmul.f32 %v789, %v961
        %v1062 = vmul.f32 %v790, %v961
        %v1063 = vmul.f32 %v787, %v966
        %v1064 = vmul.f32 %v788, %v966
        %v1065 = vmul.f32 %v785, %v971
        %v1066 = vmul.f32 %v786, %v971
        %v1067 = vmul.f32 %v783, %v976
        %v1068 = vmul.f32 %v784, %v976
        %v1069 = vmul.f32 %v781, %v981
        %v1070 = vmul.f32 %v782, %v981
        %v1071 = vmul.f32 %v779, %v986
        %v1072 = vmul.f32 %v780, %v986
        %v1073 = vmul.f32 %v777, %v991
        %v1074 = vmul.f32 %v778, %v991
        %v1075 = vmul.f32 %v775, %v996
        %v1076 = vmul.f32 %v776, %v996
        %v1077 = vmul.f32 %v773, %v1001
        %v1078 = vmul.f32 %v774, %v1001
        %v1079 = vmul.f32 %v771, %v1006
        %v1080 = vmul.f32 %v772, %v1006
        %v1081 = vmul.f32 %v769, %v1011
        %v1082 = vmul.f32 %v770, %v1011
        %v1083 = vmul.f32 %v767, %v1016
        %v1084 = vmul.f32 %v768, %v1016
        %v1085 = vmul.f32 %v829, %v1021
        %v1086 = vmul.f32 %v830, %v1021
        %1087 = vst [vmem:[#allocation2] sm:$0xff] 0
        %1088 = vst [vmem:[#allocation2 + $0x8] sm:$0xff] 0
        %1089 = vst [vmem:[#allocation2 + $0x10] sm:$0xff] 0
        %1090 = vst [vmem:[#allocation2 + $0x18] sm:$0xff] 0
        %1091 = vst [vmem:[#allocation2 + $0x20] sm:$0xff] 0
        %1092 = vst [vmem:[#allocation2 + $0x28] sm:$0xff] 0
        %1093 = vst [vmem:[#allocation2 + $0x330] sm:$0xff] 0
        %1094 = vst [vmem:[#allocation2 + $0x338] sm:$0xff] 0
        %1095 = vst [vmem:[#allocation2 + $0x340] sm:$0xff] 0
        %1096 = vst [vmem:[#allocation2 + $0x348] sm:$0xff] 0
        %1097 = vst [vmem:[#allocation2 + $0x350] sm:$0xff] 0
        %1098 = vst [vmem:[#allocation2 + $0x358] sm:$0xff] 0
        %v1099 = vpack.c.bf16 %v640, %v638
        %v1100 = vpack.c.bf16 %v641, %v639
        %v1101 = vpack.c.bf16 %v644, %v642
        %v1102 = vpack.c.bf16 %v645, %v643
        %v1103 = vpack.c.bf16 %v648, %v646
        %v1104 = vpack.c.bf16 %v649, %v647
        %v1105 = vpack.c.bf16 %v652, %v650
        %v1106 = vpack.c.bf16 %v653, %v651
        %v1107 = vpack.c.bf16 %v656, %v654
        %v1108 = vpack.c.bf16 %v657, %v655
        %v1109 = vpack.c.bf16 %v660, %v658
        %v1110 = vpack.c.bf16 %v661, %v659
        %v1111 = vpack.c.bf16 %v664, %v662
        %v1112 = vpack.c.bf16 %v665, %v663
        %v1113 = vpack.c.bf16 %v668, %v666
        %v1114 = vpack.c.bf16 %v669, %v667
        %v1115 = vpack.c.bf16 %v672, %v670
        %v1116 = vpack.c.bf16 %v673, %v671
        %v1117 = vpack.c.bf16 %v676, %v674
        %v1118 = vpack.c.bf16 %v677, %v675
        %v1119 = vpack.c.bf16 %v680, %v678
        %v1120 = vpack.c.bf16 %v681, %v679
        %v1121 = vpack.c.bf16 %v684, %v682
        %v1122 = vpack.c.bf16 %v685, %v683
        %v1123 = vpack.c.bf16 %v688, %v686
        %v1124 = vpack.c.bf16 %v689, %v687
        %v1125 = vpack.c.bf16 %v692, %v690
        %v1126 = vpack.c.bf16 %v693, %v691
        %v1127 = vpack.c.bf16 %v696, %v694
        %v1128 = vpack.c.bf16 %v697, %v695
        %v1129 = vpack.c.bf16 %v700, %v698
        %v1130 = vpack.c.bf16 %v701, %v699
        %1131 = vst [vmem:[#allocation2 + $0x30] sm:$0xff] %v1099
        %1132 = vst [vmem:[#allocation2 + $0x38] sm:$0xff] %v1100
        %1133 = vst [vmem:[#allocation2 + $0x60] sm:$0xff] %v1101
        %1134 = vst [vmem:[#allocation2 + $0x68] sm:$0xff] %v1102
        %1135 = vst [vmem:[#allocation2 + $0x90] sm:$0xff] %v1103
        %1136 = vst [vmem:[#allocation2 + $0x98] sm:$0xff] %v1104
        %1137 = vst [vmem:[#allocation2 + $0xc0] sm:$0xff] %v1105
        %1138 = vst [vmem:[#allocation2 + $0xc8] sm:$0xff] %v1106
        %1139 = vst [vmem:[#allocation2 + $0xf0] sm:$0xff] %v1107
        %1140 = vst [vmem:[#allocation2 + $0xf8] sm:$0xff] %v1108
        %1141 = vst [vmem:[#allocation2 + $0x120] sm:$0xff] %v1109
        %1142 = vst [vmem:[#allocation2 + $0x128] sm:$0xff] %v1110
        %1143 = vst [vmem:[#allocation2 + $0x150] sm:$0xff] %v1111
        %1144 = vst [vmem:[#allocation2 + $0x158] sm:$0xff] %v1112
        %1145 = vst [vmem:[#allocation2 + $0x180] sm:$0xff] %v1113
        %1146 = vst [vmem:[#allocation2 + $0x188] sm:$0xff] %v1114
        %1147 = vst [vmem:[#allocation2 + $0x1b0] sm:$0xff] %v1115
        %1148 = vst [vmem:[#allocation2 + $0x1b8] sm:$0xff] %v1116
        %1149 = vst [vmem:[#allocation2 + $0x1e0] sm:$0xff] %v1117
        %1150 = vst [vmem:[#allocation2 + $0x1e8] sm:$0xff] %v1118
        %1151 = vst [vmem:[#allocation2 + $0x210] sm:$0xff] %v1119
        %1152 = vst [vmem:[#allocation2 + $0x218] sm:$0xff] %v1120
        %1153 = vst [vmem:[#allocation2 + $0x240] sm:$0xff] %v1121
        %1154 = vst [vmem:[#allocation2 + $0x248] sm:$0xff] %v1122
        %1155 = vst [vmem:[#allocation2 + $0x270] sm:$0xff] %v1123
        %1156 = vst [vmem:[#allocation2 + $0x278] sm:$0xff] %v1124
        %1157 = vst [vmem:[#allocation2 + $0x2a0] sm:$0xff] %v1125
        %1158 = vst [vmem:[#allocation2 + $0x2a8] sm:$0xff] %v1126
        %1159 = vst [vmem:[#allocation2 + $0x2d0] sm:$0xff] %v1127
        %1160 = vst [vmem:[#allocation2 + $0x2d8] sm:$0xff] %v1128
        %1161 = vst [vmem:[#allocation2 + $0x300] sm:$0xff] %v1129
        %1162 = vst [vmem:[#allocation2 + $0x308] sm:$0xff] %v1130
        %v1163 = vpack.c.bf16 %v253, %v251
        %v1164 = vpack.c.bf16 %v254, %v252
        %v1165 = vpack.c.bf16 %v257, %v255
        %v1166 = vpack.c.bf16 %v258, %v256
        %v1167 = vpack.c.bf16 %v261, %v259
        %v1168 = vpack.c.bf16 %v262, %v260
        %v1169 = vpack.c.bf16 %v265, %v263
        %v1170 = vpack.c.bf16 %v266, %v264
        %v1171 = vpack.c.bf16 %v269, %v267
        %v1172 = vpack.c.bf16 %v270, %v268
        %v1173 = vpack.c.bf16 %v273, %v271
        %v1174 = vpack.c.bf16 %v274, %v272
        %v1175 = vpack.c.bf16 %v277, %v275
        %v1176 = vpack.c.bf16 %v278, %v276
        %v1177 = vpack.c.bf16 %v281, %v279
        %v1178 = vpack.c.bf16 %v282, %v280
        %v1179 = vpack.c.bf16 %v285, %v283
        %v1180 = vpack.c.bf16 %v286, %v284
        %v1181 = vpack.c.bf16 %v289, %v287
        %v1182 = vpack.c.bf16 %v290, %v288
        %v1183 = vpack.c.bf16 %v293, %v291
        %v1184 = vpack.c.bf16 %v294, %v292
        %v1185 = vpack.c.bf16 %v297, %v295
        %v1186 = vpack.c.bf16 %v298, %v296
        %v1187 = vpack.c.bf16 %v301, %v299
        %v1188 = vpack.c.bf16 %v302, %v300
        %v1189 = vpack.c.bf16 %v305, %v303
        %v1190 = vpack.c.bf16 %v306, %v304
        %v1191 = vpack.c.bf16 %v309, %v307
        %v1192 = vpack.c.bf16 %v310, %v308
        %v1193 = vpack.c.bf16 %v313, %v311
        %v1194 = vpack.c.bf16 %v314, %v312
        %1195 = vst [vmem:[#allocation2 + $0x40] sm:$0xff] %v1163
        %1196 = vst [vmem:[#allocation2 + $0x48] sm:$0xff] %v1164
        %1197 = vst [vmem:[#allocation2 + $0x70] sm:$0xff] %v1165
        %1198 = vst [vmem:[#allocation2 + $0x78] sm:$0xff] %v1166
        %1199 = vst [vmem:[#allocation2 + $0xa0] sm:$0xff] %v1167
        %1200 = vst [vmem:[#allocation2 + $0xa8] sm:$0xff] %v1168
        %1201 = vst [vmem:[#allocation2 + $0xd0] sm:$0xff] %v1169
        %1202 = vst [vmem:[#allocation2 + $0xd8] sm:$0xff] %v1170
        %1203 = vst [vmem:[#allocation2 + $0x100] sm:$0xff] %v1171
        %1204 = vst [vmem:[#allocation2 + $0x108] sm:$0xff] %v1172
        %1205 = vst [vmem:[#allocation2 + $0x130] sm:$0xff] %v1173
        %1206 = vst [vmem:[#allocation2 + $0x138] sm:$0xff] %v1174
        %1207 = vst [vmem:[#allocation2 + $0x160] sm:$0xff] %v1175
        %1208 = vst [vmem:[#allocation2 + $0x168] sm:$0xff] %v1176
        %1209 = vst [vmem:[#allocation2 + $0x190] sm:$0xff] %v1177
        %1210 = vst [vmem:[#allocation2 + $0x198] sm:$0xff] %v1178
        %1211 = vst [vmem:[#allocation2 + $0x1c0] sm:$0xff] %v1179
        %1212 = vst [vmem:[#allocation2 + $0x1c8] sm:$0xff] %v1180
        %1213 = vst [vmem:[#allocation2 + $0x1f0] sm:$0xff] %v1181
        %1214 = vst [vmem:[#allocation2 + $0x1f8] sm:$0xff] %v1182
        %1215 = vst [vmem:[#allocation2 + $0x220] sm:$0xff] %v1183
        %1216 = vst [vmem:[#allocation2 + $0x228] sm:$0xff] %v1184
        %1217 = vst [vmem:[#allocation2 + $0x250] sm:$0xff] %v1185
        %1218 = vst [vmem:[#allocation2 + $0x258] sm:$0xff] %v1186
        %1219 = vst [vmem:[#allocation2 + $0x280] sm:$0xff] %v1187
        %1220 = vst [vmem:[#allocation2 + $0x288] sm:$0xff] %v1188
        %1221 = vst [vmem:[#allocation2 + $0x2b0] sm:$0xff] %v1189
        %1222 = vst [vmem:[#allocation2 + $0x2b8] sm:$0xff] %v1190
        %1223 = vst [vmem:[#allocation2 + $0x2e0] sm:$0xff] %v1191
        %1224 = vst [vmem:[#allocation2 + $0x2e8] sm:$0xff] %v1192
        %1225 = vst [vmem:[#allocation2 + $0x310] sm:$0xff] %v1193
        %1226 = vst [vmem:[#allocation2 + $0x318] sm:$0xff] %v1194
        %v1227 = vpack.c.bf16 %v1025, %v1023
        %v1228 = vpack.c.bf16 %v1026, %v1024
        %v1229 = vpack.c.bf16 %v1029, %v1027
        %v1230 = vpack.c.bf16 %v1030, %v1028
        %v1231 = vpack.c.bf16 %v1033, %v1031
        %v1232 = vpack.c.bf16 %v1034, %v1032
        %v1233 = vpack.c.bf16 %v1037, %v1035
        %v1234 = vpack.c.bf16 %v1038, %v1036
        %v1235 = vpack.c.bf16 %v1041, %v1039
        %v1236 = vpack.c.bf16 %v1042, %v1040
        %v1237 = vpack.c.bf16 %v1045, %v1043
        %v1238 = vpack.c.bf16 %v1046, %v1044
        %v1239 = vpack.c.bf16 %v1049, %v1047
        %v1240 = vpack.c.bf16 %v1050, %v1048
        %v1241 = vpack.c.bf16 %v1053, %v1051
        %v1242 = vpack.c.bf16 %v1054, %v1052
        %v1243 = vpack.c.bf16 %v1057, %v1055
        %v1244 = vpack.c.bf16 %v1058, %v1056
        %v1245 = vpack.c.bf16 %v1061, %v1059
        %v1246 = vpack.c.bf16 %v1062, %v1060
        %v1247 = vpack.c.bf16 %v1065, %v1063
        %v1248 = vpack.c.bf16 %v1066, %v1064
        %v1249 = vpack.c.bf16 %v1069, %v1067
        %v1250 = vpack.c.bf16 %v1070, %v1068
        %v1251 = vpack.c.bf16 %v1073, %v1071
        %v1252 = vpack.c.bf16 %v1074, %v1072
        %v1253 = vpack.c.bf16 %v1077, %v1075
        %v1254 = vpack.c.bf16 %v1078, %v1076
        %v1255 = vpack.c.bf16 %v1081, %v1079
        %v1256 = vpack.c.bf16 %v1082, %v1080
        %v1257 = vpack.c.bf16 %v1085, %v1083
        %v1258 = vpack.c.bf16 %v1086, %v1084
        %1259 = vst [vmem:[#allocation2 + $0x50] sm:$0xff] %v1227
        %1260 = vst [vmem:[#allocation2 + $0x58] sm:$0xff] %v1228
        %1261 = vst [vmem:[#allocation2 + $0x80] sm:$0xff] %v1229
        %1262 = vst [vmem:[#allocation2 + $0x88] sm:$0xff] %v1230
        %1263 = vst [vmem:[#allocation2 + $0xb0] sm:$0xff] %v1231
        %1264 = vst [vmem:[#allocation2 + $0xb8] sm:$0xff] %v1232
        %1265 = vst [vmem:[#allocation2 + $0xe0] sm:$0xff] %v1233
        %1266 = vst [vmem:[#allocation2 + $0xe8] sm:$0xff] %v1234
        %1267 = vst [vmem:[#allocation2 + $0x110] sm:$0xff] %v1235
        %1268 = vst [vmem:[#allocation2 + $0x118] sm:$0xff] %v1236
        %1269 = vst [vmem:[#allocation2 + $0x140] sm:$0xff] %v1237
        %1270 = vst [vmem:[#allocation2 + $0x148] sm:$0xff] %v1238
        %1271 = vst [vmem:[#allocation2 + $0x170] sm:$0xff] %v1239
        %1272 = vst [vmem:[#allocation2 + $0x178] sm:$0xff] %v1240
        %1273 = vst [vmem:[#allocation2 + $0x1a0] sm:$0xff] %v1241
        %1274 = vst [vmem:[#allocation2 + $0x1a8] sm:$0xff] %v1242
        %1275 = vst [vmem:[#allocation2 + $0x1d0] sm:$0xff] %v1243
        %1276 = vst [vmem:[#allocation2 + $0x1d8] sm:$0xff] %v1244
        %1277 = vst [vmem:[#allocation2 + $0x200] sm:$0xff] %v1245
        %1278 = vst [vmem:[#allocation2 + $0x208] sm:$0xff] %v1246
        %1279 = vst [vmem:[#allocation2 + $0x230] sm:$0xff] %v1247
        %1280 = vst [vmem:[#allocation2 + $0x238] sm:$0xff] %v1248
        %1281 = vst [vmem:[#allocation2 + $0x260] sm:$0xff] %v1249
        %1282 = vst [vmem:[#allocation2 + $0x268] sm:$0xff] %v1250
        %1283 = vst [vmem:[#allocation2 + $0x290] sm:$0xff] %v1251
        %1284 = vst [vmem:[#allocation2 + $0x298] sm:$0xff] %v1252
        %1285 = vst [vmem:[#allocation2 + $0x2c0] sm:$0xff] %v1253
        %1286 = vst [vmem:[#allocation2 + $0x2c8] sm:$0xff] %v1254
        %1287 = vst [vmem:[#allocation2 + $0x2f0] sm:$0xff] %v1255
        %1288 = vst [vmem:[#allocation2 + $0x2f8] sm:$0xff] %v1256
        %1289 = vst [vmem:[#allocation2 + $0x320] sm:$0xff] %v1257
        %1290 = vst [vmem:[#allocation2 + $0x328] sm:$0xff] %v1258
        %v1291 = vld [vmem:[#allocation2] sm:$0xff]
        %v1292 = vld [vmem:[#allocation2 + $0x8] sm:$0xff]
        %v1293 = vld [vmem:[#allocation2 + $0x10] sm:$0xff]
        %v1294 = vld [vmem:[#allocation2 + $0x18] sm:$0xff]
        %v1295 = vld [vmem:[#allocation2 + $0x20] sm:$0xff]
        %v1296 = vld [vmem:[#allocation2 + $0x28] sm:$0xff]
        %v1297 = vld [vmem:[#allocation2 + $0x30] sm:$0xff]
        %v1298 = vld [vmem:[#allocation2 + $0x38] sm:$0xff]
        %v1299 = vld [vmem:[#allocation2 + $0x40] sm:$0xff]
        %v1300 = vld [vmem:[#allocation2 + $0x48] sm:$0xff]
        %v1301 = vld [vmem:[#allocation2 + $0x50] sm:$0xff]
        %v1302 = vld [vmem:[#allocation2 + $0x58] sm:$0xff]
        %v1303 = vld [vmem:[#allocation2 + $0x60] sm:$0xff]
        %v1304 = vld [vmem:[#allocation2 + $0x68] sm:$0xff]
        %v1305 = vld [vmem:[#allocation2 + $0x70] sm:$0xff]
        %v1306 = vld [vmem:[#allocation2 + $0x78] sm:$0xff]
        %v1307 = vld [vmem:[#allocation2 + $0x80] sm:$0xff]
        %v1308 = vld [vmem:[#allocation2 + $0x88] sm:$0xff]
        %v1309 = vld [vmem:[#allocation2 + $0x90] sm:$0xff]
        %v1310 = vld [vmem:[#allocation2 + $0x98] sm:$0xff]
        %v1311 = vld [vmem:[#allocation2 + $0xa0] sm:$0xff]
        %v1312 = vld [vmem:[#allocation2 + $0xa8] sm:$0xff]
        %v1313 = vld [vmem:[#allocation2 + $0xb0] sm:$0xff]
        %v1314 = vld [vmem:[#allocation2 + $0xb8] sm:$0xff]
        %v1315 = vld [vmem:[#allocation2 + $0xc0] sm:$0xff]
        %v1316 = vld [vmem:[#allocation2 + $0xc8] sm:$0xff]
        %v1317 = vld [vmem:[#allocation2 + $0xd0] sm:$0xff]
        %v1318 = vld [vmem:[#allocation2 + $0xd8] sm:$0xff]
        %v1319 = vld [vmem:[#allocation2 + $0xe0] sm:$0xff]
        %v1320 = vld [vmem:[#allocation2 + $0xe8] sm:$0xff]
        %v1321 = vld [vmem:[#allocation2 + $0xf0] sm:$0xff]
        %v1322 = vld [vmem:[#allocation2 + $0xf8] sm:$0xff]
        %v1323 = vld [vmem:[#allocation2 + $0x100] sm:$0xff]
        %v1324 = vld [vmem:[#allocation2 + $0x108] sm:$0xff]
        %v1325 = vld [vmem:[#allocation2 + $0x110] sm:$0xff]
        %v1326 = vld [vmem:[#allocation2 + $0x118] sm:$0xff]
        %v1327 = vld [vmem:[#allocation2 + $0x120] sm:$0xff]
        %v1328 = vld [vmem:[#allocation2 + $0x128] sm:$0xff]
        %v1329 = vld [vmem:[#allocation2 + $0x130] sm:$0xff]
        %v1330 = vld [vmem:[#allocation2 + $0x138] sm:$0xff]
        %v1331 = vld [vmem:[#allocation2 + $0x140] sm:$0xff]
        %v1332 = vld [vmem:[#allocation2 + $0x148] sm:$0xff]
        %v1333 = vld [vmem:[#allocation2 + $0x150] sm:$0xff]
        %v1334 = vld [vmem:[#allocation2 + $0x158] sm:$0xff]
        %v1335 = vld [vmem:[#allocation2 + $0x160] sm:$0xff]
        %v1336 = vld [vmem:[#allocation2 + $0x168] sm:$0xff]
        %v1337 = vld [vmem:[#allocation2 + $0x170] sm:$0xff]
        %v1338 = vld [vmem:[#allocation2 + $0x178] sm:$0xff]
        %v1339 = vld [vmem:[#allocation2 + $0x180] sm:$0xff]
        %v1340 = vld [vmem:[#allocation2 + $0x188] sm:$0xff]
        %v1341 = vld [vmem:[#allocation2 + $0x190] sm:$0xff]
        %v1342 = vld [vmem:[#allocation2 + $0x198] sm:$0xff]
        %v1343 = vld [vmem:[#allocation2 + $0x1a0] sm:$0xff]
        %v1344 = vld [vmem:[#allocation2 + $0x1a8] sm:$0xff]
        %v1345 = vld [vmem:[#allocation2 + $0x1b0] sm:$0xff]
        %v1346 = vld [vmem:[#allocation2 + $0x1b8] sm:$0xff]
        %v1347 = vld [vmem:[#allocation2 + $0x1c0] sm:$0xff]
        %v1348 = vld [vmem:[#allocation2 + $0x1c8] sm:$0xff]
        %v1349 = vld [vmem:[#allocation2 + $0x1d0] sm:$0xff]
        %v1350 = vld [vmem:[#allocation2 + $0x1d8] sm:$0xff]
        %v1351 = vld [vmem:[#allocation2 + $0x1e0] sm:$0xff]
        %v1352 = vld [vmem:[#allocation2 + $0x1e8] sm:$0xff]
        %v1353 = vld [vmem:[#allocation2 + $0x1f0] sm:$0xff]
        %v1354 = vld [vmem:[#allocation2 + $0x1f8] sm:$0xff]
        %v1355 = vld [vmem:[#allocation2 + $0x200] sm:$0xff]
        %v1356 = vld [vmem:[#allocation2 + $0x208] sm:$0xff]
        %v1357 = vld [vmem:[#allocation2 + $0x210] sm:$0xff]
        %v1358 = vld [vmem:[#allocation2 + $0x218] sm:$0xff]
        %v1359 = vld [vmem:[#allocation2 + $0x220] sm:$0xff]
        %v1360 = vld [vmem:[#allocation2 + $0x228] sm:$0xff]
        %v1361 = vld [vmem:[#allocation2 + $0x230] sm:$0xff]
        %v1362 = vld [vmem:[#allocation2 + $0x238] sm:$0xff]
        %v1363 = vld [vmem:[#allocation2 + $0x240] sm:$0xff]
        %v1364 = vld [vmem:[#allocation2 + $0x248] sm:$0xff]
        %v1365 = vld [vmem:[#allocation2 + $0x250] sm:$0xff]
        %v1366 = vld [vmem:[#allocation2 + $0x258] sm:$0xff]
        %v1367 = vld [vmem:[#allocation2 + $0x260] sm:$0xff]
        %v1368 = vld [vmem:[#allocation2 + $0x268] sm:$0xff]
        %v1369 = vld [vmem:[#allocation2 + $0x270] sm:$0xff]
        %v1370 = vld [vmem:[#allocation2 + $0x278] sm:$0xff]
        %v1371 = vld [vmem:[#allocation2 + $0x280] sm:$0xff]
        %v1372 = vld [vmem:[#allocation2 + $0x288] sm:$0xff]
        %v1373 = vld [vmem:[#allocation2 + $0x290] sm:$0xff]
        %v1374 = vld [vmem:[#allocation2 + $0x298] sm:$0xff]
        %v1375 = vld [vmem:[#allocation2 + $0x2a0] sm:$0xff]
        %v1376 = vld [vmem:[#allocation2 + $0x2a8] sm:$0xff]
        %v1377 = vld [vmem:[#allocation2 + $0x2b0] sm:$0xff]
        %v1378 = vld [vmem:[#allocation2 + $0x2b8] sm:$0xff]
        %v1379 = vld [vmem:[#allocation2 + $0x2c0] sm:$0xff]
        %v1380 = vld [vmem:[#allocation2 + $0x2c8] sm:$0xff]
        %v1381 = vld [vmem:[#allocation2 + $0x2d0] sm:$0xff]
        %v1382 = vld [vmem:[#allocation2 + $0x2d8] sm:$0xff]
        %v1383 = vld [vmem:[#allocation2 + $0x2e0] sm:$0xff]
        %v1384 = vld [vmem:[#allocation2 + $0x2e8] sm:$0xff]
        %v1385 = vld [vmem:[#allocation2 + $0x2f0] sm:$0xff]
        %v1386 = vld [vmem:[#allocation2 + $0x2f8] sm:$0xff]
        %v1387 = vld [vmem:[%s1] sm:$0xff]
        %v1388 = vld [vmem:[%s1 + $0x8] sm:$0xff]
        %v1389 = vld [vmem:[%s1 + $0x10] sm:$0xff]
        %v1390 = vld [vmem:[%s1 + $0x18] sm:$0xff]
        %v1391 = vld [vmem:[%s1 + $0x20] sm:$0xff]
        %v1392 = vld [vmem:[%s1 + $0x28] sm:$0xff]
        %v1393 = vld [vmem:[%s1 + $0x30] sm:$0xff]
        %v1394 = vld [vmem:[%s1 + $0x38] sm:$0xff]
        %v1395 = vld [vmem:[%s1 + $0x40] sm:$0xff]
        %v1396 = vld [vmem:[%s1 + $0x48] sm:$0xff]
        %v1397 = vld [vmem:[%s1 + $0x50] sm:$0xff]
        %v1398 = vld [vmem:[%s1 + $0x58] sm:$0xff]
        %v1399 = vld [vmem:[%s1 + $0x60] sm:$0xff]
        %v1400 = vld [vmem:[%s1 + $0x68] sm:$0xff]
        %v1401 = vld [vmem:[%s1 + $0x70] sm:$0xff]
        %v1402 = vld [vmem:[%s1 + $0x78] sm:$0xff]
        %v1403 = vld [vmem:[%s1 + $0x80] sm:$0xff]
        %v1404 = vld [vmem:[%s1 + $0x88] sm:$0xff]
        %v1405 = vld [vmem:[%s1 + $0x90] sm:$0xff]
        %v1406 = vld [vmem:[%s1 + $0x98] sm:$0xff]
        %v1407 = vld [vmem:[%s1 + $0xa0] sm:$0xff]
        %v1408 = vld [vmem:[%s1 + $0xa8] sm:$0xff]
        %v1409 = vld [vmem:[%s1 + $0xb0] sm:$0xff]
        %v1410 = vld [vmem:[%s1 + $0xb8] sm:$0xff]
        %v1411 = vld [vmem:[%s1 + $0xc0] sm:$0xff]
        %v1412 = vld [vmem:[%s1 + $0xc8] sm:$0xff]
        %v1413 = vld [vmem:[%s1 + $0xd0] sm:$0xff]
        %v1414 = vld [vmem:[%s1 + $0xd8] sm:$0xff]
        %v1415 = vld [vmem:[%s1 + $0xe0] sm:$0xff]
        %v1416 = vld [vmem:[%s1 + $0xe8] sm:$0xff]
        %v1417 = vld [vmem:[%s1 + $0xf0] sm:$0xff]
        %v1418 = vld [vmem:[%s1 + $0xf8] sm:$0xff]
        %v1419 = vld [vmem:[%s1 + $0x100] sm:$0xff]
        %v1420 = vld [vmem:[%s1 + $0x108] sm:$0xff]
        %v1421 = vld [vmem:[%s1 + $0x110] sm:$0xff]
        %v1422 = vld [vmem:[%s1 + $0x118] sm:$0xff]
        %v1423 = vld [vmem:[%s1 + $0x120] sm:$0xff]
        %v1424 = vld [vmem:[%s1 + $0x128] sm:$0xff]
        %v1425 = vld [vmem:[%s1 + $0x130] sm:$0xff]
        %v1426 = vld [vmem:[%s1 + $0x138] sm:$0xff]
        %v1427 = vld [vmem:[%s1 + $0x140] sm:$0xff]
        %v1428 = vld [vmem:[%s1 + $0x148] sm:$0xff]
        %v1429 = vld [vmem:[%s1 + $0x150] sm:$0xff]
        %v1430 = vld [vmem:[%s1 + $0x158] sm:$0xff]
        %v1431 = vld [vmem:[%s1 + $0x160] sm:$0xff]
        %v1432 = vld [vmem:[%s1 + $0x168] sm:$0xff]
        %v1433 = vld [vmem:[%s1 + $0x170] sm:$0xff]
        %v1434 = vld [vmem:[%s1 + $0x178] sm:$0xff]
        %v1435 = vld [vmem:[%s1 + $0x180] sm:$0xff]
        %v1436 = vld [vmem:[%s1 + $0x188] sm:$0xff]
        %v1437 = vld [vmem:[%s1 + $0x190] sm:$0xff]
        %v1438 = vld [vmem:[%s1 + $0x198] sm:$0xff]
        %v1439 = vld [vmem:[%s1 + $0x1a0] sm:$0xff]
        %v1440 = vld [vmem:[%s1 + $0x1a8] sm:$0xff]
        %v1441 = vld [vmem:[%s1 + $0x1b0] sm:$0xff]
        %v1442 = vld [vmem:[%s1 + $0x1b8] sm:$0xff]
        %v1443 = vld [vmem:[%s1 + $0x1c0] sm:$0xff]
        %v1444 = vld [vmem:[%s1 + $0x1c8] sm:$0xff]
        %v1445 = vld [vmem:[%s1 + $0x1d0] sm:$0xff]
        %v1446 = vld [vmem:[%s1 + $0x1d8] sm:$0xff]
        %v1447 = vld [vmem:[%s1 + $0x1e0] sm:$0xff]
        %v1448 = vld [vmem:[%s1 + $0x1e8] sm:$0xff]
        %v1449 = vld [vmem:[%s1 + $0x1f0] sm:$0xff]
        %v1450 = vld [vmem:[%s1 + $0x1f8] sm:$0xff]
        %v1451 = vld [vmem:[%s1 + $0x200] sm:$0xff]
        %v1452 = vld [vmem:[%s1 + $0x208] sm:$0xff]
        %v1453 = vld [vmem:[%s1 + $0x210] sm:$0xff]
        %v1454 = vld [vmem:[%s1 + $0x218] sm:$0xff]
        %v1455 = vld [vmem:[%s1 + $0x220] sm:$0xff]
        %v1456 = vld [vmem:[%s1 + $0x228] sm:$0xff]
        %v1457 = vld [vmem:[%s1 + $0x230] sm:$0xff]
        %v1458 = vld [vmem:[%s1 + $0x238] sm:$0xff]
        %v1459 = vld [vmem:[%s1 + $0x240] sm:$0xff]
        %v1460 = vld [vmem:[%s1 + $0x248] sm:$0xff]
        %v1461 = vld [vmem:[%s1 + $0x250] sm:$0xff]
        %v1462 = vld [vmem:[%s1 + $0x258] sm:$0xff]
        %v1463 = vld [vmem:[%s1 + $0x260] sm:$0xff]
        %v1464 = vld [vmem:[%s1 + $0x268] sm:$0xff]
        %v1465 = vld [vmem:[%s1 + $0x270] sm:$0xff]
        %v1466 = vld [vmem:[%s1 + $0x278] sm:$0xff]
        %v1467 = vld [vmem:[%s1 + $0x280] sm:$0xff]
        %v1468 = vld [vmem:[%s1 + $0x288] sm:$0xff]
        %v1469 = vld [vmem:[%s1 + $0x290] sm:$0xff]
        %v1470 = vld [vmem:[%s1 + $0x298] sm:$0xff]
        %v1471 = vld [vmem:[%s1 + $0x2a0] sm:$0xff]
        %v1472 = vld [vmem:[%s1 + $0x2a8] sm:$0xff]
        %v1473 = vld [vmem:[%s1 + $0x2b0] sm:$0xff]
        %v1474 = vld [vmem:[%s1 + $0x2b8] sm:$0xff]
        %v1475 = vld [vmem:[%s1 + $0x2c0] sm:$0xff]
        %v1476 = vld [vmem:[%s1 + $0x2c8] sm:$0xff]
        %v1477 = vld [vmem:[%s1 + $0x2d0] sm:$0xff]
        %v1478 = vld [vmem:[%s1 + $0x2d8] sm:$0xff]
        %v1479 = vld [vmem:[%s1 + $0x2e0] sm:$0xff]
        %v1480 = vld [vmem:[%s1 + $0x2e8] sm:$0xff]
        %v1481 = vld [vmem:[%s1 + $0x2f0] sm:$0xff]
        %v1482 = vld [vmem:[%s1 + $0x2f8] sm:$0xff]
        %v1579 = vunpack.c.l.b16 %v1387
        %v1580 = vunpack.c.h.b16 %v1387
        %v1581 = vunpack.c.l.b16 %v1388
        %v1582 = vunpack.c.h.b16 %v1388
        %v1583 = vunpack.c.l.b16 %v1389
        %v1584 = vunpack.c.h.b16 %v1389
        %v1585 = vunpack.c.l.b16 %v1390
        %v1586 = vunpack.c.h.b16 %v1390
        %v1587 = vunpack.c.l.b16 %v1391
        %v1588 = vunpack.c.h.b16 %v1391
        %v1589 = vunpack.c.l.b16 %v1392
        %v1590 = vunpack.c.h.b16 %v1392
        %v1591 = vunpack.c.l.b16 %v1393
        %v1592 = vunpack.c.h.b16 %v1393
        %v1593 = vunpack.c.l.b16 %v1394
        %v1594 = vunpack.c.h.b16 %v1394
        %v1595 = vunpack.c.l.b16 %v1395
        %v1596 = vunpack.c.h.b16 %v1395
        %v1597 = vunpack.c.l.b16 %v1396
        %v1598 = vunpack.c.h.b16 %v1396
        %v1599 = vunpack.c.l.b16 %v1397
        %v1600 = vunpack.c.h.b16 %v1397
        %v1601 = vunpack.c.l.b16 %v1398
        %v1602 = vunpack.c.h.b16 %v1398
        %v1603 = vunpack.c.l.b16 %v1399
        %v1604 = vunpack.c.h.b16 %v1399
        %v1605 = vunpack.c.l.b16 %v1400
        %v1606 = vunpack.c.h.b16 %v1400
        %v1607 = vunpack.c.l.b16 %v1401
        %v1608 = vunpack.c.h.b16 %v1401
        %v1609 = vunpack.c.l.b16 %v1402
        %v1610 = vunpack.c.h.b16 %v1402
        %v1611 = vunpack.c.l.b16 %v1403
        %v1612 = vunpack.c.h.b16 %v1403
        %v1613 = vunpack.c.l.b16 %v1404
        %v1614 = vunpack.c.h.b16 %v1404
        %v1615 = vunpack.c.l.b16 %v1405
        %v1616 = vunpack.c.h.b16 %v1405
        %v1617 = vunpack.c.l.b16 %v1406
        %v1618 = vunpack.c.h.b16 %v1406
        %v1619 = vunpack.c.l.b16 %v1407
        %v1620 = vunpack.c.h.b16 %v1407
        %v1621 = vunpack.c.l.b16 %v1408
        %v1622 = vunpack.c.h.b16 %v1408
        %v1623 = vunpack.c.l.b16 %v1409
        %v1624 = vunpack.c.h.b16 %v1409
        %v1625 = vunpack.c.l.b16 %v1410
        %v1626 = vunpack.c.h.b16 %v1410
        %v1627 = vunpack.c.l.b16 %v1411
        %v1628 = vunpack.c.h.b16 %v1411
        %v1629 = vunpack.c.l.b16 %v1412
        %v1630 = vunpack.c.h.b16 %v1412
        %v1631 = vunpack.c.l.b16 %v1413
        %v1632 = vunpack.c.h.b16 %v1413
        %v1633 = vunpack.c.l.b16 %v1414
        %v1634 = vunpack.c.h.b16 %v1414
        %v1635 = vunpack.c.l.b16 %v1415
        %v1636 = vunpack.c.h.b16 %v1415
        %v1637 = vunpack.c.l.b16 %v1416
        %v1638 = vunpack.c.h.b16 %v1416
        %v1639 = vunpack.c.l.b16 %v1417
        %v1640 = vunpack.c.h.b16 %v1417
        %v1641 = vunpack.c.l.b16 %v1418
        %v1642 = vunpack.c.h.b16 %v1418
        %v1643 = vunpack.c.l.b16 %v1419
        %v1644 = vunpack.c.h.b16 %v1419
        %v1645 = vunpack.c.l.b16 %v1420
        %v1646 = vunpack.c.h.b16 %v1420
        %v1647 = vunpack.c.l.b16 %v1421
        %v1648 = vunpack.c.h.b16 %v1421
        %v1649 = vunpack.c.l.b16 %v1422
        %v1650 = vunpack.c.h.b16 %v1422
        %v1651 = vunpack.c.l.b16 %v1423
        %v1652 = vunpack.c.h.b16 %v1423
        %v1653 = vunpack.c.l.b16 %v1424
        %v1654 = vunpack.c.h.b16 %v1424
        %v1655 = vunpack.c.l.b16 %v1425
        %v1656 = vunpack.c.h.b16 %v1425
        %v1657 = vunpack.c.l.b16 %v1426
        %v1658 = vunpack.c.h.b16 %v1426
        %v1659 = vunpack.c.l.b16 %v1427
        %v1660 = vunpack.c.h.b16 %v1427
        %v1661 = vunpack.c.l.b16 %v1428
        %v1662 = vunpack.c.h.b16 %v1428
        %v1663 = vunpack.c.l.b16 %v1429
        %v1664 = vunpack.c.h.b16 %v1429
        %v1665 = vunpack.c.l.b16 %v1430
        %v1666 = vunpack.c.h.b16 %v1430
        %v1667 = vunpack.c.l.b16 %v1431
        %v1668 = vunpack.c.h.b16 %v1431
        %v1669 = vunpack.c.l.b16 %v1432
        %v1670 = vunpack.c.h.b16 %v1432
        %v1671 = vunpack.c.l.b16 %v1433
        %v1672 = vunpack.c.h.b16 %v1433
        %v1673 = vunpack.c.l.b16 %v1434
        %v1674 = vunpack.c.h.b16 %v1434
        %v1675 = vunpack.c.l.b16 %v1435
        %v1676 = vunpack.c.h.b16 %v1435
        %v1677 = vunpack.c.l.b16 %v1436
        %v1678 = vunpack.c.h.b16 %v1436
        %v1679 = vunpack.c.l.b16 %v1437
        %v1680 = vunpack.c.h.b16 %v1437
        %v1681 = vunpack.c.l.b16 %v1438
        %v1682 = vunpack.c.h.b16 %v1438
        %v1683 = vunpack.c.l.b16 %v1439
        %v1684 = vunpack.c.h.b16 %v1439
        %v1685 = vunpack.c.l.b16 %v1440
        %v1686 = vunpack.c.h.b16 %v1440
        %v1687 = vunpack.c.l.b16 %v1441
        %v1688 = vunpack.c.h.b16 %v1441
        %v1689 = vunpack.c.l.b16 %v1442
        %v1690 = vunpack.c.h.b16 %v1442
        %v1691 = vunpack.c.l.b16 %v1443
        %v1692 = vunpack.c.h.b16 %v1443
        %v1693 = vunpack.c.l.b16 %v1444
        %v1694 = vunpack.c.h.b16 %v1444
        %v1695 = vunpack.c.l.b16 %v1445
        %v1696 = vunpack.c.h.b16 %v1445
        %v1697 = vunpack.c.l.b16 %v1446
        %v1698 = vunpack.c.h.b16 %v1446
        %v1699 = vunpack.c.l.b16 %v1447
        %v1700 = vunpack.c.h.b16 %v1447
        %v1701 = vunpack.c.l.b16 %v1448
        %v1702 = vunpack.c.h.b16 %v1448
        %v1703 = vunpack.c.l.b16 %v1449
        %v1704 = vunpack.c.h.b16 %v1449
        %v1705 = vunpack.c.l.b16 %v1450
        %v1706 = vunpack.c.h.b16 %v1450
        %v1707 = vunpack.c.l.b16 %v1451
        %v1708 = vunpack.c.h.b16 %v1451
        %v1709 = vunpack.c.l.b16 %v1452
        %v1710 = vunpack.c.h.b16 %v1452
        %v1711 = vunpack.c.l.b16 %v1453
        %v1712 = vunpack.c.h.b16 %v1453
        %v1713 = vunpack.c.l.b16 %v1454
        %v1714 = vunpack.c.h.b16 %v1454
        %v1715 = vunpack.c.l.b16 %v1455
        %v1716 = vunpack.c.h.b16 %v1455
        %v1717 = vunpack.c.l.b16 %v1456
        %v1718 = vunpack.c.h.b16 %v1456
        %v1719 = vunpack.c.l.b16 %v1457
        %v1720 = vunpack.c.h.b16 %v1457
        %v1721 = vunpack.c.l.b16 %v1458
        %v1722 = vunpack.c.h.b16 %v1458
        %v1723 = vunpack.c.l.b16 %v1459
        %v1724 = vunpack.c.h.b16 %v1459
        %v1725 = vunpack.c.l.b16 %v1460
        %v1726 = vunpack.c.h.b16 %v1460
        %v1727 = vunpack.c.l.b16 %v1461
        %v1728 = vunpack.c.h.b16 %v1461
        %v1729 = vunpack.c.l.b16 %v1462
        %v1730 = vunpack.c.h.b16 %v1462
        %v1731 = vunpack.c.l.b16 %v1463
        %v1732 = vunpack.c.h.b16 %v1463
        %v1733 = vunpack.c.l.b16 %v1464
        %v1734 = vunpack.c.h.b16 %v1464
        %v1735 = vunpack.c.l.b16 %v1465
        %v1736 = vunpack.c.h.b16 %v1465
        %v1737 = vunpack.c.l.b16 %v1466
        %v1738 = vunpack.c.h.b16 %v1466
        %v1739 = vunpack.c.l.b16 %v1467
        %v1740 = vunpack.c.h.b16 %v1467
        %v1741 = vunpack.c.l.b16 %v1468
        %v1742 = vunpack.c.h.b16 %v1468
        %v1743 = vunpack.c.l.b16 %v1469
        %v1744 = vunpack.c.h.b16 %v1469
        %v1745 = vunpack.c.l.b16 %v1470
        %v1746 = vunpack.c.h.b16 %v1470
        %v1747 = vunpack.c.l.b16 %v1471
        %v1748 = vunpack.c.h.b16 %v1471
        %v1749 = vunpack.c.l.b16 %v1472
        %v1750 = vunpack.c.h.b16 %v1472
        %v1751 = vunpack.c.l.b16 %v1473
        %v1752 = vunpack.c.h.b16 %v1473
        %v1753 = vunpack.c.l.b16 %v1474
        %v1754 = vunpack.c.h.b16 %v1474
        %v1755 = vunpack.c.l.b16 %v1475
        %v1756 = vunpack.c.h.b16 %v1475
        %v1757 = vunpack.c.l.b16 %v1476
        %v1758 = vunpack.c.h.b16 %v1476
        %v1759 = vunpack.c.l.b16 %v1477
        %v1760 = vunpack.c.h.b16 %v1477
        %v1761 = vunpack.c.l.b16 %v1478
        %v1762 = vunpack.c.h.b16 %v1478
        %v1763 = vunpack.c.l.b16 %v1479
        %v1764 = vunpack.c.h.b16 %v1479
        %v1765 = vunpack.c.l.b16 %v1480
        %v1766 = vunpack.c.h.b16 %v1480
        %v1767 = vunpack.c.l.b16 %v1481
        %v1768 = vunpack.c.h.b16 %v1481
        %v1769 = vunpack.c.l.b16 %v1482
        %v1770 = vunpack.c.h.b16 %v1482
        %v1771 = vpack.c.b16 %v1581, %v1579
        %v1772 = vpack.c.b16 %v1582, %v1580
        %v1773 = vpack.c.b16 %v1585, %v1583
        %v1774 = vpack.c.b16 %v1586, %v1584
        %v1775 = vpack.c.b16 %v1589, %v1587
        %v1776 = vpack.c.b16 %v1590, %v1588
        %v1777 = vpack.c.b16 %v1593, %v1591
        %v1778 = vpack.c.b16 %v1594, %v1592
        %v1779 = vpack.c.b16 %v1597, %v1595
        %v1780 = vpack.c.b16 %v1598, %v1596
        %v1781 = vpack.c.b16 %v1601, %v1599
        %v1782 = vpack.c.b16 %v1602, %v1600
        %v1783 = vpack.c.b16 %v1605, %v1603
        %v1784 = vpack.c.b16 %v1606, %v1604
        %v1785 = vpack.c.b16 %v1609, %v1607
        %v1786 = vpack.c.b16 %v1610, %v1608
        %v1787 = vpack.c.b16 %v1613, %v1611
        %v1788 = vpack.c.b16 %v1614, %v1612
        %v1789 = vpack.c.b16 %v1617, %v1615
        %v1790 = vpack.c.b16 %v1618, %v1616
        %v1791 = vpack.c.b16 %v1621, %v1619
        %v1792 = vpack.c.b16 %v1622, %v1620
        %v1793 = vpack.c.b16 %v1625, %v1623
        %v1794 = vpack.c.b16 %v1626, %v1624
        %v1795 = vpack.c.b16 %v1629, %v1627
        %v1796 = vpack.c.b16 %v1630, %v1628
        %v1797 = vpack.c.b16 %v1633, %v1631
        %v1798 = vpack.c.b16 %v1634, %v1632
        %v1799 = vpack.c.b16 %v1637, %v1635
        %v1800 = vpack.c.b16 %v1638, %v1636
        %v1801 = vpack.c.b16 %v1641, %v1639
        %v1802 = vpack.c.b16 %v1642, %v1640
        %v1803 = vpack.c.b16 %v1645, %v1643
        %v1804 = vpack.c.b16 %v1646, %v1644
        %v1805 = vpack.c.b16 %v1649, %v1647
        %v1806 = vpack.c.b16 %v1650, %v1648
        %v1807 = vpack.c.b16 %v1653, %v1651
        %v1808 = vpack.c.b16 %v1654, %v1652
        %v1809 = vpack.c.b16 %v1657, %v1655
        %v1810 = vpack.c.b16 %v1658, %v1656
        %v1811 = vpack.c.b16 %v1661, %v1659
        %v1812 = vpack.c.b16 %v1662, %v1660
        %v1813 = vpack.c.b16 %v1665, %v1663
        %v1814 = vpack.c.b16 %v1666, %v1664
        %v1815 = vpack.c.b16 %v1669, %v1667
        %v1816 = vpack.c.b16 %v1670, %v1668
        %v1817 = vpack.c.b16 %v1673, %v1671
        %v1818 = vpack.c.b16 %v1674, %v1672
        %v1819 = vpack.c.b16 %v1677, %v1675
        %v1820 = vpack.c.b16 %v1678, %v1676
        %v1821 = vpack.c.b16 %v1681, %v1679
        %v1822 = vpack.c.b16 %v1682, %v1680
        %v1823 = vpack.c.b16 %v1685, %v1683
        %v1824 = vpack.c.b16 %v1686, %v1684
        %v1825 = vpack.c.b16 %v1689, %v1687
        %v1826 = vpack.c.b16 %v1690, %v1688
        %v1827 = vpack.c.b16 %v1693, %v1691
        %v1828 = vpack.c.b16 %v1694, %v1692
        %v1829 = vpack.c.b16 %v1697, %v1695
        %v1830 = vpack.c.b16 %v1698, %v1696
        %v1831 = vpack.c.b16 %v1701, %v1699
        %v1832 = vpack.c.b16 %v1702, %v1700
        %v1833 = vpack.c.b16 %v1705, %v1703
        %v1834 = vpack.c.b16 %v1706, %v1704
        %v1835 = vpack.c.b16 %v1709, %v1707
        %v1836 = vpack.c.b16 %v1710, %v1708
        %v1837 = vpack.c.b16 %v1713, %v1711
        %v1838 = vpack.c.b16 %v1714, %v1712
        %v1839 = vpack.c.b16 %v1717, %v1715
        %v1840 = vpack.c.b16 %v1718, %v1716
        %v1841 = vpack.c.b16 %v1721, %v1719
        %v1842 = vpack.c.b16 %v1722, %v1720
        %v1843 = vpack.c.b16 %v1725, %v1723
        %v1844 = vpack.c.b16 %v1726, %v1724
        %v1845 = vpack.c.b16 %v1729, %v1727
        %v1846 = vpack.c.b16 %v1730, %v1728
        %v1847 = vpack.c.b16 %v1733, %v1731
        %v1848 = vpack.c.b16 %v1734, %v1732
        %v1849 = vpack.c.b16 %v1737, %v1735
        %v1850 = vpack.c.b16 %v1738, %v1736
        %v1851 = vpack.c.b16 %v1741, %v1739
        %v1852 = vpack.c.b16 %v1742, %v1740
        %v1853 = vpack.c.b16 %v1745, %v1743
        %v1854 = vpack.c.b16 %v1746, %v1744
        %v1855 = vpack.c.b16 %v1749, %v1747
        %v1856 = vpack.c.b16 %v1750, %v1748
        %v1857 = vpack.c.b16 %v1753, %v1751
        %v1858 = vpack.c.b16 %v1754, %v1752
        %v1859 = vpack.c.b16 %v1757, %v1755
        %v1860 = vpack.c.b16 %v1758, %v1756
        %v1861 = vpack.c.b16 %v1761, %v1759
        %v1862 = vpack.c.b16 %v1762, %v1760
        %v1863 = vpack.c.b16 %v1765, %v1763
        %v1864 = vpack.c.b16 %v1766, %v1764
        %v1865 = vpack.c.b16 %v1769, %v1767
        %v1866 = vpack.c.b16 %v1770, %v1768
        %1963 = vmatprep.subr.bf16.mxu0 %v1772
        %1964 = vmatpush1.bf16.msra.mxu0 %v1771
        %1965 = vmatprep.subr.bf16.mxu0 %v1774
        %1966 = vmatpush1.bf16.msra.mxu0 %v1773
        %1967 = vmatprep.subr.bf16.mxu0 %v1776
        %1968 = vmatpush1.bf16.msra.mxu0 %v1775
        %1969 = vmatprep.subr.bf16.mxu0 %v1778
        %1970 = vmatpush1.bf16.msra.mxu0 %v1777
        %1971 = vmatprep.subr.bf16.mxu0 %v1780
        %1972 = vmatpush1.bf16.msra.mxu0 %v1779
        %1973 = vmatprep.subr.bf16.mxu0 %v1782
        %1974 = vmatpush1.bf16.msra.mxu0 %v1781
        %1975 = vmatprep.subr.bf16.mxu0 %v1784
        %1976 = vmatpush1.bf16.msra.mxu0 %v1783
        %1977 = vmatprep.subr.bf16.mxu0 %v1786
        %1978 = vmatpush1.bf16.msra.mxu0 %v1785
        %1979 = vmatprep.subr.bf16.mxu0 %v1788
        %1980 = vmatpush1.bf16.msra.mxu0 %v1787
        %1981 = vmatprep.subr.bf16.mxu0 %v1790
        %1982 = vmatpush1.bf16.msra.mxu0 %v1789
        %1983 = vmatprep.subr.bf16.mxu0 %v1792
        %1984 = vmatpush1.bf16.msra.mxu0 %v1791
        %1985 = vmatprep.subr.bf16.mxu0 %v1794
        %1986 = vmatpush1.bf16.msra.mxu0 %v1793
        %1987 = vmatprep.subr.bf16.mxu0 %v1796
        %1988 = vmatpush1.bf16.msra.mxu0 %v1795
        %1989 = vmatprep.subr.bf16.mxu0 %v1798
        %1990 = vmatpush1.bf16.msra.mxu0 %v1797
        %1991 = vmatprep.subr.bf16.mxu0 %v1800
        %1992 = vmatpush1.bf16.msra.mxu0 %v1799
        %1993 = vmatprep.subr.bf16.mxu0 %v1802
        %1994 = vmatpush1.bf16.msra.mxu0 %v1801
        %1995 = vmatprep.mubr.bf16.mxu0 %v1292
        %1996 = vmatmul.mubr.bf16.gmra.mrb[0].mxu0 %v1291
        %v1997 = vpop.f32.mrb[0].mxu0
        %v1998 = vadd.f32 0.0, %v1997
        %v1999 = vpop.f32.mrb[0].mxu0
        %v2000 = vadd.f32 0.0, %v1999
        %v2001 = vpop.f32.mrb[0].mxu0
        %v2002 = vadd.f32 0.0, %v2001
        %v2003 = vpop.f32.mrb[0].mxu0
        %v2004 = vadd.f32 0.0, %v2003
        %2005 = vmatprep.mubr.bf16.mxu0 %v1298
        %2006 = vmatmul.mubr.bf16.gmra.mrb[0].mxu0 %v1297
        %v2007 = vpop.f32.mrb[0].mxu0
        %v2008 = vadd.f32 0.0, %v2007
        %v2009 = vpop.f32.mrb[0].mxu0
        %v2010 = vadd.f32 0.0, %v2009
        %v2011 = vpop.f32.mrb[0].mxu0
        %v2012 = vadd.f32 0.0, %v2011
        %v2013 = vpop.f32.mrb[0].mxu0
        %v2014 = vadd.f32 0.0, %v2013
        %2015 = vmatprep.mubr.bf16.mxu0 %v1304
        %2016 = vmatmul.mubr.bf16.gmra.mrb[0].mxu0 %v1303
        %v2017 = vpop.f32.mrb[0].mxu0
        %v2018 = vadd.f32 0.0, %v2017
        %v2019 = vpop.f32.mrb[0].mxu0
        %v2020 = vadd.f32 0.0, %v2019
        %v2021 = vpop.f32.mrb[0].mxu0
        %v2022 = vadd.f32 0.0, %v2021
        %v2023 = vpop.f32.mrb[0].mxu0
        %v2024 = vadd.f32 0.0, %v2023
        %2025 = vmatprep.mubr.bf16.mxu0 %v1310
        %2026 = vmatmul.mubr.bf16.gmra.mrb[0].mxu0 %v1309
        %v2027 = vpop.f32.mrb[0].mxu0
        %v2028 = vadd.f32 0.0, %v2027
        %v2029 = vpop.f32.mrb[0].mxu0
        %v2030 = vadd.f32 0.0, %v2029
        %v2031 = vpop.f32.mrb[0].mxu0
        %v2032 = vadd.f32 0.0, %v2031
        %v2033 = vpop.f32.mrb[0].mxu0
        %v2034 = vadd.f32 0.0, %v2033
        %2035 = vmatprep.mubr.bf16.mxu0 %v1316
        %2036 = vmatmul.mubr.bf16.gmra.mrb[0].mxu0 %v1315
        %v2037 = vpop.f32.mrb[0].mxu0
        %v2038 = vadd.f32 0.0, %v2037
        %v2039 = vpop.f32.mrb[0].mxu0
        %v2040 = vadd.f32 0.0, %v2039
        %v2041 = vpop.f32.mrb[0].mxu0
        %v2042 = vadd.f32 0.0, %v2041
        %v2043 = vpop.f32.mrb[0].mxu0
        %v2044 = vadd.f32 0.0, %v2043
        %2045 = vmatprep.mubr.bf16.mxu0 %v1322
        %2046 = vmatmul.mubr.bf16.gmra.mrb[0].mxu0 %v1321
        %v2047 = vpop.f32.mrb[0].mxu0
        %v2048 = vadd.f32 0.0, %v2047
        %v2049 = vpop.f32.mrb[0].mxu0
        %v2050 = vadd.f32 0.0, %v2049
        %v2051 = vpop.f32.mrb[0].mxu0
        %v2052 = vadd.f32 0.0, %v2051
        %v2053 = vpop.f32.mrb[0].mxu0
        %v2054 = vadd.f32 0.0, %v2053
        %2055 = vmatprep.mubr.bf16.mxu0 %v1328
        %2056 = vmatmul.mubr.bf16.gmra.mrb[0].mxu0 %v1327
        %v2057 = vpop.f32.mrb[0].mxu0
        %v2058 = vadd.f32 0.0, %v2057
        %v2059 = vpop.f32.mrb[0].mxu0
        %v2060 = vadd.f32 0.0, %v2059
        %v2061 = vpop.f32.mrb[0].mxu0
        %v2062 = vadd.f32 0.0, %v2061
        %v2063 = vpop.f32.mrb[0].mxu0
        %v2064 = vadd.f32 0.0, %v2063
        %2065 = vmatprep.mubr.bf16.mxu0 %v1334
        %2066 = vmatmul.mubr.bf16.gmra.mrb[0].mxu0 %v1333
        %v2067 = vpop.f32.mrb[0].mxu0
        %v2068 = vadd.f32 0.0, %v2067
        %v2069 = vpop.f32.mrb[0].mxu0
        %v2070 = vadd.f32 0.0, %v2069
        %v2071 = vpop.f32.mrb[0].mxu0
        %v2072 = vadd.f32 0.0, %v2071
        %v2073 = vpop.f32.mrb[0].mxu0
        %v2074 = vadd.f32 0.0, %v2073
        %2075 = vmatprep.mubr.bf16.mxu0 %v1340
        %2076 = vmatmul.mubr.bf16.gmra.mrb[0].mxu0 %v1339
        %v2077 = vpop.f32.mrb[0].mxu0
        %v2078 = vadd.f32 0.0, %v2077
        %v2079 = vpop.f32.mrb[0].mxu0
        %v2080 = vadd.f32 0.0, %v2079
        %v2081 = vpop.f32.mrb[0].mxu0
        %v2082 = vadd.f32 0.0, %v2081
        %v2083 = vpop.f32.mrb[0].mxu0
        %v2084 = vadd.f32 0.0, %v2083
        %2085 = vmatprep.mubr.bf16.mxu0 %v1346
        %2086 = vmatmul.mubr.bf16.gmra.mrb[0].mxu0 %v1345
        %v2087 = vpop.f32.mrb[0].mxu0
        %v2088 = vadd.f32 0.0, %v2087
        %v2089 = vpop.f32.mrb[0].mxu0
        %v2090 = vadd.f32 0.0, %v2089
        %v2091 = vpop.f32.mrb[0].mxu0
        %v2092 = vadd.f32 0.0, %v2091
        %v2093 = vpop.f32.mrb[0].mxu0
        %v2094 = vadd.f32 0.0, %v2093
        %2095 = vmatprep.mubr.bf16.mxu0 %v1352
        %2096 = vmatmul.mubr.bf16.gmra.mrb[0].mxu0 %v1351
        %v2097 = vpop.f32.mrb[0].mxu0
        %v2098 = vadd.f32 0.0, %v2097
        %v2099 = vpop.f32.mrb[0].mxu0
        %v2100 = vadd.f32 0.0, %v2099
        %v2101 = vpop.f32.mrb[0].mxu0
        %v2102 = vadd.f32 0.0, %v2101
        %v2103 = vpop.f32.mrb[0].mxu0
        %v2104 = vadd.f32 0.0, %v2103
        %2105 = vmatprep.mubr.bf16.mxu0 %v1358
        %2106 = vmatmul.mubr.bf16.gmra.mrb[0].mxu0 %v1357
        %v2107 = vpop.f32.mrb[0].mxu0
        %v2108 = vadd.f32 0.0, %v2107
        %v2109 = vpop.f32.mrb[0].mxu0
        %v2110 = vadd.f32 0.0, %v2109
        %v2111 = vpop.f32.mrb[0].mxu0
        %v2112 = vadd.f32 0.0, %v2111
        %v2113 = vpop.f32.mrb[0].mxu0
        %v2114 = vadd.f32 0.0, %v2113
        %2115 = vmatprep.mubr.bf16.mxu0 %v1364
        %2116 = vmatmul.mubr.bf16.gmra.mrb[0].mxu0 %v1363
        %v2117 = vpop.f32.mrb[0].mxu0
        %v2118 = vadd.f32 0.0, %v2117
        %v2119 = vpop.f32.mrb[0].mxu0
        %v2120 = vadd.f32 0.0, %v2119
        %v2121 = vpop.f32.mrb[0].mxu0
        %v2122 = vadd.f32 0.0, %v2121
        %v2123 = vpop.f32.mrb[0].mxu0
        %v2124 = vadd.f32 0.0, %v2123
        %2125 = vmatprep.mubr.bf16.mxu0 %v1370
        %2126 = vmatmul.mubr.bf16.gmra.mrb[0].mxu0 %v1369
        %v2127 = vpop.f32.mrb[0].mxu0
        %v2128 = vadd.f32 0.0, %v2127
        %v2129 = vpop.f32.mrb[0].mxu0
        %v2130 = vadd.f32 0.0, %v2129
        %v2131 = vpop.f32.mrb[0].mxu0
        %v2132 = vadd.f32 0.0, %v2131
        %v2133 = vpop.f32.mrb[0].mxu0
        %v2134 = vadd.f32 0.0, %v2133
        %2135 = vmatprep.mubr.bf16.mxu0 %v1376
        %2136 = vmatmul.mubr.bf16.gmra.mrb[0].mxu0 %v1375
        %v2137 = vpop.f32.mrb[0].mxu0
        %v2138 = vadd.f32 0.0, %v2137
        %v2139 = vpop.f32.mrb[0].mxu0
        %v2140 = vadd.f32 0.0, %v2139
        %v2141 = vpop.f32.mrb[0].mxu0
        %v2142 = vadd.f32 0.0, %v2141
        %v2143 = vpop.f32.mrb[0].mxu0
        %v2144 = vadd.f32 0.0, %v2143
        %2145 = vmatprep.mubr.bf16.mxu0 %v1382
        %2146 = vmatmul.mubr.bf16.gmra.mrb[0].mxu0 %v1381
        %v2147 = vpop.f32.mrb[0].mxu0
        %v2148 = vadd.f32 0.0, %v2147
        %v2149 = vpop.f32.mrb[0].mxu0
        %v2150 = vadd.f32 0.0, %v2149
        %v2151 = vpop.f32.mrb[0].mxu0
        %v2152 = vadd.f32 0.0, %v2151
        %v2153 = vpop.f32.mrb[0].mxu0
        %v2154 = vadd.f32 0.0, %v2153
        %2155 = vdwg.mxu0
        %2156 = vmatprep.subr.bf16.mxu0 %v1804
        %2157 = vmatpush1.bf16.msra.mxu0 %v1803
        %2158 = vmatprep.subr.bf16.mxu0 %v1806
        %2159 = vmatpush1.bf16.msra.mxu0 %v1805
        %2160 = vmatprep.subr.bf16.mxu0 %v1808
        %2161 = vmatpush1.bf16.msra.mxu0 %v1807
        %2162 = vmatprep.subr.bf16.mxu0 %v1810
        %2163 = vmatpush1.bf16.msra.mxu0 %v1809
        %2164 = vmatprep.subr.bf16.mxu0 %v1812
        %2165 = vmatpush1.bf16.msra.mxu0 %v1811
        %2166 = vmatprep.subr.bf16.mxu0 %v1814
        %2167 = vmatpush1.bf16.msra.mxu0 %v1813
        %2168 = vmatprep.subr.bf16.mxu0 %v1816
        %2169 = vmatpush1.bf16.msra.mxu0 %v1815
        %2170 = vmatprep.subr.bf16.mxu0 %v1818
        %2171 = vmatpush1.bf16.msra.mxu0 %v1817
        %2172 = vmatprep.subr.bf16.mxu0 %v1820
        %2173 = vmatpush1.bf16.msra.mxu0 %v1819
        %2174 = vmatprep.subr.bf16.mxu0 %v1822
        %2175 = vmatpush1.bf16.msra.mxu0 %v1821
        %2176 = vmatprep.subr.bf16.mxu0 %v1824
        %2177 = vmatpush1.bf16.msra.mxu0 %v1823
        %2178 = vmatprep.subr.bf16.mxu0 %v1826
        %2179 = vmatpush1.bf16.msra.mxu0 %v1825
        %2180 = vmatprep.subr.bf16.mxu0 %v1828
        %2181 = vmatpush1.bf16.msra.mxu0 %v1827
        %2182 = vmatprep.subr.bf16.mxu0 %v1830
        %2183 = vmatpush1.bf16.msra.mxu0 %v1829
        %2184 = vmatprep.subr.bf16.mxu0 %v1832
        %2185 = vmatpush1.bf16.msra.mxu0 %v1831
        %2186 = vmatprep.subr.bf16.mxu0 %v1834
        %2187 = vmatpush1.bf16.msra.mxu0 %v1833
        %2188 = vmatprep.mubr.bf16.mxu0 %v1294
        %2189 = vmatmul.mubr.bf16.gmra.mrb[0].mxu0 %v1293
        %v2190 = vpop.f32.mrb[0].mxu0
        %v2191 = vadd.f32 %v1998, %v2190
        %v2192 = vpop.f32.mrb[0].mxu0
        %v2193 = vadd.f32 %v2000, %v2192
        %v2194 = vpop.f32.mrb[0].mxu0
        %v2195 = vadd.f32 %v2002, %v2194
        %v2196 = vpop.f32.mrb[0].mxu0
        %v2197 = vadd.f32 %v2004, %v2196
        %2198 = vmatprep.mubr.bf16.mxu0 %v1300
        %2199 = vmatmul.mubr.bf16.gmra.mrb[0].mxu0 %v1299
        %v2200 = vpop.f32.mrb[0].mxu0
        %v2201 = vadd.f32 %v2008, %v2200
        %v2202 = vpop.f32.mrb[0].mxu0
        %v2203 = vadd.f32 %v2010, %v2202
        %v2204 = vpop.f32.mrb[0].mxu0
        %v2205 = vadd.f32 %v2012, %v2204
        %v2206 = vpop.f32.mrb[0].mxu0
        %v2207 = vadd.f32 %v2014, %v2206
        %2208 = vmatprep.mubr.bf16.mxu0 %v1306
        %2209 = vmatmul.mubr.bf16.gmra.mrb[0].mxu0 %v1305
        %v2210 = vpop.f32.mrb[0].mxu0
        %v2211 = vadd.f32 %v2018, %v2210
        %v2212 = vpop.f32.mrb[0].mxu0
        %v2213 = vadd.f32 %v2020, %v2212
        %v2214 = vpop.f32.mrb[0].mxu0
        %v2215 = vadd.f32 %v2022, %v2214
        %v2216 = vpop.f32.mrb[0].mxu0
        %v2217 = vadd.f32 %v2024, %v2216
        %2218 = vmatprep.mubr.bf16.mxu0 %v1312
        %2219 = vmatmul.mubr.bf16.gmra.mrb[0].mxu0 %v1311
        %v2220 = vpop.f32.mrb[0].mxu0
        %v2221 = vadd.f32 %v2028, %v2220
        %v2222 = vpop.f32.mrb[0].mxu0
        %v2223 = vadd.f32 %v2030, %v2222
        %v2224 = vpop.f32.mrb[0].mxu0
        %v2225 = vadd.f32 %v2032, %v2224
        %v2226 = vpop.f32.mrb[0].mxu0
        %v2227 = vadd.f32 %v2034, %v2226
        %2228 = vmatprep.mubr.bf16.mxu0 %v1318
        %2229 = vmatmul.mubr.bf16.gmra.mrb[0].mxu0 %v1317
        %v2230 = vpop.f32.mrb[0].mxu0
        %v2231 = vadd.f32 %v2038, %v2230
        %v2232 = vpop.f32.mrb[0].mxu0
        %v2233 = vadd.f32 %v2040, %v2232
        %v2234 = vpop.f32.mrb[0].mxu0
        %v2235 = vadd.f32 %v2042, %v2234
        %v2236 = vpop.f32.mrb[0].mxu0
        %v2237 = vadd.f32 %v2044, %v2236
        %2238 = vmatprep.mubr.bf16.mxu0 %v1324
        %2239 = vmatmul.mubr.bf16.gmra.mrb[0].mxu0 %v1323
        %v2240 = vpop.f32.mrb[0].mxu0
        %v2241 = vadd.f32 %v2048, %v2240
        %v2242 = vpop.f32.mrb[0].mxu0
        %v2243 = vadd.f32 %v2050, %v2242
        %v2244 = vpop.f32.mrb[0].mxu0
        %v2245 = vadd.f32 %v2052, %v2244
        %v2246 = vpop.f32.mrb[0].mxu0
        %v2247 = vadd.f32 %v2054, %v2246
        %2248 = vmatprep.mubr.bf16.mxu0 %v1330
        %2249 = vmatmul.mubr.bf16.gmra.mrb[0].mxu0 %v1329
        %v2250 = vpop.f32.mrb[0].mxu0
        %v2251 = vadd.f32 %v2058, %v2250
        %v2252 = vpop.f32.mrb[0].mxu0
        %v2253 = vadd.f32 %v2060, %v2252
        %v2254 = vpop.f32.mrb[0].mxu0
        %v2255 = vadd.f32 %v2062, %v2254
        %v2256 = vpop.f32.mrb[0].mxu0
        %v2257 = vadd.f32 %v2064, %v2256
        %2258 = vmatprep.mubr.bf16.mxu0 %v1336
        %2259 = vmatmul.mubr.bf16.gmra.mrb[0].mxu0 %v1335
        %v2260 = vpop.f32.mrb[0].mxu0
        %v2261 = vadd.f32 %v2068, %v2260
        %v2262 = vpop.f32.mrb[0].mxu0
        %v2263 = vadd.f32 %v2070, %v2262
        %v2264 = vpop.f32.mrb[0].mxu0
        %v2265 = vadd.f32 %v2072, %v2264
        %v2266 = vpop.f32.mrb[0].mxu0
        %v2267 = vadd.f32 %v2074, %v2266
        %2268 = vmatprep.mubr.bf16.mxu0 %v1342
        %2269 = vmatmul.mubr.bf16.gmra.mrb[0].mxu0 %v1341
        %v2270 = vpop.f32.mrb[0].mxu0
        %v2271 = vadd.f32 %v2078, %v2270
        %v2272 = vpop.f32.mrb[0].mxu0
        %v2273 = vadd.f32 %v2080, %v2272
        %v2274 = vpop.f32.mrb[0].mxu0
        %v2275 = vadd.f32 %v2082, %v2274
        %v2276 = vpop.f32.mrb[0].mxu0
        %v2277 = vadd.f32 %v2084, %v2276
        %2278 = vmatprep.mubr.bf16.mxu0 %v1348
        %2279 = vmatmul.mubr.bf16.gmra.mrb[0].mxu0 %v1347
        %v2280 = vpop.f32.mrb[0].mxu0
        %v2281 = vadd.f32 %v2088, %v2280
        %v2282 = vpop.f32.mrb[0].mxu0
        %v2283 = vadd.f32 %v2090, %v2282
        %v2284 = vpop.f32.mrb[0].mxu0
        %v2285 = vadd.f32 %v2092, %v2284
        %v2286 = vpop.f32.mrb[0].mxu0
        %v2287 = vadd.f32 %v2094, %v2286
        %2288 = vmatprep.mubr.bf16.mxu0 %v1354
        %2289 = vmatmul.mubr.bf16.gmra.mrb[0].mxu0 %v1353
        %v2290 = vpop.f32.mrb[0].mxu0
        %v2291 = vadd.f32 %v2098, %v2290
        %v2292 = vpop.f32.mrb[0].mxu0
        %v2293 = vadd.f32 %v2100, %v2292
        %v2294 = vpop.f32.mrb[0].mxu0
        %v2295 = vadd.f32 %v2102, %v2294
        %v2296 = vpop.f32.mrb[0].mxu0
        %v2297 = vadd.f32 %v2104, %v2296
        %2298 = vmatprep.mubr.bf16.mxu0 %v1360
        %2299 = vmatmul.mubr.bf16.gmra.mrb[0].mxu0 %v1359
        %v2300 = vpop.f32.mrb[0].mxu0
        %v2301 = vadd.f32 %v2108, %v2300
        %v2302 = vpop.f32.mrb[0].mxu0
        %v2303 = vadd.f32 %v2110, %v2302
        %v2304 = vpop.f32.mrb[0].mxu0
        %v2305 = vadd.f32 %v2112, %v2304
        %v2306 = vpop.f32.mrb[0].mxu0
        %v2307 = vadd.f32 %v2114, %v2306
        %2308 = vmatprep.mubr.bf16.mxu0 %v1366
        %2309 = vmatmul.mubr.bf16.gmra.mrb[0].mxu0 %v1365
        %v2310 = vpop.f32.mrb[0].mxu0
        %v2311 = vadd.f32 %v2118, %v2310
        %v2312 = vpop.f32.mrb[0].mxu0
        %v2313 = vadd.f32 %v2120, %v2312
        %v2314 = vpop.f32.mrb[0].mxu0
        %v2315 = vadd.f32 %v2122, %v2314
        %v2316 = vpop.f32.mrb[0].mxu0
        %v2317 = vadd.f32 %v2124, %v2316
        %2318 = vmatprep.mubr.bf16.mxu0 %v1372
        %2319 = vmatmul.mubr.bf16.gmra.mrb[0].mxu0 %v1371
        %v2320 = vpop.f32.mrb[0].mxu0
        %v2321 = vadd.f32 %v2128, %v2320
        %v2322 = vpop.f32.mrb[0].mxu0
        %v2323 = vadd.f32 %v2130, %v2322
        %v2324 = vpop.f32.mrb[0].mxu0
        %v2325 = vadd.f32 %v2132, %v2324
        %v2326 = vpop.f32.mrb[0].mxu0
        %v2327 = vadd.f32 %v2134, %v2326
        %2328 = vmatprep.mubr.bf16.mxu0 %v1378
        %2329 = vmatmul.mubr.bf16.gmra.mrb[0].mxu0 %v1377
        %v2330 = vpop.f32.mrb[0].mxu0
        %v2331 = vadd.f32 %v2138, %v2330
        %v2332 = vpop.f32.mrb[0].mxu0
        %v2333 = vadd.f32 %v2140, %v2332
        %v2334 = vpop.f32.mrb[0].mxu0
        %v2335 = vadd.f32 %v2142, %v2334
        %v2336 = vpop.f32.mrb[0].mxu0
        %v2337 = vadd.f32 %v2144, %v2336
        %2338 = vmatprep.mubr.bf16.mxu0 %v1384
        %2339 = vmatmul.mubr.bf16.gmra.mrb[0].mxu0 %v1383
        %v2340 = vpop.f32.mrb[0].mxu0
        %v2341 = vadd.f32 %v2148, %v2340
        %v2342 = vpop.f32.mrb[0].mxu0
        %v2343 = vadd.f32 %v2150, %v2342
        %v2344 = vpop.f32.mrb[0].mxu0
        %v2345 = vadd.f32 %v2152, %v2344
        %v2346 = vpop.f32.mrb[0].mxu0
        %v2347 = vadd.f32 %v2154, %v2346
        %2348 = vdwg.mxu0
        %2349 = vmatprep.subr.bf16.mxu0 %v1836
        %2350 = vmatpush1.bf16.msra.mxu0 %v1835
        %2351 = vmatprep.subr.bf16.mxu0 %v1838
        %2352 = vmatpush1.bf16.msra.mxu0 %v1837
        %2353 = vmatprep.subr.bf16.mxu0 %v1840
        %2354 = vmatpush1.bf16.msra.mxu0 %v1839
        %2355 = vmatprep.subr.bf16.mxu0 %v1842
        %2356 = vmatpush1.bf16.msra.mxu0 %v1841
        %2357 = vmatprep.subr.bf16.mxu0 %v1844
        %2358 = vmatpush1.bf16.msra.mxu0 %v1843
        %2359 = vmatprep.subr.bf16.mxu0 %v1846
        %2360 = vmatpush1.bf16.msra.mxu0 %v1845
        %2361 = vmatprep.subr.bf16.mxu0 %v1848
        %2362 = vmatpush1.bf16.msra.mxu0 %v1847
        %2363 = vmatprep.subr.bf16.mxu0 %v1850
        %2364 = vmatpush1.bf16.msra.mxu0 %v1849
        %2365 = vmatprep.subr.bf16.mxu0 %v1852
        %2366 = vmatpush1.bf16.msra.mxu0 %v1851
        %2367 = vmatprep.subr.bf16.mxu0 %v1854
        %2368 = vmatpush1.bf16.msra.mxu0 %v1853
        %2369 = vmatprep.subr.bf16.mxu0 %v1856
        %2370 = vmatpush1.bf16.msra.mxu0 %v1855
        %2371 = vmatprep.subr.bf16.mxu0 %v1858
        %2372 = vmatpush1.bf16.msra.mxu0 %v1857
        %2373 = vmatprep.subr.bf16.mxu0 %v1860
        %2374 = vmatpush1.bf16.msra.mxu0 %v1859
        %2375 = vmatprep.subr.bf16.mxu0 %v1862
        %2376 = vmatpush1.bf16.msra.mxu0 %v1861
        %2377 = vmatprep.subr.bf16.mxu0 %v1864
        %2378 = vmatpush1.bf16.msra.mxu0 %v1863
        %2379 = vmatprep.subr.bf16.mxu0 %v1866
        %2380 = vmatpush1.bf16.msra.mxu0 %v1865
        %2381 = vmatprep.mubr.bf16.mxu0 %v1296
        %2382 = vmatmul.mubr.bf16.gmra.mrb[0].mxu0 %v1295
        %v2383 = vpop.f32.mrb[0].mxu0
        %v2384 = vadd.f32 %v2191, %v2383
        %v2385 = vpop.f32.mrb[0].mxu0
        %v2386 = vadd.f32 %v2193, %v2385
        %v2387 = vpop.f32.mrb[0].mxu0
        %v2388 = vadd.f32 %v2195, %v2387
        %v2389 = vpop.f32.mrb[0].mxu0
        %v2390 = vadd.f32 %v2197, %v2389
        %2391 = vmatprep.mubr.bf16.mxu0 %v1302
        %2392 = vmatmul.mubr.bf16.gmra.mrb[0].mxu0 %v1301
        %v2393 = vpop.f32.mrb[0].mxu0
        %v2394 = vadd.f32 %v2201, %v2393
        %v2395 = vpop.f32.mrb[0].mxu0
        %v2396 = vadd.f32 %v2203, %v2395
        %v2397 = vpop.f32.mrb[0].mxu0
        %v2398 = vadd.f32 %v2205, %v2397
        %v2399 = vpop.f32.mrb[0].mxu0
        %v2400 = vadd.f32 %v2207, %v2399
        %2401 = vmatprep.mubr.bf16.mxu0 %v1308
        %2402 = vmatmul.mubr.bf16.gmra.mrb[0].mxu0 %v1307
        %v2403 = vpop.f32.mrb[0].mxu0
        %v2404 = vadd.f32 %v2211, %v2403
        %v2405 = vpop.f32.mrb[0].mxu0
        %v2406 = vadd.f32 %v2213, %v2405
        %v2407 = vpop.f32.mrb[0].mxu0
        %v2408 = vadd.f32 %v2215, %v2407
        %v2409 = vpop.f32.mrb[0].mxu0
        %v2410 = vadd.f32 %v2217, %v2409
        %2411 = vmatprep.mubr.bf16.mxu0 %v1314
        %2412 = vmatmul.mubr.bf16.gmra.mrb[0].mxu0 %v1313
        %v2413 = vpop.f32.mrb[0].mxu0
        %v2414 = vadd.f32 %v2221, %v2413
        %v2415 = vpop.f32.mrb[0].mxu0
        %v2416 = vadd.f32 %v2223, %v2415
        %v2417 = vpop.f32.mrb[0].mxu0
        %v2418 = vadd.f32 %v2225, %v2417
        %v2419 = vpop.f32.mrb[0].mxu0
        %v2420 = vadd.f32 %v2227, %v2419
        %2421 = vmatprep.mubr.bf16.mxu0 %v1320
        %2422 = vmatmul.mubr.bf16.gmra.mrb[0].mxu0 %v1319
        %v2423 = vpop.f32.mrb[0].mxu0
        %v2424 = vadd.f32 %v2231, %v2423
        %v2425 = vpop.f32.mrb[0].mxu0
        %v2426 = vadd.f32 %v2233, %v2425
        %v2427 = vpop.f32.mrb[0].mxu0
        %v2428 = vadd.f32 %v2235, %v2427
        %v2429 = vpop.f32.mrb[0].mxu0
        %v2430 = vadd.f32 %v2237, %v2429
        %2431 = vmatprep.mubr.bf16.mxu0 %v1326
        %2432 = vmatmul.mubr.bf16.gmra.mrb[0].mxu0 %v1325
        %v2433 = vpop.f32.mrb[0].mxu0
        %v2434 = vadd.f32 %v2241, %v2433
        %v2435 = vpop.f32.mrb[0].mxu0
        %v2436 = vadd.f32 %v2243, %v2435
        %v2437 = vpop.f32.mrb[0].mxu0
        %v2438 = vadd.f32 %v2245, %v2437
        %v2439 = vpop.f32.mrb[0].mxu0
        %v2440 = vadd.f32 %v2247, %v2439
        %2441 = vmatprep.mubr.bf16.mxu0 %v1332
        %2442 = vmatmul.mubr.bf16.gmra.mrb[0].mxu0 %v1331
        %v2443 = vpop.f32.mrb[0].mxu0
        %v2444 = vadd.f32 %v2251, %v2443
        %v2445 = vpop.f32.mrb[0].mxu0
        %v2446 = vadd.f32 %v2253, %v2445
        %v2447 = vpop.f32.mrb[0].mxu0
        %v2448 = vadd.f32 %v2255, %v2447
        %v2449 = vpop.f32.mrb[0].mxu0
        %v2450 = vadd.f32 %v2257, %v2449
        %2451 = vmatprep.mubr.bf16.mxu0 %v1338
        %2452 = vmatmul.mubr.bf16.gmra.mrb[0].mxu0 %v1337
        %v2453 = vpop.f32.mrb[0].mxu0
        %v2454 = vadd.f32 %v2261, %v2453
        %v2455 = vpop.f32.mrb[0].mxu0
        %v2456 = vadd.f32 %v2263, %v2455
        %v2457 = vpop.f32.mrb[0].mxu0
        %v2458 = vadd.f32 %v2265, %v2457
        %v2459 = vpop.f32.mrb[0].mxu0
        %v2460 = vadd.f32 %v2267, %v2459
        %2461 = vmatprep.mubr.bf16.mxu0 %v1344
        %2462 = vmatmul.mubr.bf16.gmra.mrb[0].mxu0 %v1343
        %v2463 = vpop.f32.mrb[0].mxu0
        %v2464 = vadd.f32 %v2271, %v2463
        %v2465 = vpop.f32.mrb[0].mxu0
        %v2466 = vadd.f32 %v2273, %v2465
        %v2467 = vpop.f32.mrb[0].mxu0
        %v2468 = vadd.f32 %v2275, %v2467
        %v2469 = vpop.f32.mrb[0].mxu0
        %v2470 = vadd.f32 %v2277, %v2469
        %2471 = vmatprep.mubr.bf16.mxu0 %v1350
        %2472 = vmatmul.mubr.bf16.gmra.mrb[0].mxu0 %v1349
        %v2473 = vpop.f32.mrb[0].mxu0
        %v2474 = vadd.f32 %v2281, %v2473
        %v2475 = vpop.f32.mrb[0].mxu0
        %v2476 = vadd.f32 %v2283, %v2475
        %v2477 = vpop.f32.mrb[0].mxu0
        %v2478 = vadd.f32 %v2285, %v2477
        %v2479 = vpop.f32.mrb[0].mxu0
        %v2480 = vadd.f32 %v2287, %v2479
        %2481 = vmatprep.mubr.bf16.mxu0 %v1356
        %2482 = vmatmul.mubr.bf16.gmra.mrb[0].mxu0 %v1355
        %v2483 = vpop.f32.mrb[0].mxu0
        %v2484 = vadd.f32 %v2291, %v2483
        %v2485 = vpop.f32.mrb[0].mxu0
        %v2486 = vadd.f32 %v2293, %v2485
        %v2487 = vpop.f32.mrb[0].mxu0
        %v2488 = vadd.f32 %v2295, %v2487
        %v2489 = vpop.f32.mrb[0].mxu0
        %v2490 = vadd.f32 %v2297, %v2489
        %2491 = vmatprep.mubr.bf16.mxu0 %v1362
        %2492 = vmatmul.mubr.bf16.gmra.mrb[0].mxu0 %v1361
        %v2493 = vpop.f32.mrb[0].mxu0
        %v2494 = vadd.f32 %v2301, %v2493
        %v2495 = vpop.f32.mrb[0].mxu0
        %v2496 = vadd.f32 %v2303, %v2495
        %v2497 = vpop.f32.mrb[0].mxu0
        %v2498 = vadd.f32 %v2305, %v2497
        %v2499 = vpop.f32.mrb[0].mxu0
        %v2500 = vadd.f32 %v2307, %v2499
        %2501 = vmatprep.mubr.bf16.mxu0 %v1368
        %2502 = vmatmul.mubr.bf16.gmra.mrb[0].mxu0 %v1367
        %v2503 = vpop.f32.mrb[0].mxu0
        %v2504 = vadd.f32 %v2311, %v2503
        %v2505 = vpop.f32.mrb[0].mxu0
        %v2506 = vadd.f32 %v2313, %v2505
        %v2507 = vpop.f32.mrb[0].mxu0
        %v2508 = vadd.f32 %v2315, %v2507
        %v2509 = vpop.f32.mrb[0].mxu0
        %v2510 = vadd.f32 %v2317, %v2509
        %2511 = vmatprep.mubr.bf16.mxu0 %v1374
        %2512 = vmatmul.mubr.bf16.gmra.mrb[0].mxu0 %v1373
        %v2513 = vpop.f32.mrb[0].mxu0
        %v2514 = vadd.f32 %v2321, %v2513
        %v2515 = vpop.f32.mrb[0].mxu0
        %v2516 = vadd.f32 %v2323, %v2515
        %v2517 = vpop.f32.mrb[0].mxu0
        %v2518 = vadd.f32 %v2325, %v2517
        %v2519 = vpop.f32.mrb[0].mxu0
        %v2520 = vadd.f32 %v2327, %v2519
        %2521 = vmatprep.mubr.bf16.mxu0 %v1380
        %2522 = vmatmul.mubr.bf16.gmra.mrb[0].mxu0 %v1379
        %v2523 = vpop.f32.mrb[0].mxu0
        %v2524 = vadd.f32 %v2331, %v2523
        %v2525 = vpop.f32.mrb[0].mxu0
        %v2526 = vadd.f32 %v2333, %v2525
        %v2527 = vpop.f32.mrb[0].mxu0
        %v2528 = vadd.f32 %v2335, %v2527
        %v2529 = vpop.f32.mrb[0].mxu0
        %v2530 = vadd.f32 %v2337, %v2529
        %2531 = vmatprep.mubr.bf16.mxu0 %v1386
        %2532 = vmatmul.mubr.bf16.gmra.mrb[0].mxu0 %v1385
        %v2533 = vpop.f32.mrb[0].mxu0
        %v2534 = vadd.f32 %v2341, %v2533
        %v2535 = vpop.f32.mrb[0].mxu0
        %v2536 = vadd.f32 %v2343, %v2535
        %v2537 = vpop.f32.mrb[0].mxu0
        %v2538 = vadd.f32 %v2345, %v2537
        %v2539 = vpop.f32.mrb[0].mxu0
        %v2540 = vadd.f32 %v2347, %v2539
        %2541 = vdwg.mxu0
        %2542 = vst [vmem:[%s244] sm:$0xff] %v2384
        %2543 = vst [vmem:[%s244 + $0x8] sm:$0xff] %v2386
        %2544 = vst [vmem:[%s244 + $0x10] sm:$0xff] %v2388
        %2545 = vst [vmem:[%s244 + $0x18] sm:$0xff] %v2390
        %2546 = vst [vmem:[%s244 + $0x20] sm:$0xff] %v2394
        %2547 = vst [vmem:[%s244 + $0x28] sm:$0xff] %v2396
        %2548 = vst [vmem:[%s244 + $0x30] sm:$0xff] %v2398
        %2549 = vst [vmem:[%s244 + $0x38] sm:$0xff] %v2400
        %2550 = vst [vmem:[%s244 + $0x40] sm:$0xff] %v2404
        %2551 = vst [vmem:[%s244 + $0x48] sm:$0xff] %v2406
        %2552 = vst [vmem:[%s244 + $0x50] sm:$0xff] %v2408
        %2553 = vst [vmem:[%s244 + $0x58] sm:$0xff] %v2410
        %2554 = vst [vmem:[%s244 + $0x60] sm:$0xff] %v2414
        %2555 = vst [vmem:[%s244 + $0x68] sm:$0xff] %v2416
        %2556 = vst [vmem:[%s244 + $0x70] sm:$0xff] %v2418
        %2557 = vst [vmem:[%s244 + $0x78] sm:$0xff] %v2420
        %2558 = vst [vmem:[%s244 + $0x80] sm:$0xff] %v2424
        %2559 = vst [vmem:[%s244 + $0x88] sm:$0xff] %v2426
        %2560 = vst [vmem:[%s244 + $0x90] sm:$0xff] %v2428
        %2561 = vst [vmem:[%s244 + $0x98] sm:$0xff] %v2430
        %2562 = vst [vmem:[%s244 + $0xa0] sm:$0xff] %v2434
        %2563 = vst [vmem:[%s244 + $0xa8] sm:$0xff] %v2436
        %2564 = vst [vmem:[%s244 + $0xb0] sm:$0xff] %v2438
        %2565 = vst [vmem:[%s244 + $0xb8] sm:$0xff] %v2440
        %2566 = vst [vmem:[%s244 + $0xc0] sm:$0xff] %v2444
        %2567 = vst [vmem:[%s244 + $0xc8] sm:$0xff] %v2446
        %2568 = vst [vmem:[%s244 + $0xd0] sm:$0xff] %v2448
        %2569 = vst [vmem:[%s244 + $0xd8] sm:$0xff] %v2450
        %2570 = vst [vmem:[%s244 + $0xe0] sm:$0xff] %v2454
        %2571 = vst [vmem:[%s244 + $0xe8] sm:$0xff] %v2456
        %2572 = vst [vmem:[%s244 + $0xf0] sm:$0xff] %v2458
        %2573 = vst [vmem:[%s244 + $0xf8] sm:$0xff] %v2460
        %2574 = vst [vmem:[%s244 + $0x100] sm:$0xff] %v2464
        %2575 = vst [vmem:[%s244 + $0x108] sm:$0xff] %v2466
        %2576 = vst [vmem:[%s244 + $0x110] sm:$0xff] %v2468
        %2577 = vst [vmem:[%s244 + $0x118] sm:$0xff] %v2470
        %2578 = vst [vmem:[%s244 + $0x120] sm:$0xff] %v2474
        %2579 = vst [vmem:[%s244 + $0x128] sm:$0xff] %v2476
        %2580 = vst [vmem:[%s244 + $0x130] sm:$0xff] %v2478
        %2581 = vst [vmem:[%s244 + $0x138] sm:$0xff] %v2480
        %2582 = vst [vmem:[%s244 + $0x140] sm:$0xff] %v2484
        %2583 = vst [vmem:[%s244 + $0x148] sm:$0xff] %v2486
        %2584 = vst [vmem:[%s244 + $0x150] sm:$0xff] %v2488
        %2585 = vst [vmem:[%s244 + $0x158] sm:$0xff] %v2490
        %2586 = vst [vmem:[%s244 + $0x160] sm:$0xff] %v2494
        %2587 = vst [vmem:[%s244 + $0x168] sm:$0xff] %v2496
        %2588 = vst [vmem:[%s244 + $0x170] sm:$0xff] %v2498
        %2589 = vst [vmem:[%s244 + $0x178] sm:$0xff] %v2500
        %2590 = vst [vmem:[%s244 + $0x180] sm:$0xff] %v2504
        %2591 = vst [vmem:[%s244 + $0x188] sm:$0xff] %v2506
        %2592 = vst [vmem:[%s244 + $0x190] sm:$0xff] %v2508
        %2593 = vst [vmem:[%s244 + $0x198] sm:$0xff] %v2510
        %2594 = vst [vmem:[%s244 + $0x1a0] sm:$0xff] %v2514
        %2595 = vst [vmem:[%s244 + $0x1a8] sm:$0xff] %v2516
        %2596 = vst [vmem:[%s244 + $0x1b0] sm:$0xff] %v2518
        %2597 = vst [vmem:[%s244 + $0x1b8] sm:$0xff] %v2520
        %2598 = vst [vmem:[%s244 + $0x1c0] sm:$0xff] %v2524
        %2599 = vst [vmem:[%s244 + $0x1c8] sm:$0xff] %v2526
        %2600 = vst [vmem:[%s244 + $0x1d0] sm:$0xff] %v2528
        %2601 = vst [vmem:[%s244 + $0x1d8] sm:$0xff] %v2530
        %2602 = vst [vmem:[%s244 + $0x1e0] sm:$0xff] %v2534
        %2603 = vst [vmem:[%s244 + $0x1e8] sm:$0xff] %v2536
        %2604 = vst [vmem:[%s244 + $0x1f0] sm:$0xff] %v2538
        %2605 = vst [vmem:[%s244 + $0x1f8] sm:$0xff] %v2540
        %v2606 = vld [vmem:[%s244] sm:$0xff]
        %v2607 = vld [vmem:[%s244 + $0x8] sm:$0xff]
        %v2608 = vld [vmem:[%s244 + $0x10] sm:$0xff]
        %v2609 = vld [vmem:[%s244 + $0x18] sm:$0xff]
        %v2610 = vld [vmem:[%s244 + $0x20] sm:$0xff]
        %v2611 = vld [vmem:[%s244 + $0x28] sm:$0xff]
        %v2612 = vld [vmem:[%s244 + $0x30] sm:$0xff]
        %v2613 = vld [vmem:[%s244 + $0x38] sm:$0xff]
        %v2614 = vld [vmem:[%s244 + $0x40] sm:$0xff]
        %v2615 = vld [vmem:[%s244 + $0x48] sm:$0xff]
        %v2616 = vld [vmem:[%s244 + $0x50] sm:$0xff]
        %v2617 = vld [vmem:[%s244 + $0x58] sm:$0xff]
        %v2618 = vld [vmem:[%s244 + $0x60] sm:$0xff]
        %v2619 = vld [vmem:[%s244 + $0x68] sm:$0xff]
        %v2620 = vld [vmem:[%s244 + $0x70] sm:$0xff]
        %v2621 = vld [vmem:[%s244 + $0x78] sm:$0xff]
        %v2622 = vld [vmem:[%s244 + $0x80] sm:$0xff]
        %v2623 = vld [vmem:[%s244 + $0x88] sm:$0xff]
        %v2624 = vld [vmem:[%s244 + $0x90] sm:$0xff]
        %v2625 = vld [vmem:[%s244 + $0x98] sm:$0xff]
        %v2626 = vld [vmem:[%s244 + $0xa0] sm:$0xff]
        %v2627 = vld [vmem:[%s244 + $0xa8] sm:$0xff]
        %v2628 = vld [vmem:[%s244 + $0xb0] sm:$0xff]
        %v2629 = vld [vmem:[%s244 + $0xb8] sm:$0xff]
        %v2630 = vld [vmem:[%s244 + $0xc0] sm:$0xff]
        %v2631 = vld [vmem:[%s244 + $0xc8] sm:$0xff]
        %v2632 = vld [vmem:[%s244 + $0xd0] sm:$0xff]
        %v2633 = vld [vmem:[%s244 + $0xd8] sm:$0xff]
        %v2634 = vld [vmem:[%s244 + $0xe0] sm:$0xff]
        %v2635 = vld [vmem:[%s244 + $0xe8] sm:$0xff]
        %v2636 = vld [vmem:[%s244 + $0xf0] sm:$0xff]
        %v2637 = vld [vmem:[%s244 + $0xf8] sm:$0xff]
        %v2638 = vld [vmem:[%s244 + $0x100] sm:$0xff]
        %v2639 = vld [vmem:[%s244 + $0x108] sm:$0xff]
        %v2640 = vld [vmem:[%s244 + $0x110] sm:$0xff]
        %v2641 = vld [vmem:[%s244 + $0x118] sm:$0xff]
        %v2642 = vld [vmem:[%s244 + $0x120] sm:$0xff]
        %v2643 = vld [vmem:[%s244 + $0x128] sm:$0xff]
        %v2644 = vld [vmem:[%s244 + $0x130] sm:$0xff]
        %v2645 = vld [vmem:[%s244 + $0x138] sm:$0xff]
        %v2646 = vld [vmem:[%s244 + $0x140] sm:$0xff]
        %v2647 = vld [vmem:[%s244 + $0x148] sm:$0xff]
        %v2648 = vld [vmem:[%s244 + $0x150] sm:$0xff]
        %v2649 = vld [vmem:[%s244 + $0x158] sm:$0xff]
        %v2650 = vld [vmem:[%s244 + $0x160] sm:$0xff]
        %v2651 = vld [vmem:[%s244 + $0x168] sm:$0xff]
        %v2652 = vld [vmem:[%s244 + $0x170] sm:$0xff]
        %v2653 = vld [vmem:[%s244 + $0x178] sm:$0xff]
        %v2654 = vld [vmem:[%s244 + $0x180] sm:$0xff]
        %v2655 = vld [vmem:[%s244 + $0x188] sm:$0xff]
        %v2656 = vld [vmem:[%s244 + $0x190] sm:$0xff]
        %v2657 = vld [vmem:[%s244 + $0x198] sm:$0xff]
        %v2658 = vld [vmem:[%s244 + $0x1a0] sm:$0xff]
        %v2659 = vld [vmem:[%s244 + $0x1a8] sm:$0xff]
        %v2660 = vld [vmem:[%s244 + $0x1b0] sm:$0xff]
        %v2661 = vld [vmem:[%s244 + $0x1b8] sm:$0xff]
        %v2662 = vld [vmem:[%s244 + $0x1c0] sm:$0xff]
        %v2663 = vld [vmem:[%s244 + $0x1c8] sm:$0xff]
        %v2664 = vld [vmem:[%s244 + $0x1d0] sm:$0xff]
        %v2665 = vld [vmem:[%s244 + $0x1d8] sm:$0xff]
        %v2666 = vld [vmem:[%s244 + $0x1e0] sm:$0xff]
        %v2667 = vld [vmem:[%s244 + $0x1e8] sm:$0xff]
        %v2668 = vld [vmem:[%s244 + $0x1f0] sm:$0xff]
        %v2669 = vld [vmem:[%s244 + $0x1f8] sm:$0xff]
        %v2670 = vld [vmem:[#allocation2 + $0x30] sm:$0xff]
        %v2671 = vld [vmem:[#allocation2 + $0x38] sm:$0xff]
        %v2672 = vld [vmem:[#allocation2 + $0x40] sm:$0xff]
        %v2673 = vld [vmem:[#allocation2 + $0x48] sm:$0xff]
        %v2674 = vld [vmem:[#allocation2 + $0x50] sm:$0xff]
        %v2675 = vld [vmem:[#allocation2 + $0x58] sm:$0xff]
        %v2676 = vld [vmem:[#allocation2 + $0x60] sm:$0xff]
        %v2677 = vld [vmem:[#allocation2 + $0x68] sm:$0xff]
        %v2678 = vld [vmem:[#allocation2 + $0x70] sm:$0xff]
        %v2679 = vld [vmem:[#allocation2 + $0x78] sm:$0xff]
        %v2680 = vld [vmem:[#allocation2 + $0x80] sm:$0xff]
        %v2681 = vld [vmem:[#allocation2 + $0x88] sm:$0xff]
        %v2682 = vld [vmem:[#allocation2 + $0x90] sm:$0xff]
        %v2683 = vld [vmem:[#allocation2 + $0x98] sm:$0xff]
        %v2684 = vld [vmem:[#allocation2 + $0xa0] sm:$0xff]
        %v2685 = vld [vmem:[#allocation2 + $0xa8] sm:$0xff]
        %v2686 = vld [vmem:[#allocation2 + $0xb0] sm:$0xff]
        %v2687 = vld [vmem:[#allocation2 + $0xb8] sm:$0xff]
        %v2688 = vld [vmem:[#allocation2 + $0xc0] sm:$0xff]
        %v2689 = vld [vmem:[#allocation2 + $0xc8] sm:$0xff]
        %v2690 = vld [vmem:[#allocation2 + $0xd0] sm:$0xff]
        %v2691 = vld [vmem:[#allocation2 + $0xd8] sm:$0xff]
        %v2692 = vld [vmem:[#allocation2 + $0xe0] sm:$0xff]
        %v2693 = vld [vmem:[#allocation2 + $0xe8] sm:$0xff]
        %v2694 = vld [vmem:[#allocation2 + $0xf0] sm:$0xff]
        %v2695 = vld [vmem:[#allocation2 + $0xf8] sm:$0xff]
        %v2696 = vld [vmem:[#allocation2 + $0x100] sm:$0xff]
        %v2697 = vld [vmem:[#allocation2 + $0x108] sm:$0xff]
        %v2698 = vld [vmem:[#allocation2 + $0x110] sm:$0xff]
        %v2699 = vld [vmem:[#allocation2 + $0x118] sm:$0xff]
        %v2700 = vld [vmem:[#allocation2 + $0x120] sm:$0xff]
        %v2701 = vld [vmem:[#allocation2 + $0x128] sm:$0xff]
        %v2702 = vld [vmem:[#allocation2 + $0x130] sm:$0xff]
        %v2703 = vld [vmem:[#allocation2 + $0x138] sm:$0xff]
        %v2704 = vld [vmem:[#allocation2 + $0x140] sm:$0xff]
        %v2705 = vld [vmem:[#allocation2 + $0x148] sm:$0xff]
        %v2706 = vld [vmem:[#allocation2 + $0x150] sm:$0xff]
        %v2707 = vld [vmem:[#allocation2 + $0x158] sm:$0xff]
        %v2708 = vld [vmem:[#allocation2 + $0x160] sm:$0xff]
        %v2709 = vld [vmem:[#allocation2 + $0x168] sm:$0xff]
        %v2710 = vld [vmem:[#allocation2 + $0x170] sm:$0xff]
        %v2711 = vld [vmem:[#allocation2 + $0x178] sm:$0xff]
        %v2712 = vld [vmem:[#allocation2 + $0x180] sm:$0xff]
        %v2713 = vld [vmem:[#allocation2 + $0x188] sm:$0xff]
        %v2714 = vld [vmem:[#allocation2 + $0x190] sm:$0xff]
        %v2715 = vld [vmem:[#allocation2 + $0x198] sm:$0xff]
        %v2716 = vld [vmem:[#allocation2 + $0x1a0] sm:$0xff]
        %v2717 = vld [vmem:[#allocation2 + $0x1a8] sm:$0xff]
        %v2718 = vld [vmem:[#allocation2 + $0x1b0] sm:$0xff]
        %v2719 = vld [vmem:[#allocation2 + $0x1b8] sm:$0xff]
        %v2720 = vld [vmem:[#allocation2 + $0x1c0] sm:$0xff]
        %v2721 = vld [vmem:[#allocation2 + $0x1c8] sm:$0xff]
        %v2722 = vld [vmem:[#allocation2 + $0x1d0] sm:$0xff]
        %v2723 = vld [vmem:[#allocation2 + $0x1d8] sm:$0xff]
        %v2724 = vld [vmem:[#allocation2 + $0x1e0] sm:$0xff]
        %v2725 = vld [vmem:[#allocation2 + $0x1e8] sm:$0xff]
        %v2726 = vld [vmem:[#allocation2 + $0x1f0] sm:$0xff]
        %v2727 = vld [vmem:[#allocation2 + $0x1f8] sm:$0xff]
        %v2728 = vld [vmem:[#allocation2 + $0x200] sm:$0xff]
        %v2729 = vld [vmem:[#allocation2 + $0x208] sm:$0xff]
        %v2730 = vld [vmem:[#allocation2 + $0x210] sm:$0xff]
        %v2731 = vld [vmem:[#allocation2 + $0x218] sm:$0xff]
        %v2732 = vld [vmem:[#allocation2 + $0x220] sm:$0xff]
        %v2733 = vld [vmem:[#allocation2 + $0x228] sm:$0xff]
        %v2734 = vld [vmem:[#allocation2 + $0x230] sm:$0xff]
        %v2735 = vld [vmem:[#allocation2 + $0x238] sm:$0xff]
        %v2736 = vld [vmem:[#allocation2 + $0x240] sm:$0xff]
        %v2737 = vld [vmem:[#allocation2 + $0x248] sm:$0xff]
        %v2738 = vld [vmem:[#allocation2 + $0x250] sm:$0xff]
        %v2739 = vld [vmem:[#allocation2 + $0x258] sm:$0xff]
        %v2740 = vld [vmem:[#allocation2 + $0x260] sm:$0xff]
        %v2741 = vld [vmem:[#allocation2 + $0x268] sm:$0xff]
        %v2742 = vld [vmem:[#allocation2 + $0x270] sm:$0xff]
        %v2743 = vld [vmem:[#allocation2 + $0x278] sm:$0xff]
        %v2744 = vld [vmem:[#allocation2 + $0x280] sm:$0xff]
        %v2745 = vld [vmem:[#allocation2 + $0x288] sm:$0xff]
        %v2746 = vld [vmem:[#allocation2 + $0x290] sm:$0xff]
        %v2747 = vld [vmem:[#allocation2 + $0x298] sm:$0xff]
        %v2748 = vld [vmem:[#allocation2 + $0x2a0] sm:$0xff]
        %v2749 = vld [vmem:[#allocation2 + $0x2a8] sm:$0xff]
        %v2750 = vld [vmem:[#allocation2 + $0x2b0] sm:$0xff]
        %v2751 = vld [vmem:[#allocation2 + $0x2b8] sm:$0xff]
        %v2752 = vld [vmem:[#allocation2 + $0x2c0] sm:$0xff]
        %v2753 = vld [vmem:[#allocation2 + $0x2c8] sm:$0xff]
        %v2754 = vld [vmem:[#allocation2 + $0x2d0] sm:$0xff]
        %v2755 = vld [vmem:[#allocation2 + $0x2d8] sm:$0xff]
        %v2756 = vld [vmem:[#allocation2 + $0x2e0] sm:$0xff]
        %v2757 = vld [vmem:[#allocation2 + $0x2e8] sm:$0xff]
        %v2758 = vld [vmem:[#allocation2 + $0x2f0] sm:$0xff]
        %v2759 = vld [vmem:[#allocation2 + $0x2f8] sm:$0xff]
        %v2760 = vld [vmem:[#allocation2 + $0x300] sm:$0xff]
        %v2761 = vld [vmem:[#allocation2 + $0x308] sm:$0xff]
        %v2762 = vld [vmem:[#allocation2 + $0x310] sm:$0xff]
        %v2763 = vld [vmem:[#allocation2 + $0x318] sm:$0xff]
        %v2764 = vld [vmem:[#allocation2 + $0x320] sm:$0xff]
        %v2765 = vld [vmem:[#allocation2 + $0x328] sm:$0xff]
        %s2766 = scalar_lea.vmem %s1, 768
        %v2767 = vld [vmem:[%s2766] sm:$0xff]
        %v2768 = vld [vmem:[%s2766 + $0x8] sm:$0xff]
        %v2769 = vld [vmem:[%s2766 + $0x10] sm:$0xff]
        %v2770 = vld [vmem:[%s2766 + $0x18] sm:$0xff]
        %v2771 = vld [vmem:[%s2766 + $0x20] sm:$0xff]
        %v2772 = vld [vmem:[%s2766 + $0x28] sm:$0xff]
        %v2773 = vld [vmem:[%s2766 + $0x30] sm:$0xff]
        %v2774 = vld [vmem:[%s2766 + $0x38] sm:$0xff]
        %v2775 = vld [vmem:[%s2766 + $0x40] sm:$0xff]
        %v2776 = vld [vmem:[%s2766 + $0x48] sm:$0xff]
        %v2777 = vld [vmem:[%s2766 + $0x50] sm:$0xff]
        %v2778 = vld [vmem:[%s2766 + $0x58] sm:$0xff]
        %v2779 = vld [vmem:[%s2766 + $0x60] sm:$0xff]
        %v2780 = vld [vmem:[%s2766 + $0x68] sm:$0xff]
        %v2781 = vld [vmem:[%s2766 + $0x70] sm:$0xff]
        %v2782 = vld [vmem:[%s2766 + $0x78] sm:$0xff]
        %v2783 = vld [vmem:[%s2766 + $0x80] sm:$0xff]
        %v2784 = vld [vmem:[%s2766 + $0x88] sm:$0xff]
        %v2785 = vld [vmem:[%s2766 + $0x90] sm:$0xff]
        %v2786 = vld [vmem:[%s2766 + $0x98] sm:$0xff]
        %v2787 = vld [vmem:[%s2766 + $0xa0] sm:$0xff]
        %v2788 = vld [vmem:[%s2766 + $0xa8] sm:$0xff]
        %v2789 = vld [vmem:[%s2766 + $0xb0] sm:$0xff]
        %v2790 = vld [vmem:[%s2766 + $0xb8] sm:$0xff]
        %v2791 = vld [vmem:[%s2766 + $0xc0] sm:$0xff]
        %v2792 = vld [vmem:[%s2766 + $0xc8] sm:$0xff]
        %v2793 = vld [vmem:[%s2766 + $0xd0] sm:$0xff]
        %v2794 = vld [vmem:[%s2766 + $0xd8] sm:$0xff]
        %v2795 = vld [vmem:[%s2766 + $0xe0] sm:$0xff]
        %v2796 = vld [vmem:[%s2766 + $0xe8] sm:$0xff]
        %v2797 = vld [vmem:[%s2766 + $0xf0] sm:$0xff]
        %v2798 = vld [vmem:[%s2766 + $0xf8] sm:$0xff]
        %v2799 = vld [vmem:[%s2766 + $0x100] sm:$0xff]
        %v2800 = vld [vmem:[%s2766 + $0x108] sm:$0xff]
        %v2801 = vld [vmem:[%s2766 + $0x110] sm:$0xff]
        %v2802 = vld [vmem:[%s2766 + $0x118] sm:$0xff]
        %v2803 = vld [vmem:[%s2766 + $0x120] sm:$0xff]
        %v2804 = vld [vmem:[%s2766 + $0x128] sm:$0xff]
        %v2805 = vld [vmem:[%s2766 + $0x130] sm:$0xff]
        %v2806 = vld [vmem:[%s2766 + $0x138] sm:$0xff]
        %v2807 = vld [vmem:[%s2766 + $0x140] sm:$0xff]
        %v2808 = vld [vmem:[%s2766 + $0x148] sm:$0xff]
        %v2809 = vld [vmem:[%s2766 + $0x150] sm:$0xff]
        %v2810 = vld [vmem:[%s2766 + $0x158] sm:$0xff]
        %v2811 = vld [vmem:[%s2766 + $0x160] sm:$0xff]
        %v2812 = vld [vmem:[%s2766 + $0x168] sm:$0xff]
        %v2813 = vld [vmem:[%s2766 + $0x170] sm:$0xff]
        %v2814 = vld [vmem:[%s2766 + $0x178] sm:$0xff]
        %v2815 = vld [vmem:[%s2766 + $0x180] sm:$0xff]
        %v2816 = vld [vmem:[%s2766 + $0x188] sm:$0xff]
        %v2817 = vld [vmem:[%s2766 + $0x190] sm:$0xff]
        %v2818 = vld [vmem:[%s2766 + $0x198] sm:$0xff]
        %v2819 = vld [vmem:[%s2766 + $0x1a0] sm:$0xff]
        %v2820 = vld [vmem:[%s2766 + $0x1a8] sm:$0xff]
        %v2821 = vld [vmem:[%s2766 + $0x1b0] sm:$0xff]
        %v2822 = vld [vmem:[%s2766 + $0x1b8] sm:$0xff]
        %v2823 = vld [vmem:[%s2766 + $0x1c0] sm:$0xff]
        %v2824 = vld [vmem:[%s2766 + $0x1c8] sm:$0xff]
        %v2825 = vld [vmem:[%s2766 + $0x1d0] sm:$0xff]
        %v2826 = vld [vmem:[%s2766 + $0x1d8] sm:$0xff]
        %v2827 = vld [vmem:[%s2766 + $0x1e0] sm:$0xff]
        %v2828 = vld [vmem:[%s2766 + $0x1e8] sm:$0xff]
        %v2829 = vld [vmem:[%s2766 + $0x1f0] sm:$0xff]
        %v2830 = vld [vmem:[%s2766 + $0x1f8] sm:$0xff]
        %v2831 = vld [vmem:[%s2766 + $0x200] sm:$0xff]
        %v2832 = vld [vmem:[%s2766 + $0x208] sm:$0xff]
        %v2833 = vld [vmem:[%s2766 + $0x210] sm:$0xff]
        %v2834 = vld [vmem:[%s2766 + $0x218] sm:$0xff]
        %v2835 = vld [vmem:[%s2766 + $0x220] sm:$0xff]
        %v2836 = vld [vmem:[%s2766 + $0x228] sm:$0xff]
        %v2837 = vld [vmem:[%s2766 + $0x230] sm:$0xff]
        %v2838 = vld [vmem:[%s2766 + $0x238] sm:$0xff]
        %v2839 = vld [vmem:[%s2766 + $0x240] sm:$0xff]
        %v2840 = vld [vmem:[%s2766 + $0x248] sm:$0xff]
        %v2841 = vld [vmem:[%s2766 + $0x250] sm:$0xff]
        %v2842 = vld [vmem:[%s2766 + $0x258] sm:$0xff]
        %v2843 = vld [vmem:[%s2766 + $0x260] sm:$0xff]
        %v2844 = vld [vmem:[%s2766 + $0x268] sm:$0xff]
        %v2845 = vld [vmem:[%s2766 + $0x270] sm:$0xff]
        %v2846 = vld [vmem:[%s2766 + $0x278] sm:$0xff]
        %v2847 = vld [vmem:[%s2766 + $0x280] sm:$0xff]
        %v2848 = vld [vmem:[%s2766 + $0x288] sm:$0xff]
        %v2849 = vld [vmem:[%s2766 + $0x290] sm:$0xff]
        %v2850 = vld [vmem:[%s2766 + $0x298] sm:$0xff]
        %v2851 = vld [vmem:[%s2766 + $0x2a0] sm:$0xff]
        %v2852 = vld [vmem:[%s2766 + $0x2a8] sm:$0xff]
        %v2853 = vld [vmem:[%s2766 + $0x2b0] sm:$0xff]
        %v2854 = vld [vmem:[%s2766 + $0x2b8] sm:$0xff]
        %v2855 = vld [vmem:[%s2766 + $0x2c0] sm:$0xff]
        %v2856 = vld [vmem:[%s2766 + $0x2c8] sm:$0xff]
        %v2857 = vld [vmem:[%s2766 + $0x2d0] sm:$0xff]
        %v2858 = vld [vmem:[%s2766 + $0x2d8] sm:$0xff]
        %v2859 = vld [vmem:[%s2766 + $0x2e0] sm:$0xff]
        %v2860 = vld [vmem:[%s2766 + $0x2e8] sm:$0xff]
        %v2861 = vld [vmem:[%s2766 + $0x2f0] sm:$0xff]
        %v2862 = vld [vmem:[%s2766 + $0x2f8] sm:$0xff]
        %v2959 = vunpack.c.l.b16 %v2767
        %v2960 = vunpack.c.h.b16 %v2767
        %v2961 = vunpack.c.l.b16 %v2768
        %v2962 = vunpack.c.h.b16 %v2768
        %v2963 = vunpack.c.l.b16 %v2769
        %v2964 = vunpack.c.h.b16 %v2769
        %v2965 = vunpack.c.l.b16 %v2770
        %v2966 = vunpack.c.h.b16 %v2770
        %v2967 = vunpack.c.l.b16 %v2771
        %v2968 = vunpack.c.h.b16 %v2771
        %v2969 = vunpack.c.l.b16 %v2772
        %v2970 = vunpack.c.h.b16 %v2772
        %v2971 = vunpack.c.l.b16 %v2773
        %v2972 = vunpack.c.h.b16 %v2773
        %v2973 = vunpack.c.l.b16 %v2774
        %v2974 = vunpack.c.h.b16 %v2774
        %v2975 = vunpack.c.l.b16 %v2775
        %v2976 = vunpack.c.h.b16 %v2775
        %v2977 = vunpack.c.l.b16 %v2776
        %v2978 = vunpack.c.h.b16 %v2776
        %v2979 = vunpack.c.l.b16 %v2777
        %v2980 = vunpack.c.h.b16 %v2777
        %v2981 = vunpack.c.l.b16 %v2778
        %v2982 = vunpack.c.h.b16 %v2778
        %v2983 = vunpack.c.l.b16 %v2779
        %v2984 = vunpack.c.h.b16 %v2779
        %v2985 = vunpack.c.l.b16 %v2780
        %v2986 = vunpack.c.h.b16 %v2780
        %v2987 = vunpack.c.l.b16 %v2781
        %v2988 = vunpack.c.h.b16 %v2781
        %v2989 = vunpack.c.l.b16 %v2782
        %v2990 = vunpack.c.h.b16 %v2782
        %v2991 = vunpack.c.l.b16 %v2783
        %v2992 = vunpack.c.h.b16 %v2783
        %v2993 = vunpack.c.l.b16 %v2784
        %v2994 = vunpack.c.h.b16 %v2784
        %v2995 = vunpack.c.l.b16 %v2785
        %v2996 = vunpack.c.h.b16 %v2785
        %v2997 = vunpack.c.l.b16 %v2786
        %v2998 = vunpack.c.h.b16 %v2786
        %v2999 = vunpack.c.l.b16 %v2787
        %v3000 = vunpack.c.h.b16 %v2787
        %v3001 = vunpack.c.l.b16 %v2788
        %v3002 = vunpack.c.h.b16 %v2788
        %v3003 = vunpack.c.l.b16 %v2789
        %v3004 = vunpack.c.h.b16 %v2789
        %v3005 = vunpack.c.l.b16 %v2790
        %v3006 = vunpack.c.h.b16 %v2790
        %v3007 = vunpack.c.l.b16 %v2791
        %v3008 = vunpack.c.h.b16 %v2791
        %v3009 = vunpack.c.l.b16 %v2792
        %v3010 = vunpack.c.h.b16 %v2792
        %v3011 = vunpack.c.l.b16 %v2793
        %v3012 = vunpack.c.h.b16 %v2793
        %v3013 = vunpack.c.l.b16 %v2794
        %v3014 = vunpack.c.h.b16 %v2794
        %v3015 = vunpack.c.l.b16 %v2795
        %v3016 = vunpack.c.h.b16 %v2795
        %v3017 = vunpack.c.l.b16 %v2796
        %v3018 = vunpack.c.h.b16 %v2796
        %v3019 = vunpack.c.l.b16 %v2797
        %v3020 = vunpack.c.h.b16 %v2797
        %v3021 = vunpack.c.l.b16 %v2798
        %v3022 = vunpack.c.h.b16 %v2798
        %v3023 = vunpack.c.l.b16 %v2799
        %v3024 = vunpack.c.h.b16 %v2799
        %v3025 = vunpack.c.l.b16 %v2800
        %v3026 = vunpack.c.h.b16 %v2800
        %v3027 = vunpack.c.l.b16 %v2801
        %v3028 = vunpack.c.h.b16 %v2801
        %v3029 = vunpack.c.l.b16 %v2802
        %v3030 = vunpack.c.h.b16 %v2802
        %v3031 = vunpack.c.l.b16 %v2803
        %v3032 = vunpack.c.h.b16 %v2803
        %v3033 = vunpack.c.l.b16 %v2804
        %v3034 = vunpack.c.h.b16 %v2804
        %v3035 = vunpack.c.l.b16 %v2805
        %v3036 = vunpack.c.h.b16 %v2805
        %v3037 = vunpack.c.l.b16 %v2806
        %v3038 = vunpack.c.h.b16 %v2806
        %v3039 = vunpack.c.l.b16 %v2807
        %v3040 = vunpack.c.h.b16 %v2807
        %v3041 = vunpack.c.l.b16 %v2808
        %v3042 = vunpack.c.h.b16 %v2808
        %v3043 = vunpack.c.l.b16 %v2809
        %v3044 = vunpack.c.h.b16 %v2809
        %v3045 = vunpack.c.l.b16 %v2810
        %v3046 = vunpack.c.h.b16 %v2810
        %v3047 = vunpack.c.l.b16 %v2811
        %v3048 = vunpack.c.h.b16 %v2811
        %v3049 = vunpack.c.l.b16 %v2812
        %v3050 = vunpack.c.h.b16 %v2812
        %v3051 = vunpack.c.l.b16 %v2813
        %v3052 = vunpack.c.h.b16 %v2813
        %v3053 = vunpack.c.l.b16 %v2814
        %v3054 = vunpack.c.h.b16 %v2814
        %v3055 = vunpack.c.l.b16 %v2815
        %v3056 = vunpack.c.h.b16 %v2815
        %v3057 = vunpack.c.l.b16 %v2816
        %v3058 = vunpack.c.h.b16 %v2816
        %v3059 = vunpack.c.l.b16 %v2817
        %v3060 = vunpack.c.h.b16 %v2817
        %v3061 = vunpack.c.l.b16 %v2818
        %v3062 = vunpack.c.h.b16 %v2818
        %v3063 = vunpack.c.l.b16 %v2819
        %v3064 = vunpack.c.h.b16 %v2819
        %v3065 = vunpack.c.l.b16 %v2820
        %v3066 = vunpack.c.h.b16 %v2820
        %v3067 = vunpack.c.l.b16 %v2821
        %v3068 = vunpack.c.h.b16 %v2821
        %v3069 = vunpack.c.l.b16 %v2822
        %v3070 = vunpack.c.h.b16 %v2822
        %v3071 = vunpack.c.l.b16 %v2823
        %v3072 = vunpack.c.h.b16 %v2823
        %v3073 = vunpack.c.l.b16 %v2824
        %v3074 = vunpack.c.h.b16 %v2824
        %v3075 = vunpack.c.l.b16 %v2825
        %v3076 = vunpack.c.h.b16 %v2825
        %v3077 = vunpack.c.l.b16 %v2826
        %v3078 = vunpack.c.h.b16 %v2826
        %v3079 = vunpack.c.l.b16 %v2827
        %v3080 = vunpack.c.h.b16 %v2827
        %v3081 = vunpack.c.l.b16 %v2828
        %v3082 = vunpack.c.h.b16 %v2828
        %v3083 = vunpack.c.l.b16 %v2829
        %v3084 = vunpack.c.h.b16 %v2829
        %v3085 = vunpack.c.l.b16 %v2830
        %v3086 = vunpack.c.h.b16 %v2830
        %v3087 = vunpack.c.l.b16 %v2831
        %v3088 = vunpack.c.h.b16 %v2831
        %v3089 = vunpack.c.l.b16 %v2832
        %v3090 = vunpack.c.h.b16 %v2832
        %v3091 = vunpack.c.l.b16 %v2833
        %v3092 = vunpack.c.h.b16 %v2833
        %v3093 = vunpack.c.l.b16 %v2834
        %v3094 = vunpack.c.h.b16 %v2834
        %v3095 = vunpack.c.l.b16 %v2835
        %v3096 = vunpack.c.h.b16 %v2835
        %v3097 = vunpack.c.l.b16 %v2836
        %v3098 = vunpack.c.h.b16 %v2836
        %v3099 = vunpack.c.l.b16 %v2837
        %v3100 = vunpack.c.h.b16 %v2837
        %v3101 = vunpack.c.l.b16 %v2838
        %v3102 = vunpack.c.h.b16 %v2838
        %v3103 = vunpack.c.l.b16 %v2839
        %v3104 = vunpack.c.h.b16 %v2839
        %v3105 = vunpack.c.l.b16 %v2840
        %v3106 = vunpack.c.h.b16 %v2840
        %v3107 = vunpack.c.l.b16 %v2841
        %v3108 = vunpack.c.h.b16 %v2841
        %v3109 = vunpack.c.l.b16 %v2842
        %v3110 = vunpack.c.h.b16 %v2842
        %v3111 = vunpack.c.l.b16 %v2843
        %v3112 = vunpack.c.h.b16 %v2843
        %v3113 = vunpack.c.l.b16 %v2844
        %v3114 = vunpack.c.h.b16 %v2844
        %v3115 = vunpack.c.l.b16 %v2845
        %v3116 = vunpack.c.h.b16 %v2845
        %v3117 = vunpack.c.l.b16 %v2846
        %v3118 = vunpack.c.h.b16 %v2846
        %v3119 = vunpack.c.l.b16 %v2847
        %v3120 = vunpack.c.h.b16 %v2847
        %v3121 = vunpack.c.l.b16 %v2848
        %v3122 = vunpack.c.h.b16 %v2848
        %v3123 = vunpack.c.l.b16 %v2849
        %v3124 = vunpack.c.h.b16 %v2849
        %v3125 = vunpack.c.l.b16 %v2850
        %v3126 = vunpack.c.h.b16 %v2850
        %v3127 = vunpack.c.l.b16 %v2851
        %v3128 = vunpack.c.h.b16 %v2851
        %v3129 = vunpack.c.l.b16 %v2852
        %v3130 = vunpack.c.h.b16 %v2852
        %v3131 = vunpack.c.l.b16 %v2853
        %v3132 = vunpack.c.h.b16 %v2853
        %v3133 = vunpack.c.l.b16 %v2854
        %v3134 = vunpack.c.h.b16 %v2854
        %v3135 = vunpack.c.l.b16 %v2855
        %v3136 = vunpack.c.h.b16 %v2855
        %v3137 = vunpack.c.l.b16 %v2856
        %v3138 = vunpack.c.h.b16 %v2856
        %v3139 = vunpack.c.l.b16 %v2857
        %v3140 = vunpack.c.h.b16 %v2857
        %v3141 = vunpack.c.l.b16 %v2858
        %v3142 = vunpack.c.h.b16 %v2858
        %v3143 = vunpack.c.l.b16 %v2859
        %v3144 = vunpack.c.h.b16 %v2859
        %v3145 = vunpack.c.l.b16 %v2860
        %v3146 = vunpack.c.h.b16 %v2860
        %v3147 = vunpack.c.l.b16 %v2861
        %v3148 = vunpack.c.h.b16 %v2861
        %v3149 = vunpack.c.l.b16 %v2862
        %v3150 = vunpack.c.h.b16 %v2862
        %v3151 = vpack.c.b16 %v2961, %v2959
        %v3152 = vpack.c.b16 %v2962, %v2960
        %v3153 = vpack.c.b16 %v2965, %v2963
        %v3154 = vpack.c.b16 %v2966, %v2964
        %v3155 = vpack.c.b16 %v2969, %v2967
        %v3156 = vpack.c.b16 %v2970, %v2968
        %v3157 = vpack.c.b16 %v2973, %v2971
        %v3158 = vpack.c.b16 %v2974, %v2972
        %v3159 = vpack.c.b16 %v2977, %v2975
        %v3160 = vpack.c.b16 %v2978, %v2976
        %v3161 = vpack.c.b16 %v2981, %v2979
        %v3162 = vpack.c.b16 %v2982, %v2980
        %v3163 = vpack.c.b16 %v2985, %v2983
        %v3164 = vpack.c.b16 %v2986, %v2984
        %v3165 = vpack.c.b16 %v2989, %v2987
        %v3166 = vpack.c.b16 %v2990, %v2988
        %v3167 = vpack.c.b16 %v2993, %v2991
        %v3168 = vpack.c.b16 %v2994, %v2992
        %v3169 = vpack.c.b16 %v2997, %v2995
        %v3170 = vpack.c.b16 %v2998, %v2996
        %v3171 = vpack.c.b16 %v3001, %v2999
        %v3172 = vpack.c.b16 %v3002, %v3000
        %v3173 = vpack.c.b16 %v3005, %v3003
        %v3174 = vpack.c.b16 %v3006, %v3004
        %v3175 = vpack.c.b16 %v3009, %v3007
        %v3176 = vpack.c.b16 %v3010, %v3008
        %v3177 = vpack.c.b16 %v3013, %v3011
        %v3178 = vpack.c.b16 %v3014, %v3012
        %v3179 = vpack.c.b16 %v3017, %v3015
        %v3180 = vpack.c.b16 %v3018, %v3016
        %v3181 = vpack.c.b16 %v3021, %v3019
        %v3182 = vpack.c.b16 %v3022, %v3020
        %v3183 = vpack.c.b16 %v3025, %v3023
        %v3184 = vpack.c.b16 %v3026, %v3024
        %v3185 = vpack.c.b16 %v3029, %v3027
        %v3186 = vpack.c.b16 %v3030, %v3028
        %v3187 = vpack.c.b16 %v3033, %v3031
        %v3188 = vpack.c.b16 %v3034, %v3032
        %v3189 = vpack.c.b16 %v3037, %v3035
        %v3190 = vpack.c.b16 %v3038, %v3036
        %v3191 = vpack.c.b16 %v3041, %v3039
        %v3192 = vpack.c.b16 %v3042, %v3040
        %v3193 = vpack.c.b16 %v3045, %v3043
        %v3194 = vpack.c.b16 %v3046, %v3044
        %v3195 = vpack.c.b16 %v3049, %v3047
        %v3196 = vpack.c.b16 %v3050, %v3048
        %v3197 = vpack.c.b16 %v3053, %v3051
        %v3198 = vpack.c.b16 %v3054, %v3052
        %v3199 = vpack.c.b16 %v3057, %v3055
        %v3200 = vpack.c.b16 %v3058, %v3056
        %v3201 = vpack.c.b16 %v3061, %v3059
        %v3202 = vpack.c.b16 %v3062, %v3060
        %v3203 = vpack.c.b16 %v3065, %v3063
        %v3204 = vpack.c.b16 %v3066, %v3064
        %v3205 = vpack.c.b16 %v3069, %v3067
        %v3206 = vpack.c.b16 %v3070, %v3068
        %v3207 = vpack.c.b16 %v3073, %v3071
        %v3208 = vpack.c.b16 %v3074, %v3072
        %v3209 = vpack.c.b16 %v3077, %v3075
        %v3210 = vpack.c.b16 %v3078, %v3076
        %v3211 = vpack.c.b16 %v3081, %v3079
        %v3212 = vpack.c.b16 %v3082, %v3080
        %v3213 = vpack.c.b16 %v3085, %v3083
        %v3214 = vpack.c.b16 %v3086, %v3084
        %v3215 = vpack.c.b16 %v3089, %v3087
        %v3216 = vpack.c.b16 %v3090, %v3088
        %v3217 = vpack.c.b16 %v3093, %v3091
        %v3218 = vpack.c.b16 %v3094, %v3092
        %v3219 = vpack.c.b16 %v3097, %v3095
        %v3220 = vpack.c.b16 %v3098, %v3096
        %v3221 = vpack.c.b16 %v3101, %v3099
        %v3222 = vpack.c.b16 %v3102, %v3100
        %v3223 = vpack.c.b16 %v3105, %v3103
        %v3224 = vpack.c.b16 %v3106, %v3104
        %v3225 = vpack.c.b16 %v3109, %v3107
        %v3226 = vpack.c.b16 %v3110, %v3108
        %v3227 = vpack.c.b16 %v3113, %v3111
        %v3228 = vpack.c.b16 %v3114, %v3112
        %v3229 = vpack.c.b16 %v3117, %v3115
        %v3230 = vpack.c.b16 %v3118, %v3116
        %v3231 = vpack.c.b16 %v3121, %v3119
        %v3232 = vpack.c.b16 %v3122, %v3120
        %v3233 = vpack.c.b16 %v3125, %v3123
        %v3234 = vpack.c.b16 %v3126, %v3124
        %v3235 = vpack.c.b16 %v3129, %v3127
        %v3236 = vpack.c.b16 %v3130, %v3128
        %v3237 = vpack.c.b16 %v3133, %v3131
        %v3238 = vpack.c.b16 %v3134, %v3132
        %v3239 = vpack.c.b16 %v3137, %v3135
        %v3240 = vpack.c.b16 %v3138, %v3136
        %v3241 = vpack.c.b16 %v3141, %v3139
        %v3242 = vpack.c.b16 %v3142, %v3140
        %v3243 = vpack.c.b16 %v3145, %v3143
        %v3244 = vpack.c.b16 %v3146, %v3144
        %v3245 = vpack.c.b16 %v3149, %v3147
        %v3246 = vpack.c.b16 %v3150, %v3148
        %3343 = vmatprep.subr.bf16.mxu0 %v3152
        %3344 = vmatpush1.bf16.msra.mxu0 %v3151
        %3345 = vmatprep.subr.bf16.mxu0 %v3154
        %3346 = vmatpush1.bf16.msra.mxu0 %v3153
        %3347 = vmatprep.subr.bf16.mxu0 %v3156
        %3348 = vmatpush1.bf16.msra.mxu0 %v3155
        %3349 = vmatprep.subr.bf16.mxu0 %v3158
        %3350 = vmatpush1.bf16.msra.mxu0 %v3157
        %3351 = vmatprep.subr.bf16.mxu0 %v3160
        %3352 = vmatpush1.bf16.msra.mxu0 %v3159
        %3353 = vmatprep.subr.bf16.mxu0 %v3162
        %3354 = vmatpush1.bf16.msra.mxu0 %v3161
        %3355 = vmatprep.subr.bf16.mxu0 %v3164
        %3356 = vmatpush1.bf16.msra.mxu0 %v3163
        %3357 = vmatprep.subr.bf16.mxu0 %v3166
        %3358 = vmatpush1.bf16.msra.mxu0 %v3165
        %3359 = vmatprep.subr.bf16.mxu0 %v3168
        %3360 = vmatpush1.bf16.msra.mxu0 %v3167
        %3361 = vmatprep.subr.bf16.mxu0 %v3170
        %3362 = vmatpush1.bf16.msra.mxu0 %v3169
        %3363 = vmatprep.subr.bf16.mxu0 %v3172
        %3364 = vmatpush1.bf16.msra.mxu0 %v3171
        %3365 = vmatprep.subr.bf16.mxu0 %v3174
        %3366 = vmatpush1.bf16.msra.mxu0 %v3173
        %3367 = vmatprep.subr.bf16.mxu0 %v3176
        %3368 = vmatpush1.bf16.msra.mxu0 %v3175
        %3369 = vmatprep.subr.bf16.mxu0 %v3178
        %3370 = vmatpush1.bf16.msra.mxu0 %v3177
        %3371 = vmatprep.subr.bf16.mxu0 %v3180
        %3372 = vmatpush1.bf16.msra.mxu0 %v3179
        %3373 = vmatprep.subr.bf16.mxu0 %v3182
        %3374 = vmatpush1.bf16.msra.mxu0 %v3181
        %3375 = vmatprep.mubr.bf16.mxu0 %v2671
        %3376 = vmatmul.mubr.bf16.gmra.mrb[0].mxu0 %v2670
        %v3377 = vpop.f32.mrb[0].mxu0
        %v3378 = vadd.f32 0.0, %v3377
        %v3379 = vpop.f32.mrb[0].mxu0
        %v3380 = vadd.f32 0.0, %v3379
        %v3381 = vpop.f32.mrb[0].mxu0
        %v3382 = vadd.f32 0.0, %v3381
        %v3383 = vpop.f32.mrb[0].mxu0
        %v3384 = vadd.f32 0.0, %v3383
        %3385 = vmatprep.mubr.bf16.mxu0 %v2677
        %3386 = vmatmul.mubr.bf16.gmra.mrb[0].mxu0 %v2676
        %v3387 = vpop.f32.mrb[0].mxu0
        %v3388 = vadd.f32 0.0, %v3387
        %v3389 = vpop.f32.mrb[0].mxu0
        %v3390 = vadd.f32 0.0, %v3389
        %v3391 = vpop.f32.mrb[0].mxu0
        %v3392 = vadd.f32 0.0, %v3391
        %v3393 = vpop.f32.mrb[0].mxu0
        %v3394 = vadd.f32 0.0, %v3393
        %3395 = vmatprep.mubr.bf16.mxu0 %v2683
        %3396 = vmatmul.mubr.bf16.gmra.mrb[0].mxu0 %v2682
        %v3397 = vpop.f32.mrb[0].mxu0
        %v3398 = vadd.f32 0.0, %v3397
        %v3399 = vpop.f32.mrb[0].mxu0
        %v3400 = vadd.f32 0.0, %v3399
        %v3401 = vpop.f32.mrb[0].mxu0
        %v3402 = vadd.f32 0.0, %v3401
        %v3403 = vpop.f32.mrb[0].mxu0
        %v3404 = vadd.f32 0.0, %v3403
        %3405 = vmatprep.mubr.bf16.mxu0 %v2689
        %3406 = vmatmul.mubr.bf16.gmra.mrb[0].mxu0 %v2688
        %v3407 = vpop.f32.mrb[0].mxu0
        %v3408 = vadd.f32 0.0, %v3407
        %v3409 = vpop.f32.mrb[0].mxu0
        %v3410 = vadd.f32 0.0, %v3409
        %v3411 = vpop.f32.mrb[0].mxu0
        %v3412 = vadd.f32 0.0, %v3411
        %v3413 = vpop.f32.mrb[0].mxu0
        %v3414 = vadd.f32 0.0, %v3413
        %3415 = vmatprep.mubr.bf16.mxu0 %v2695
        %3416 = vmatmul.mubr.bf16.gmra.mrb[0].mxu0 %v2694
        %v3417 = vpop.f32.mrb[0].mxu0
        %v3418 = vadd.f32 0.0, %v3417
        %v3419 = vpop.f32.mrb[0].mxu0
        %v3420 = vadd.f32 0.0, %v3419
        %v3421 = vpop.f32.mrb[0].mxu0
        %v3422 = vadd.f32 0.0, %v3421
        %v3423 = vpop.f32.mrb[0].mxu0
        %v3424 = vadd.f32 0.0, %v3423
        %3425 = vmatprep.mubr.bf16.mxu0 %v2701
        %3426 = vmatmul.mubr.bf16.gmra.mrb[0].mxu0 %v2700
        %v3427 = vpop.f32.mrb[0].mxu0
        %v3428 = vadd.f32 0.0, %v3427
        %v3429 = vpop.f32.mrb[0].mxu0
        %v3430 = vadd.f32 0.0, %v3429
        %v3431 = vpop.f32.mrb[0].mxu0
        %v3432 = vadd.f32 0.0, %v3431
        %v3433 = vpop.f32.mrb[0].mxu0
        %v3434 = vadd.f32 0.0, %v3433
        %3435 = vmatprep.mubr.bf16.mxu0 %v2707
        %3436 = vmatmul.mubr.bf16.gmra.mrb[0].mxu0 %v2706
        %v3437 = vpop.f32.mrb[0].mxu0
        %v3438 = vadd.f32 0.0, %v3437
        %v3439 = vpop.f32.mrb[0].mxu0
        %v3440 = vadd.f32 0.0, %v3439
        %v3441 = vpop.f32.mrb[0].mxu0
        %v3442 = vadd.f32 0.0, %v3441
        %v3443 = vpop.f32.mrb[0].mxu0
        %v3444 = vadd.f32 0.0, %v3443
        %3445 = vmatprep.mubr.bf16.mxu0 %v2713
        %3446 = vmatmul.mubr.bf16.gmra.mrb[0].mxu0 %v2712
        %v3447 = vpop.f32.mrb[0].mxu0
        %v3448 = vadd.f32 0.0, %v3447
        %v3449 = vpop.f32.mrb[0].mxu0
        %v3450 = vadd.f32 0.0, %v3449
        %v3451 = vpop.f32.mrb[0].mxu0
        %v3452 = vadd.f32 0.0, %v3451
        %v3453 = vpop.f32.mrb[0].mxu0
        %v3454 = vadd.f32 0.0, %v3453
        %3455 = vmatprep.mubr.bf16.mxu0 %v2719
        %3456 = vmatmul.mubr.bf16.gmra.mrb[0].mxu0 %v2718
        %v3457 = vpop.f32.mrb[0].mxu0
        %v3458 = vadd.f32 0.0, %v3457
        %v3459 = vpop.f32.mrb[0].mxu0
        %v3460 = vadd.f32 0.0, %v3459
        %v3461 = vpop.f32.mrb[0].mxu0
        %v3462 = vadd.f32 0.0, %v3461
        %v3463 = vpop.f32.mrb[0].mxu0
        %v3464 = vadd.f32 0.0, %v3463
        %3465 = vmatprep.mubr.bf16.mxu0 %v2725
        %3466 = vmatmul.mubr.bf16.gmra.mrb[0].mxu0 %v2724
        %v3467 = vpop.f32.mrb[0].mxu0
        %v3468 = vadd.f32 0.0, %v3467
        %v3469 = vpop.f32.mrb[0].mxu0
        %v3470 = vadd.f32 0.0, %v3469
        %v3471 = vpop.f32.mrb[0].mxu0
        %v3472 = vadd.f32 0.0, %v3471
        %v3473 = vpop.f32.mrb[0].mxu0
        %v3474 = vadd.f32 0.0, %v3473
        %3475 = vmatprep.mubr.bf16.mxu0 %v2731
        %3476 = vmatmul.mubr.bf16.gmra.mrb[0].mxu0 %v2730
        %v3477 = vpop.f32.mrb[0].mxu0
        %v3478 = vadd.f32 0.0, %v3477
        %v3479 = vpop.f32.mrb[0].mxu0
        %v3480 = vadd.f32 0.0, %v3479
        %v3481 = vpop.f32.mrb[0].mxu0
        %v3482 = vadd.f32 0.0, %v3481
        %v3483 = vpop.f32.mrb[0].mxu0
        %v3484 = vadd.f32 0.0, %v3483
        %3485 = vmatprep.mubr.bf16.mxu0 %v2737
        %3486 = vmatmul.mubr.bf16.gmra.mrb[0].mxu0 %v2736
        %v3487 = vpop.f32.mrb[0].mxu0
        %v3488 = vadd.f32 0.0, %v3487
        %v3489 = vpop.f32.mrb[0].mxu0
        %v3490 = vadd.f32 0.0, %v3489
        %v3491 = vpop.f32.mrb[0].mxu0
        %v3492 = vadd.f32 0.0, %v3491
        %v3493 = vpop.f32.mrb[0].mxu0
        %v3494 = vadd.f32 0.0, %v3493
        %3495 = vmatprep.mubr.bf16.mxu0 %v2743
        %3496 = vmatmul.mubr.bf16.gmra.mrb[0].mxu0 %v2742
        %v3497 = vpop.f32.mrb[0].mxu0
        %v3498 = vadd.f32 0.0, %v3497
        %v3499 = vpop.f32.mrb[0].mxu0
        %v3500 = vadd.f32 0.0, %v3499
        %v3501 = vpop.f32.mrb[0].mxu0
        %v3502 = vadd.f32 0.0, %v3501
        %v3503 = vpop.f32.mrb[0].mxu0
        %v3504 = vadd.f32 0.0, %v3503
        %3505 = vmatprep.mubr.bf16.mxu0 %v2749
        %3506 = vmatmul.mubr.bf16.gmra.mrb[0].mxu0 %v2748
        %v3507 = vpop.f32.mrb[0].mxu0
        %v3508 = vadd.f32 0.0, %v3507
        %v3509 = vpop.f32.mrb[0].mxu0
        %v3510 = vadd.f32 0.0, %v3509
        %v3511 = vpop.f32.mrb[0].mxu0
        %v3512 = vadd.f32 0.0, %v3511
        %v3513 = vpop.f32.mrb[0].mxu0
        %v3514 = vadd.f32 0.0, %v3513
        %3515 = vmatprep.mubr.bf16.mxu0 %v2755
        %3516 = vmatmul.mubr.bf16.gmra.mrb[0].mxu0 %v2754
        %v3517 = vpop.f32.mrb[0].mxu0
        %v3518 = vadd.f32 0.0, %v3517
        %v3519 = vpop.f32.mrb[0].mxu0
        %v3520 = vadd.f32 0.0, %v3519
        %v3521 = vpop.f32.mrb[0].mxu0
        %v3522 = vadd.f32 0.0, %v3521
        %v3523 = vpop.f32.mrb[0].mxu0
        %v3524 = vadd.f32 0.0, %v3523
        %3525 = vmatprep.mubr.bf16.mxu0 %v2761
        %3526 = vmatmul.mubr.bf16.gmra.mrb[0].mxu0 %v2760
        %v3527 = vpop.f32.mrb[0].mxu0
        %v3528 = vadd.f32 0.0, %v3527
        %v3529 = vpop.f32.mrb[0].mxu0
        %v3530 = vadd.f32 0.0, %v3529
        %v3531 = vpop.f32.mrb[0].mxu0
        %v3532 = vadd.f32 0.0, %v3531
        %v3533 = vpop.f32.mrb[0].mxu0
        %v3534 = vadd.f32 0.0, %v3533
        %3535 = vdwg.mxu0
        %3536 = vmatprep.subr.bf16.mxu0 %v3184
        %3537 = vmatpush1.bf16.msra.mxu0 %v3183
        %3538 = vmatprep.subr.bf16.mxu0 %v3186
        %3539 = vmatpush1.bf16.msra.mxu0 %v3185
        %3540 = vmatprep.subr.bf16.mxu0 %v3188
        %3541 = vmatpush1.bf16.msra.mxu0 %v3187
        %3542 = vmatprep.subr.bf16.mxu0 %v3190
        %3543 = vmatpush1.bf16.msra.mxu0 %v3189
        %3544 = vmatprep.subr.bf16.mxu0 %v3192
        %3545 = vmatpush1.bf16.msra.mxu0 %v3191
        %3546 = vmatprep.subr.bf16.mxu0 %v3194
        %3547 = vmatpush1.bf16.msra.mxu0 %v3193
        %3548 = vmatprep.subr.bf16.mxu0 %v3196
        %3549 = vmatpush1.bf16.msra.mxu0 %v3195
        %3550 = vmatprep.subr.bf16.mxu0 %v3198
        %3551 = vmatpush1.bf16.msra.mxu0 %v3197
        %3552 = vmatprep.subr.bf16.mxu0 %v3200
        %3553 = vmatpush1.bf16.msra.mxu0 %v3199
        %3554 = vmatprep.subr.bf16.mxu0 %v3202
        %3555 = vmatpush1.bf16.msra.mxu0 %v3201
        %3556 = vmatprep.subr.bf16.mxu0 %v3204
        %3557 = vmatpush1.bf16.msra.mxu0 %v3203
        %3558 = vmatprep.subr.bf16.mxu0 %v3206
        %3559 = vmatpush1.bf16.msra.mxu0 %v3205
        %3560 = vmatprep.subr.bf16.mxu0 %v3208
        %3561 = vmatpush1.bf16.msra.mxu0 %v3207
        %3562 = vmatprep.subr.bf16.mxu0 %v3210
        %3563 = vmatpush1.bf16.msra.mxu0 %v3209
        %3564 = vmatprep.subr.bf16.mxu0 %v3212
        %3565 = vmatpush1.bf16.msra.mxu0 %v3211
        %3566 = vmatprep.subr.bf16.mxu0 %v3214
        %3567 = vmatpush1.bf16.msra.mxu0 %v3213
        %3568 = vmatprep.mubr.bf16.mxu0 %v2673
        %3569 = vmatmul.mubr.bf16.gmra.mrb[0].mxu0 %v2672
        %v3570 = vpop.f32.mrb[0].mxu0
        %v3571 = vadd.f32 %v3378, %v3570
        %v3572 = vpop.f32.mrb[0].mxu0
        %v3573 = vadd.f32 %v3380, %v3572
        %v3574 = vpop.f32.mrb[0].mxu0
        %v3575 = vadd.f32 %v3382, %v3574
        %v3576 = vpop.f32.mrb[0].mxu0
        %v3577 = vadd.f32 %v3384, %v3576
        %3578 = vmatprep.mubr.bf16.mxu0 %v2679
        %3579 = vmatmul.mubr.bf16.gmra.mrb[0].mxu0 %v2678
        %v3580 = vpop.f32.mrb[0].mxu0
        %v3581 = vadd.f32 %v3388, %v3580
        %v3582 = vpop.f32.mrb[0].mxu0
        %v3583 = vadd.f32 %v3390, %v3582
        %v3584 = vpop.f32.mrb[0].mxu0
        %v3585 = vadd.f32 %v3392, %v3584
        %v3586 = vpop.f32.mrb[0].mxu0
        %v3587 = vadd.f32 %v3394, %v3586
        %3588 = vmatprep.mubr.bf16.mxu0 %v2685
        %3589 = vmatmul.mubr.bf16.gmra.mrb[0].mxu0 %v2684
        %v3590 = vpop.f32.mrb[0].mxu0
        %v3591 = vadd.f32 %v3398, %v3590
        %v3592 = vpop.f32.mrb[0].mxu0
        %v3593 = vadd.f32 %v3400, %v3592
        %v3594 = vpop.f32.mrb[0].mxu0
        %v3595 = vadd.f32 %v3402, %v3594
        %v3596 = vpop.f32.mrb[0].mxu0
        %v3597 = vadd.f32 %v3404, %v3596
        %3598 = vmatprep.mubr.bf16.mxu0 %v2691
        %3599 = vmatmul.mubr.bf16.gmra.mrb[0].mxu0 %v2690
        %v3600 = vpop.f32.mrb[0].mxu0
        %v3601 = vadd.f32 %v3408, %v3600
        %v3602 = vpop.f32.mrb[0].mxu0
        %v3603 = vadd.f32 %v3410, %v3602
        %v3604 = vpop.f32.mrb[0].mxu0
        %v3605 = vadd.f32 %v3412, %v3604
        %v3606 = vpop.f32.mrb[0].mxu0
        %v3607 = vadd.f32 %v3414, %v3606
        %3608 = vmatprep.mubr.bf16.mxu0 %v2697
        %3609 = vmatmul.mubr.bf16.gmra.mrb[0].mxu0 %v2696
        %v3610 = vpop.f32.mrb[0].mxu0
        %v3611 = vadd.f32 %v3418, %v3610
        %v3612 = vpop.f32.mrb[0].mxu0
        %v3613 = vadd.f32 %v3420, %v3612
        %v3614 = vpop.f32.mrb[0].mxu0
        %v3615 = vadd.f32 %v3422, %v3614
        %v3616 = vpop.f32.mrb[0].mxu0
        %v3617 = vadd.f32 %v3424, %v3616
        %3618 = vmatprep.mubr.bf16.mxu0 %v2703
        %3619 = vmatmul.mubr.bf16.gmra.mrb[0].mxu0 %v2702
        %v3620 = vpop.f32.mrb[0].mxu0
        %v3621 = vadd.f32 %v3428, %v3620
        %v3622 = vpop.f32.mrb[0].mxu0
        %v3623 = vadd.f32 %v3430, %v3622
        %v3624 = vpop.f32.mrb[0].mxu0
        %v3625 = vadd.f32 %v3432, %v3624
        %v3626 = vpop.f32.mrb[0].mxu0
        %v3627 = vadd.f32 %v3434, %v3626
        %3628 = vmatprep.mubr.bf16.mxu0 %v2709
        %3629 = vmatmul.mubr.bf16.gmra.mrb[0].mxu0 %v2708
        %v3630 = vpop.f32.mrb[0].mxu0
        %v3631 = vadd.f32 %v3438, %v3630
        %v3632 = vpop.f32.mrb[0].mxu0
        %v3633 = vadd.f32 %v3440, %v3632
        %v3634 = vpop.f32.mrb[0].mxu0
        %v3635 = vadd.f32 %v3442, %v3634
        %v3636 = vpop.f32.mrb[0].mxu0
        %v3637 = vadd.f32 %v3444, %v3636
        %3638 = vmatprep.mubr.bf16.mxu0 %v2715
        %3639 = vmatmul.mubr.bf16.gmra.mrb[0].mxu0 %v2714
        %v3640 = vpop.f32.mrb[0].mxu0
        %v3641 = vadd.f32 %v3448, %v3640
        %v3642 = vpop.f32.mrb[0].mxu0
        %v3643 = vadd.f32 %v3450, %v3642
        %v3644 = vpop.f32.mrb[0].mxu0
        %v3645 = vadd.f32 %v3452, %v3644
        %v3646 = vpop.f32.mrb[0].mxu0
        %v3647 = vadd.f32 %v3454, %v3646
        %3648 = vmatprep.mubr.bf16.mxu0 %v2721
        %3649 = vmatmul.mubr.bf16.gmra.mrb[0].mxu0 %v2720
        %v3650 = vpop.f32.mrb[0].mxu0
        %v3651 = vadd.f32 %v3458, %v3650
        %v3652 = vpop.f32.mrb[0].mxu0
        %v3653 = vadd.f32 %v3460, %v3652
        %v3654 = vpop.f32.mrb[0].mxu0
        %v3655 = vadd.f32 %v3462, %v3654
        %v3656 = vpop.f32.mrb[0].mxu0
        %v3657 = vadd.f32 %v3464, %v3656
        %3658 = vmatprep.mubr.bf16.mxu0 %v2727
        %3659 = vmatmul.mubr.bf16.gmra.mrb[0].mxu0 %v2726
        %v3660 = vpop.f32.mrb[0].mxu0
        %v3661 = vadd.f32 %v3468, %v3660
        %v3662 = vpop.f32.mrb[0].mxu0
        %v3663 = vadd.f32 %v3470, %v3662
        %v3664 = vpop.f32.mrb[0].mxu0
        %v3665 = vadd.f32 %v3472, %v3664
        %v3666 = vpop.f32.mrb[0].mxu0
        %v3667 = vadd.f32 %v3474, %v3666
        %3668 = vmatprep.mubr.bf16.mxu0 %v2733
        %3669 = vmatmul.mubr.bf16.gmra.mrb[0].mxu0 %v2732
        %v3670 = vpop.f32.mrb[0].mxu0
        %v3671 = vadd.f32 %v3478, %v3670
        %v3672 = vpop.f32.mrb[0].mxu0
        %v3673 = vadd.f32 %v3480, %v3672
        %v3674 = vpop.f32.mrb[0].mxu0
        %v3675 = vadd.f32 %v3482, %v3674
        %v3676 = vpop.f32.mrb[0].mxu0
        %v3677 = vadd.f32 %v3484, %v3676
        %3678 = vmatprep.mubr.bf16.mxu0 %v2739
        %3679 = vmatmul.mubr.bf16.gmra.mrb[0].mxu0 %v2738
        %v3680 = vpop.f32.mrb[0].mxu0
        %v3681 = vadd.f32 %v3488, %v3680
        %v3682 = vpop.f32.mrb[0].mxu0
        %v3683 = vadd.f32 %v3490, %v3682
        %v3684 = vpop.f32.mrb[0].mxu0
        %v3685 = vadd.f32 %v3492, %v3684
        %v3686 = vpop.f32.mrb[0].mxu0
        %v3687 = vadd.f32 %v3494, %v3686
        %3688 = vmatprep.mubr.bf16.mxu0 %v2745
        %3689 = vmatmul.mubr.bf16.gmra.mrb[0].mxu0 %v2744
        %v3690 = vpop.f32.mrb[0].mxu0
        %v3691 = vadd.f32 %v3498, %v3690
        %v3692 = vpop.f32.mrb[0].mxu0
        %v3693 = vadd.f32 %v3500, %v3692
        %v3694 = vpop.f32.mrb[0].mxu0
        %v3695 = vadd.f32 %v3502, %v3694
        %v3696 = vpop.f32.mrb[0].mxu0
        %v3697 = vadd.f32 %v3504, %v3696
        %3698 = vmatprep.mubr.bf16.mxu0 %v2751
        %3699 = vmatmul.mubr.bf16.gmra.mrb[0].mxu0 %v2750
        %v3700 = vpop.f32.mrb[0].mxu0
        %v3701 = vadd.f32 %v3508, %v3700
        %v3702 = vpop.f32.mrb[0].mxu0
        %v3703 = vadd.f32 %v3510, %v3702
        %v3704 = vpop.f32.mrb[0].mxu0
        %v3705 = vadd.f32 %v3512, %v3704
        %v3706 = vpop.f32.mrb[0].mxu0
        %v3707 = vadd.f32 %v3514, %v3706
        %3708 = vmatprep.mubr.bf16.mxu0 %v2757
        %3709 = vmatmul.mubr.bf16.gmra.mrb[0].mxu0 %v2756
        %v3710 = vpop.f32.mrb[0].mxu0
        %v3711 = vadd.f32 %v3518, %v3710
        %v3712 = vpop.f32.mrb[0].mxu0
        %v3713 = vadd.f32 %v3520, %v3712
        %v3714 = vpop.f32.mrb[0].mxu0
        %v3715 = vadd.f32 %v3522, %v3714
        %v3716 = vpop.f32.mrb[0].mxu0
        %v3717 = vadd.f32 %v3524, %v3716
        %3718 = vmatprep.mubr.bf16.mxu0 %v2763
        %3719 = vmatmul.mubr.bf16.gmra.mrb[0].mxu0 %v2762
        %v3720 = vpop.f32.mrb[0].mxu0
        %v3721 = vadd.f32 %v3528, %v3720
        %v3722 = vpop.f32.mrb[0].mxu0
        %v3723 = vadd.f32 %v3530, %v3722
        %v3724 = vpop.f32.mrb[0].mxu0
        %v3725 = vadd.f32 %v3532, %v3724
        %v3726 = vpop.f32.mrb[0].mxu0
        %v3727 = vadd.f32 %v3534, %v3726
        %3728 = vdwg.mxu0
        %3729 = vmatprep.subr.bf16.mxu0 %v3216
        %3730 = vmatpush1.bf16.msra.mxu0 %v3215
        %3731 = vmatprep.subr.bf16.mxu0 %v3218
        %3732 = vmatpush1.bf16.msra.mxu0 %v3217
        %3733 = vmatprep.subr.bf16.mxu0 %v3220
        %3734 = vmatpush1.bf16.msra.mxu0 %v3219
        %3735 = vmatprep.subr.bf16.mxu0 %v3222
        %3736 = vmatpush1.bf16.msra.mxu0 %v3221
        %3737 = vmatprep.subr.bf16.mxu0 %v3224
        %3738 = vmatpush1.bf16.msra.mxu0 %v3223
        %3739 = vmatprep.subr.bf16.mxu0 %v3226
        %3740 = vmatpush1.bf16.msra.mxu0 %v3225
        %3741 = vmatprep.subr.bf16.mxu0 %v3228
        %3742 = vmatpush1.bf16.msra.mxu0 %v3227
        %3743 = vmatprep.subr.bf16.mxu0 %v3230
        %3744 = vmatpush1.bf16.msra.mxu0 %v3229
        %3745 = vmatprep.subr.bf16.mxu0 %v3232
        %3746 = vmatpush1.bf16.msra.mxu0 %v3231
        %3747 = vmatprep.subr.bf16.mxu0 %v3234
        %3748 = vmatpush1.bf16.msra.mxu0 %v3233
        %3749 = vmatprep.subr.bf16.mxu0 %v3236
        %3750 = vmatpush1.bf16.msra.mxu0 %v3235
        %3751 = vmatprep.subr.bf16.mxu0 %v3238
        %3752 = vmatpush1.bf16.msra.mxu0 %v3237
        %3753 = vmatprep.subr.bf16.mxu0 %v3240
        %3754 = vmatpush1.bf16.msra.mxu0 %v3239
        %3755 = vmatprep.subr.bf16.mxu0 %v3242
        %3756 = vmatpush1.bf16.msra.mxu0 %v3241
        %3757 = vmatprep.subr.bf16.mxu0 %v3244
        %3758 = vmatpush1.bf16.msra.mxu0 %v3243
        %3759 = vmatprep.subr.bf16.mxu0 %v3246
        %3760 = vmatpush1.bf16.msra.mxu0 %v3245
        %3761 = vmatprep.mubr.bf16.mxu0 %v2675
        %3762 = vmatmul.mubr.bf16.gmra.mrb[0].mxu0 %v2674
        %v3763 = vpop.f32.mrb[0].mxu0
        %v3764 = vadd.f32 %v3571, %v3763
        %v3765 = vpop.f32.mrb[0].mxu0
        %v3766 = vadd.f32 %v3573, %v3765
        %v3767 = vpop.f32.mrb[0].mxu0
        %v3768 = vadd.f32 %v3575, %v3767
        %v3769 = vpop.f32.mrb[0].mxu0
        %v3770 = vadd.f32 %v3577, %v3769
        %3771 = vmatprep.mubr.bf16.mxu0 %v2681
        %3772 = vmatmul.mubr.bf16.gmra.mrb[0].mxu0 %v2680
        %v3773 = vpop.f32.mrb[0].mxu0
        %v3774 = vadd.f32 %v3581, %v3773
        %v3775 = vpop.f32.mrb[0].mxu0
        %v3776 = vadd.f32 %v3583, %v3775
        %v3777 = vpop.f32.mrb[0].mxu0
        %v3778 = vadd.f32 %v3585, %v3777
        %v3779 = vpop.f32.mrb[0].mxu0
        %v3780 = vadd.f32 %v3587, %v3779
        %3781 = vmatprep.mubr.bf16.mxu0 %v2687
        %3782 = vmatmul.mubr.bf16.gmra.mrb[0].mxu0 %v2686
        %v3783 = vpop.f32.mrb[0].mxu0
        %v3784 = vadd.f32 %v3591, %v3783
        %v3785 = vpop.f32.mrb[0].mxu0
        %v3786 = vadd.f32 %v3593, %v3785
        %v3787 = vpop.f32.mrb[0].mxu0
        %v3788 = vadd.f32 %v3595, %v3787
        %v3789 = vpop.f32.mrb[0].mxu0
        %v3790 = vadd.f32 %v3597, %v3789
        %3791 = vmatprep.mubr.bf16.mxu0 %v2693
        %3792 = vmatmul.mubr.bf16.gmra.mrb[0].mxu0 %v2692
        %v3793 = vpop.f32.mrb[0].mxu0
        %v3794 = vadd.f32 %v3601, %v3793
        %v3795 = vpop.f32.mrb[0].mxu0
        %v3796 = vadd.f32 %v3603, %v3795
        %v3797 = vpop.f32.mrb[0].mxu0
        %v3798 = vadd.f32 %v3605, %v3797
        %v3799 = vpop.f32.mrb[0].mxu0
        %v3800 = vadd.f32 %v3607, %v3799
        %3801 = vmatprep.mubr.bf16.mxu0 %v2699
        %3802 = vmatmul.mubr.bf16.gmra.mrb[0].mxu0 %v2698
        %v3803 = vpop.f32.mrb[0].mxu0
        %v3804 = vadd.f32 %v3611, %v3803
        %v3805 = vpop.f32.mrb[0].mxu0
        %v3806 = vadd.f32 %v3613, %v3805
        %v3807 = vpop.f32.mrb[0].mxu0
        %v3808 = vadd.f32 %v3615, %v3807
        %v3809 = vpop.f32.mrb[0].mxu0
        %v3810 = vadd.f32 %v3617, %v3809
        %3811 = vmatprep.mubr.bf16.mxu0 %v2705
        %3812 = vmatmul.mubr.bf16.gmra.mrb[0].mxu0 %v2704
        %v3813 = vpop.f32.mrb[0].mxu0
        %v3814 = vadd.f32 %v3621, %v3813
        %v3815 = vpop.f32.mrb[0].mxu0
        %v3816 = vadd.f32 %v3623, %v3815
        %v3817 = vpop.f32.mrb[0].mxu0
        %v3818 = vadd.f32 %v3625, %v3817
        %v3819 = vpop.f32.mrb[0].mxu0
        %v3820 = vadd.f32 %v3627, %v3819
        %3821 = vmatprep.mubr.bf16.mxu0 %v2711
        %3822 = vmatmul.mubr.bf16.gmra.mrb[0].mxu0 %v2710
        %v3823 = vpop.f32.mrb[0].mxu0
        %v3824 = vadd.f32 %v3631, %v3823
        %v3825 = vpop.f32.mrb[0].mxu0
        %v3826 = vadd.f32 %v3633, %v3825
        %v3827 = vpop.f32.mrb[0].mxu0
        %v3828 = vadd.f32 %v3635, %v3827
        %v3829 = vpop.f32.mrb[0].mxu0
        %v3830 = vadd.f32 %v3637, %v3829
        %3831 = vmatprep.mubr.bf16.mxu0 %v2717
        %3832 = vmatmul.mubr.bf16.gmra.mrb[0].mxu0 %v2716
        %v3833 = vpop.f32.mrb[0].mxu0
        %v3834 = vadd.f32 %v3641, %v3833
        %v3835 = vpop.f32.mrb[0].mxu0
        %v3836 = vadd.f32 %v3643, %v3835
        %v3837 = vpop.f32.mrb[0].mxu0
        %v3838 = vadd.f32 %v3645, %v3837
        %v3839 = vpop.f32.mrb[0].mxu0
        %v3840 = vadd.f32 %v3647, %v3839
        %3841 = vmatprep.mubr.bf16.mxu0 %v2723
        %3842 = vmatmul.mubr.bf16.gmra.mrb[0].mxu0 %v2722
        %v3843 = vpop.f32.mrb[0].mxu0
        %v3844 = vadd.f32 %v3651, %v3843
        %v3845 = vpop.f32.mrb[0].mxu0
        %v3846 = vadd.f32 %v3653, %v3845
        %v3847 = vpop.f32.mrb[0].mxu0
        %v3848 = vadd.f32 %v3655, %v3847
        %v3849 = vpop.f32.mrb[0].mxu0
        %v3850 = vadd.f32 %v3657, %v3849
        %3851 = vmatprep.mubr.bf16.mxu0 %v2729
        %3852 = vmatmul.mubr.bf16.gmra.mrb[0].mxu0 %v2728
        %v3853 = vpop.f32.mrb[0].mxu0
        %v3854 = vadd.f32 %v3661, %v3853
        %v3855 = vpop.f32.mrb[0].mxu0
        %v3856 = vadd.f32 %v3663, %v3855
        %v3857 = vpop.f32.mrb[0].mxu0
        %v3858 = vadd.f32 %v3665, %v3857
        %v3859 = vpop.f32.mrb[0].mxu0
        %v3860 = vadd.f32 %v3667, %v3859
        %3861 = vmatprep.mubr.bf16.mxu0 %v2735
        %3862 = vmatmul.mubr.bf16.gmra.mrb[0].mxu0 %v2734
        %v3863 = vpop.f32.mrb[0].mxu0
        %v3864 = vadd.f32 %v3671, %v3863
        %v3865 = vpop.f32.mrb[0].mxu0
        %v3866 = vadd.f32 %v3673, %v3865
        %v3867 = vpop.f32.mrb[0].mxu0
        %v3868 = vadd.f32 %v3675, %v3867
        %v3869 = vpop.f32.mrb[0].mxu0
        %v3870 = vadd.f32 %v3677, %v3869
        %3871 = vmatprep.mubr.bf16.mxu0 %v2741
        %3872 = vmatmul.mubr.bf16.gmra.mrb[0].mxu0 %v2740
        %v3873 = vpop.f32.mrb[0].mxu0
        %v3874 = vadd.f32 %v3681, %v3873
        %v3875 = vpop.f32.mrb[0].mxu0
        %v3876 = vadd.f32 %v3683, %v3875
        %v3877 = vpop.f32.mrb[0].mxu0
        %v3878 = vadd.f32 %v3685, %v3877
        %v3879 = vpop.f32.mrb[0].mxu0
        %v3880 = vadd.f32 %v3687, %v3879
        %3881 = vmatprep.mubr.bf16.mxu0 %v2747
        %3882 = vmatmul.mubr.bf16.gmra.mrb[0].mxu0 %v2746
        %v3883 = vpop.f32.mrb[0].mxu0
        %v3884 = vadd.f32 %v3691, %v3883
        %v3885 = vpop.f32.mrb[0].mxu0
        %v3886 = vadd.f32 %v3693, %v3885
        %v3887 = vpop.f32.mrb[0].mxu0
        %v3888 = vadd.f32 %v3695, %v3887
        %v3889 = vpop.f32.mrb[0].mxu0
        %v3890 = vadd.f32 %v3697, %v3889
        %3891 = vmatprep.mubr.bf16.mxu0 %v2753
        %3892 = vmatmul.mubr.bf16.gmra.mrb[0].mxu0 %v2752
        %v3893 = vpop.f32.mrb[0].mxu0
        %v3894 = vadd.f32 %v3701, %v3893
        %v3895 = vpop.f32.mrb[0].mxu0
        %v3896 = vadd.f32 %v3703, %v3895
        %v3897 = vpop.f32.mrb[0].mxu0
        %v3898 = vadd.f32 %v3705, %v3897
        %v3899 = vpop.f32.mrb[0].mxu0
        %v3900 = vadd.f32 %v3707, %v3899
        %3901 = vmatprep.mubr.bf16.mxu0 %v2759
        %3902 = vmatmul.mubr.bf16.gmra.mrb[0].mxu0 %v2758
        %v3903 = vpop.f32.mrb[0].mxu0
        %v3904 = vadd.f32 %v3711, %v3903
        %v3905 = vpop.f32.mrb[0].mxu0
        %v3906 = vadd.f32 %v3713, %v3905
        %v3907 = vpop.f32.mrb[0].mxu0
        %v3908 = vadd.f32 %v3715, %v3907
        %v3909 = vpop.f32.mrb[0].mxu0
        %v3910 = vadd.f32 %v3717, %v3909
        %3911 = vmatprep.mubr.bf16.mxu0 %v2765
        %3912 = vmatmul.mubr.bf16.gmra.mrb[0].mxu0 %v2764
        %v3913 = vpop.f32.mrb[0].mxu0
        %v3914 = vadd.f32 %v3721, %v3913
        %v3915 = vpop.f32.mrb[0].mxu0
        %v3916 = vadd.f32 %v3723, %v3915
        %v3917 = vpop.f32.mrb[0].mxu0
        %v3918 = vadd.f32 %v3725, %v3917
        %v3919 = vpop.f32.mrb[0].mxu0
        %v3920 = vadd.f32 %v3727, %v3919
        %3921 = vdwg.mxu0
        %v3922 = vadd.f32 %v2606, %v3764
        %v3923 = vadd.f32 %v2607, %v3766
        %v3924 = vadd.f32 %v2608, %v3768
        %v3925 = vadd.f32 %v2609, %v3770
        %v3926 = vadd.f32 %v2610, %v3774
        %v3927 = vadd.f32 %v2611, %v3776
        %v3928 = vadd.f32 %v2612, %v3778
        %v3929 = vadd.f32 %v2613, %v3780
        %v3930 = vadd.f32 %v2614, %v3784
        %v3931 = vadd.f32 %v2615, %v3786
        %v3932 = vadd.f32 %v2616, %v3788
        %v3933 = vadd.f32 %v2617, %v3790
        %v3934 = vadd.f32 %v2618, %v3794
        %v3935 = vadd.f32 %v2619, %v3796
        %v3936 = vadd.f32 %v2620, %v3798
        %v3937 = vadd.f32 %v2621, %v3800
        %v3938 = vadd.f32 %v2622, %v3804
        %v3939 = vadd.f32 %v2623, %v3806
        %v3940 = vadd.f32 %v2624, %v3808
        %v3941 = vadd.f32 %v2625, %v3810
        %v3942 = vadd.f32 %v2626, %v3814
        %v3943 = vadd.f32 %v2627, %v3816
        %v3944 = vadd.f32 %v2628, %v3818
        %v3945 = vadd.f32 %v2629, %v3820
        %v3946 = vadd.f32 %v2630, %v3824
        %v3947 = vadd.f32 %v2631, %v3826
        %v3948 = vadd.f32 %v2632, %v3828
        %v3949 = vadd.f32 %v2633, %v3830
        %v3950 = vadd.f32 %v2634, %v3834
        %v3951 = vadd.f32 %v2635, %v3836
        %v3952 = vadd.f32 %v2636, %v3838
        %v3953 = vadd.f32 %v2637, %v3840
        %v3954 = vadd.f32 %v2638, %v3844
        %v3955 = vadd.f32 %v2639, %v3846
        %v3956 = vadd.f32 %v2640, %v3848
        %v3957 = vadd.f32 %v2641, %v3850
        %v3958 = vadd.f32 %v2642, %v3854
        %v3959 = vadd.f32 %v2643, %v3856
        %v3960 = vadd.f32 %v2644, %v3858
        %v3961 = vadd.f32 %v2645, %v3860
        %v3962 = vadd.f32 %v2646, %v3864
        %v3963 = vadd.f32 %v2647, %v3866
        %v3964 = vadd.f32 %v2648, %v3868
        %v3965 = vadd.f32 %v2649, %v3870
        %v3966 = vadd.f32 %v2650, %v3874
        %v3967 = vadd.f32 %v2651, %v3876
        %v3968 = vadd.f32 %v2652, %v3878
        %v3969 = vadd.f32 %v2653, %v3880
        %v3970 = vadd.f32 %v2654, %v3884
        %v3971 = vadd.f32 %v2655, %v3886
        %v3972 = vadd.f32 %v2656, %v3888
        %v3973 = vadd.f32 %v2657, %v3890
        %v3974 = vadd.f32 %v2658, %v3894
        %v3975 = vadd.f32 %v2659, %v3896
        %v3976 = vadd.f32 %v2660, %v3898
        %v3977 = vadd.f32 %v2661, %v3900
        %v3978 = vadd.f32 %v2662, %v3904
        %v3979 = vadd.f32 %v2663, %v3906
        %v3980 = vadd.f32 %v2664, %v3908
        %v3981 = vadd.f32 %v2665, %v3910
        %v3982 = vadd.f32 %v2666, %v3914
        %v3983 = vadd.f32 %v2667, %v3916
        %v3984 = vadd.f32 %v2668, %v3918
        %v3985 = vadd.f32 %v2669, %v3920
        %3986 = vst [vmem:[%s244] sm:$0xff] %v3922
        %3987 = vst [vmem:[%s244 + $0x8] sm:$0xff] %v3923
        %3988 = vst [vmem:[%s244 + $0x10] sm:$0xff] %v3924
        %3989 = vst [vmem:[%s244 + $0x18] sm:$0xff] %v3925
        %3990 = vst [vmem:[%s244 + $0x20] sm:$0xff] %v3926
        %3991 = vst [vmem:[%s244 + $0x28] sm:$0xff] %v3927
        %3992 = vst [vmem:[%s244 + $0x30] sm:$0xff] %v3928
        %3993 = vst [vmem:[%s244 + $0x38] sm:$0xff] %v3929
        %3994 = vst [vmem:[%s244 + $0x40] sm:$0xff] %v3930
        %3995 = vst [vmem:[%s244 + $0x48] sm:$0xff] %v3931
        %3996 = vst [vmem:[%s244 + $0x50] sm:$0xff] %v3932
        %3997 = vst [vmem:[%s244 + $0x58] sm:$0xff] %v3933
        %3998 = vst [vmem:[%s244 + $0x60] sm:$0xff] %v3934
        %3999 = vst [vmem:[%s244 + $0x68] sm:$0xff] %v3935
        %4000 = vst [vmem:[%s244 + $0x70] sm:$0xff] %v3936
        %4001 = vst [vmem:[%s244 + $0x78] sm:$0xff] %v3937
        %4002 = vst [vmem:[%s244 + $0x80] sm:$0xff] %v3938
        %4003 = vst [vmem:[%s244 + $0x88] sm:$0xff] %v3939
        %4004 = vst [vmem:[%s244 + $0x90] sm:$0xff] %v3940
        %4005 = vst [vmem:[%s244 + $0x98] sm:$0xff] %v3941
        %4006 = vst [vmem:[%s244 + $0xa0] sm:$0xff] %v3942
        %4007 = vst [vmem:[%s244 + $0xa8] sm:$0xff] %v3943
        %4008 = vst [vmem:[%s244 + $0xb0] sm:$0xff] %v3944
        %4009 = vst [vmem:[%s244 + $0xb8] sm:$0xff] %v3945
        %4010 = vst [vmem:[%s244 + $0xc0] sm:$0xff] %v3946
        %4011 = vst [vmem:[%s244 + $0xc8] sm:$0xff] %v3947
        %4012 = vst [vmem:[%s244 + $0xd0] sm:$0xff] %v3948
        %4013 = vst [vmem:[%s244 + $0xd8] sm:$0xff] %v3949
        %4014 = vst [vmem:[%s244 + $0xe0] sm:$0xff] %v3950
        %4015 = vst [vmem:[%s244 + $0xe8] sm:$0xff] %v3951
        %4016 = vst [vmem:[%s244 + $0xf0] sm:$0xff] %v3952
        %4017 = vst [vmem:[%s244 + $0xf8] sm:$0xff] %v3953
        %4018 = vst [vmem:[%s244 + $0x100] sm:$0xff] %v3954
        %4019 = vst [vmem:[%s244 + $0x108] sm:$0xff] %v3955
        %4020 = vst [vmem:[%s244 + $0x110] sm:$0xff] %v3956
        %4021 = vst [vmem:[%s244 + $0x118] sm:$0xff] %v3957
        %4022 = vst [vmem:[%s244 + $0x120] sm:$0xff] %v3958
        %4023 = vst [vmem:[%s244 + $0x128] sm:$0xff] %v3959
        %4024 = vst [vmem:[%s244 + $0x130] sm:$0xff] %v3960
        %4025 = vst [vmem:[%s244 + $0x138] sm:$0xff] %v3961
        %4026 = vst [vmem:[%s244 + $0x140] sm:$0xff] %v3962
        %4027 = vst [vmem:[%s244 + $0x148] sm:$0xff] %v3963
        %4028 = vst [vmem:[%s244 + $0x150] sm:$0xff] %v3964
        %4029 = vst [vmem:[%s244 + $0x158] sm:$0xff] %v3965
        %4030 = vst [vmem:[%s244 + $0x160] sm:$0xff] %v3966
        %4031 = vst [vmem:[%s244 + $0x168] sm:$0xff] %v3967
        %4032 = vst [vmem:[%s244 + $0x170] sm:$0xff] %v3968
        %4033 = vst [vmem:[%s244 + $0x178] sm:$0xff] %v3969
        %4034 = vst [vmem:[%s244 + $0x180] sm:$0xff] %v3970
        %4035 = vst [vmem:[%s244 + $0x188] sm:$0xff] %v3971
        %4036 = vst [vmem:[%s244 + $0x190] sm:$0xff] %v3972
        %4037 = vst [vmem:[%s244 + $0x198] sm:$0xff] %v3973
        %4038 = vst [vmem:[%s244 + $0x1a0] sm:$0xff] %v3974
        %4039 = vst [vmem:[%s244 + $0x1a8] sm:$0xff] %v3975
        %4040 = vst [vmem:[%s244 + $0x1b0] sm:$0xff] %v3976
        %4041 = vst [vmem:[%s244 + $0x1b8] sm:$0xff] %v3977
        %4042 = vst [vmem:[%s244 + $0x1c0] sm:$0xff] %v3978
        %4043 = vst [vmem:[%s244 + $0x1c8] sm:$0xff] %v3979
        %4044 = vst [vmem:[%s244 + $0x1d0] sm:$0xff] %v3980
        %4045 = vst [vmem:[%s244 + $0x1d8] sm:$0xff] %v3981
        %4046 = vst [vmem:[%s244 + $0x1e0] sm:$0xff] %v3982
        %4047 = vst [vmem:[%s244 + $0x1e8] sm:$0xff] %v3983
        %4048 = vst [vmem:[%s244 + $0x1f0] sm:$0xff] %v3984
        %4049 = vst [vmem:[%s244 + $0x1f8] sm:$0xff] %v3985
        %v4050 = vld [vmem:[%s244] sm:$0xff]
        %v4051 = vld [vmem:[%s244 + $0x8] sm:$0xff]
        %v4052 = vld [vmem:[%s244 + $0x10] sm:$0xff]
        %v4053 = vld [vmem:[%s244 + $0x18] sm:$0xff]
        %v4054 = vld [vmem:[%s244 + $0x20] sm:$0xff]
        %v4055 = vld [vmem:[%s244 + $0x28] sm:$0xff]
        %v4056 = vld [vmem:[%s244 + $0x30] sm:$0xff]
        %v4057 = vld [vmem:[%s244 + $0x38] sm:$0xff]
        %v4058 = vld [vmem:[%s244 + $0x40] sm:$0xff]
        %v4059 = vld [vmem:[%s244 + $0x48] sm:$0xff]
        %v4060 = vld [vmem:[%s244 + $0x50] sm:$0xff]
        %v4061 = vld [vmem:[%s244 + $0x58] sm:$0xff]
        %v4062 = vld [vmem:[%s244 + $0x60] sm:$0xff]
        %v4063 = vld [vmem:[%s244 + $0x68] sm:$0xff]
        %v4064 = vld [vmem:[%s244 + $0x70] sm:$0xff]
        %v4065 = vld [vmem:[%s244 + $0x78] sm:$0xff]
        %v4066 = vld [vmem:[%s244 + $0x80] sm:$0xff]
        %v4067 = vld [vmem:[%s244 + $0x88] sm:$0xff]
        %v4068 = vld [vmem:[%s244 + $0x90] sm:$0xff]
        %v4069 = vld [vmem:[%s244 + $0x98] sm:$0xff]
        %v4070 = vld [vmem:[%s244 + $0xa0] sm:$0xff]
        %v4071 = vld [vmem:[%s244 + $0xa8] sm:$0xff]
        %v4072 = vld [vmem:[%s244 + $0xb0] sm:$0xff]
        %v4073 = vld [vmem:[%s244 + $0xb8] sm:$0xff]
        %v4074 = vld [vmem:[%s244 + $0xc0] sm:$0xff]
        %v4075 = vld [vmem:[%s244 + $0xc8] sm:$0xff]
        %v4076 = vld [vmem:[%s244 + $0xd0] sm:$0xff]
        %v4077 = vld [vmem:[%s244 + $0xd8] sm:$0xff]
        %v4078 = vld [vmem:[%s244 + $0xe0] sm:$0xff]
        %v4079 = vld [vmem:[%s244 + $0xe8] sm:$0xff]
        %v4080 = vld [vmem:[%s244 + $0xf0] sm:$0xff]
        %v4081 = vld [vmem:[%s244 + $0xf8] sm:$0xff]
        %v4082 = vld [vmem:[%s244 + $0x100] sm:$0xff]
        %v4083 = vld [vmem:[%s244 + $0x108] sm:$0xff]
        %v4084 = vld [vmem:[%s244 + $0x110] sm:$0xff]
        %v4085 = vld [vmem:[%s244 + $0x118] sm:$0xff]
        %v4086 = vld [vmem:[%s244 + $0x120] sm:$0xff]
        %v4087 = vld [vmem:[%s244 + $0x128] sm:$0xff]
        %v4088 = vld [vmem:[%s244 + $0x130] sm:$0xff]
        %v4089 = vld [vmem:[%s244 + $0x138] sm:$0xff]
        %v4090 = vld [vmem:[%s244 + $0x140] sm:$0xff]
        %v4091 = vld [vmem:[%s244 + $0x148] sm:$0xff]
        %v4092 = vld [vmem:[%s244 + $0x150] sm:$0xff]
        %v4093 = vld [vmem:[%s244 + $0x158] sm:$0xff]
        %v4094 = vld [vmem:[%s244 + $0x160] sm:$0xff]
        %v4095 = vld [vmem:[%s244 + $0x168] sm:$0xff]
        %v4096 = vld [vmem:[%s244 + $0x170] sm:$0xff]
        %v4097 = vld [vmem:[%s244 + $0x178] sm:$0xff]
        %v4098 = vld [vmem:[%s244 + $0x180] sm:$0xff]
        %v4099 = vld [vmem:[%s244 + $0x188] sm:$0xff]
        %v4100 = vld [vmem:[%s244 + $0x190] sm:$0xff]
        %v4101 = vld [vmem:[%s244 + $0x198] sm:$0xff]
        %v4102 = vld [vmem:[%s244 + $0x1a0] sm:$0xff]
        %v4103 = vld [vmem:[%s244 + $0x1a8] sm:$0xff]
        %v4104 = vld [vmem:[%s244 + $0x1b0] sm:$0xff]
        %v4105 = vld [vmem:[%s244 + $0x1b8] sm:$0xff]
        %v4106 = vld [vmem:[%s244 + $0x1c0] sm:$0xff]
        %v4107 = vld [vmem:[%s244 + $0x1c8] sm:$0xff]
        %v4108 = vld [vmem:[%s244 + $0x1d0] sm:$0xff]
        %v4109 = vld [vmem:[%s244 + $0x1d8] sm:$0xff]
        %v4110 = vld [vmem:[%s244 + $0x1e0] sm:$0xff]
        %v4111 = vld [vmem:[%s244 + $0x1e8] sm:$0xff]
        %v4112 = vld [vmem:[%s244 + $0x1f0] sm:$0xff]
        %v4113 = vld [vmem:[%s244 + $0x1f8] sm:$0xff]
        %v4114 = vld [vmem:[#allocation2 + $0x60] sm:$0xff]
        %v4115 = vld [vmem:[#allocation2 + $0x68] sm:$0xff]
        %v4116 = vld [vmem:[#allocation2 + $0x70] sm:$0xff]
        %v4117 = vld [vmem:[#allocation2 + $0x78] sm:$0xff]
        %v4118 = vld [vmem:[#allocation2 + $0x80] sm:$0xff]
        %v4119 = vld [vmem:[#allocation2 + $0x88] sm:$0xff]
        %v4120 = vld [vmem:[#allocation2 + $0x90] sm:$0xff]
        %v4121 = vld [vmem:[#allocation2 + $0x98] sm:$0xff]
        %v4122 = vld [vmem:[#allocation2 + $0xa0] sm:$0xff]
        %v4123 = vld [vmem:[#allocation2 + $0xa8] sm:$0xff]
        %v4124 = vld [vmem:[#allocation2 + $0xb0] sm:$0xff]
        %v4125 = vld [vmem:[#allocation2 + $0xb8] sm:$0xff]
        %v4126 = vld [vmem:[#allocation2 + $0xc0] sm:$0xff]
        %v4127 = vld [vmem:[#allocation2 + $0xc8] sm:$0xff]
        %v4128 = vld [vmem:[#allocation2 + $0xd0] sm:$0xff]
        %v4129 = vld [vmem:[#allocation2 + $0xd8] sm:$0xff]
        %v4130 = vld [vmem:[#allocation2 + $0xe0] sm:$0xff]
        %v4131 = vld [vmem:[#allocation2 + $0xe8] sm:$0xff]
        %v4132 = vld [vmem:[#allocation2 + $0xf0] sm:$0xff]
        %v4133 = vld [vmem:[#allocation2 + $0xf8] sm:$0xff]
        %v4134 = vld [vmem:[#allocation2 + $0x100] sm:$0xff]
        %v4135 = vld [vmem:[#allocation2 + $0x108] sm:$0xff]
        %v4136 = vld [vmem:[#allocation2 + $0x110] sm:$0xff]
        %v4137 = vld [vmem:[#allocation2 + $0x118] sm:$0xff]
        %v4138 = vld [vmem:[#allocation2 + $0x120] sm:$0xff]
        %v4139 = vld [vmem:[#allocation2 + $0x128] sm:$0xff]
        %v4140 = vld [vmem:[#allocation2 + $0x130] sm:$0xff]
        %v4141 = vld [vmem:[#allocation2 + $0x138] sm:$0xff]
        %v4142 = vld [vmem:[#allocation2 + $0x140] sm:$0xff]
        %v4143 = vld [vmem:[#allocation2 + $0x148] sm:$0xff]
        %v4144 = vld [vmem:[#allocation2 + $0x150] sm:$0xff]
        %v4145 = vld [vmem:[#allocation2 + $0x158] sm:$0xff]
        %v4146 = vld [vmem:[#allocation2 + $0x160] sm:$0xff]
        %v4147 = vld [vmem:[#allocation2 + $0x168] sm:$0xff]
        %v4148 = vld [vmem:[#allocation2 + $0x170] sm:$0xff]
        %v4149 = vld [vmem:[#allocation2 + $0x178] sm:$0xff]
        %v4150 = vld [vmem:[#allocation2 + $0x180] sm:$0xff]
        %v4151 = vld [vmem:[#allocation2 + $0x188] sm:$0xff]
        %v4152 = vld [vmem:[#allocation2 + $0x190] sm:$0xff]
        %v4153 = vld [vmem:[#allocation2 + $0x198] sm:$0xff]
        %v4154 = vld [vmem:[#allocation2 + $0x1a0] sm:$0xff]
        %v4155 = vld [vmem:[#allocation2 + $0x1a8] sm:$0xff]
        %v4156 = vld [vmem:[#allocation2 + $0x1b0] sm:$0xff]
        %v4157 = vld [vmem:[#allocation2 + $0x1b8] sm:$0xff]
        %v4158 = vld [vmem:[#allocation2 + $0x1c0] sm:$0xff]
        %v4159 = vld [vmem:[#allocation2 + $0x1c8] sm:$0xff]
        %v4160 = vld [vmem:[#allocation2 + $0x1d0] sm:$0xff]
        %v4161 = vld [vmem:[#allocation2 + $0x1d8] sm:$0xff]
        %v4162 = vld [vmem:[#allocation2 + $0x1e0] sm:$0xff]
        %v4163 = vld [vmem:[#allocation2 + $0x1e8] sm:$0xff]
        %v4164 = vld [vmem:[#allocation2 + $0x1f0] sm:$0xff]
        %v4165 = vld [vmem:[#allocation2 + $0x1f8] sm:$0xff]
        %v4166 = vld [vmem:[#allocation2 + $0x200] sm:$0xff]
        %v4167 = vld [vmem:[#allocation2 + $0x208] sm:$0xff]
        %v4168 = vld [vmem:[#allocation2 + $0x210] sm:$0xff]
        %v4169 = vld [vmem:[#allocation2 + $0x218] sm:$0xff]
        %v4170 = vld [vmem:[#allocation2 + $0x220] sm:$0xff]
        %v4171 = vld [vmem:[#allocation2 + $0x228] sm:$0xff]
        %v4172 = vld [vmem:[#allocation2 + $0x230] sm:$0xff]
        %v4173 = vld [vmem:[#allocation2 + $0x238] sm:$0xff]
        %v4174 = vld [vmem:[#allocation2 + $0x240] sm:$0xff]
        %v4175 = vld [vmem:[#allocation2 + $0x248] sm:$0xff]
        %v4176 = vld [vmem:[#allocation2 + $0x250] sm:$0xff]
        %v4177 = vld [vmem:[#allocation2 + $0x258] sm:$0xff]
        %v4178 = vld [vmem:[#allocation2 + $0x260] sm:$0xff]
        %v4179 = vld [vmem:[#allocation2 + $0x268] sm:$0xff]
        %v4180 = vld [vmem:[#allocation2 + $0x270] sm:$0xff]
        %v4181 = vld [vmem:[#allocation2 + $0x278] sm:$0xff]
        %v4182 = vld [vmem:[#allocation2 + $0x280] sm:$0xff]
        %v4183 = vld [vmem:[#allocation2 + $0x288] sm:$0xff]
        %v4184 = vld [vmem:[#allocation2 + $0x290] sm:$0xff]
        %v4185 = vld [vmem:[#allocation2 + $0x298] sm:$0xff]
        %v4186 = vld [vmem:[#allocation2 + $0x2a0] sm:$0xff]
        %v4187 = vld [vmem:[#allocation2 + $0x2a8] sm:$0xff]
        %v4188 = vld [vmem:[#allocation2 + $0x2b0] sm:$0xff]
        %v4189 = vld [vmem:[#allocation2 + $0x2b8] sm:$0xff]
        %v4190 = vld [vmem:[#allocation2 + $0x2c0] sm:$0xff]
        %v4191 = vld [vmem:[#allocation2 + $0x2c8] sm:$0xff]
        %v4192 = vld [vmem:[#allocation2 + $0x2d0] sm:$0xff]
        %v4193 = vld [vmem:[#allocation2 + $0x2d8] sm:$0xff]
        %v4194 = vld [vmem:[#allocation2 + $0x2e0] sm:$0xff]
        %v4195 = vld [vmem:[#allocation2 + $0x2e8] sm:$0xff]
        %v4196 = vld [vmem:[#allocation2 + $0x2f0] sm:$0xff]
        %v4197 = vld [vmem:[#allocation2 + $0x2f8] sm:$0xff]
        %v4198 = vld [vmem:[#allocation2 + $0x300] sm:$0xff]
        %v4199 = vld [vmem:[#allocation2 + $0x308] sm:$0xff]
        %v4200 = vld [vmem:[#allocation2 + $0x310] sm:$0xff]
        %v4201 = vld [vmem:[#allocation2 + $0x318] sm:$0xff]
        %v4202 = vld [vmem:[#allocation2 + $0x320] sm:$0xff]
        %v4203 = vld [vmem:[#allocation2 + $0x328] sm:$0xff]
        %v4204 = vld [vmem:[#allocation2 + $0x330] sm:$0xff]
        %v4205 = vld [vmem:[#allocation2 + $0x338] sm:$0xff]
        %v4206 = vld [vmem:[#allocation2 + $0x340] sm:$0xff]
        %v4207 = vld [vmem:[#allocation2 + $0x348] sm:$0xff]
        %v4208 = vld [vmem:[#allocation2 + $0x350] sm:$0xff]
        %v4209 = vld [vmem:[#allocation2 + $0x358] sm:$0xff]
        %s4210 = scalar_lea.vmem %s1, 1536
        %v4211 = vld [vmem:[%s4210] sm:$0xff]
        %v4212 = vld [vmem:[%s4210 + $0x8] sm:$0xff]
        %v4213 = vld [vmem:[%s4210 + $0x10] sm:$0xff]
        %v4214 = vld [vmem:[%s4210 + $0x18] sm:$0xff]
        %v4215 = vld [vmem:[%s4210 + $0x20] sm:$0xff]
        %v4216 = vld [vmem:[%s4210 + $0x28] sm:$0xff]
        %v4217 = vld [vmem:[%s4210 + $0x30] sm:$0xff]
        %v4218 = vld [vmem:[%s4210 + $0x38] sm:$0xff]
        %v4219 = vld [vmem:[%s4210 + $0x40] sm:$0xff]
        %v4220 = vld [vmem:[%s4210 + $0x48] sm:$0xff]
        %v4221 = vld [vmem:[%s4210 + $0x50] sm:$0xff]
        %v4222 = vld [vmem:[%s4210 + $0x58] sm:$0xff]
        %v4223 = vld [vmem:[%s4210 + $0x60] sm:$0xff]
        %v4224 = vld [vmem:[%s4210 + $0x68] sm:$0xff]
        %v4225 = vld [vmem:[%s4210 + $0x70] sm:$0xff]
        %v4226 = vld [vmem:[%s4210 + $0x78] sm:$0xff]
        %v4227 = vld [vmem:[%s4210 + $0x80] sm:$0xff]
        %v4228 = vld [vmem:[%s4210 + $0x88] sm:$0xff]
        %v4229 = vld [vmem:[%s4210 + $0x90] sm:$0xff]
        %v4230 = vld [vmem:[%s4210 + $0x98] sm:$0xff]
        %v4231 = vld [vmem:[%s4210 + $0xa0] sm:$0xff]
        %v4232 = vld [vmem:[%s4210 + $0xa8] sm:$0xff]
        %v4233 = vld [vmem:[%s4210 + $0xb0] sm:$0xff]
        %v4234 = vld [vmem:[%s4210 + $0xb8] sm:$0xff]
        %v4235 = vld [vmem:[%s4210 + $0xc0] sm:$0xff]
        %v4236 = vld [vmem:[%s4210 + $0xc8] sm:$0xff]
        %v4237 = vld [vmem:[%s4210 + $0xd0] sm:$0xff]
        %v4238 = vld [vmem:[%s4210 + $0xd8] sm:$0xff]
        %v4239 = vld [vmem:[%s4210 + $0xe0] sm:$0xff]
        %v4240 = vld [vmem:[%s4210 + $0xe8] sm:$0xff]
        %v4241 = vld [vmem:[%s4210 + $0xf0] sm:$0xff]
        %v4242 = vld [vmem:[%s4210 + $0xf8] sm:$0xff]
        %v4243 = vld [vmem:[%s4210 + $0x100] sm:$0xff]
        %v4244 = vld [vmem:[%s4210 + $0x108] sm:$0xff]
        %v4245 = vld [vmem:[%s4210 + $0x110] sm:$0xff]
        %v4246 = vld [vmem:[%s4210 + $0x118] sm:$0xff]
        %v4247 = vld [vmem:[%s4210 + $0x120] sm:$0xff]
        %v4248 = vld [vmem:[%s4210 + $0x128] sm:$0xff]
        %v4249 = vld [vmem:[%s4210 + $0x130] sm:$0xff]
        %v4250 = vld [vmem:[%s4210 + $0x138] sm:$0xff]
        %v4251 = vld [vmem:[%s4210 + $0x140] sm:$0xff]
        %v4252 = vld [vmem:[%s4210 + $0x148] sm:$0xff]
        %v4253 = vld [vmem:[%s4210 + $0x150] sm:$0xff]
        %v4254 = vld [vmem:[%s4210 + $0x158] sm:$0xff]
        %v4255 = vld [vmem:[%s4210 + $0x160] sm:$0xff]
        %v4256 = vld [vmem:[%s4210 + $0x168] sm:$0xff]
        %v4257 = vld [vmem:[%s4210 + $0x170] sm:$0xff]
        %v4258 = vld [vmem:[%s4210 + $0x178] sm:$0xff]
        %v4259 = vld [vmem:[%s4210 + $0x180] sm:$0xff]
        %v4260 = vld [vmem:[%s4210 + $0x188] sm:$0xff]
        %v4261 = vld [vmem:[%s4210 + $0x190] sm:$0xff]
        %v4262 = vld [vmem:[%s4210 + $0x198] sm:$0xff]
        %v4263 = vld [vmem:[%s4210 + $0x1a0] sm:$0xff]
        %v4264 = vld [vmem:[%s4210 + $0x1a8] sm:$0xff]
        %v4265 = vld [vmem:[%s4210 + $0x1b0] sm:$0xff]
        %v4266 = vld [vmem:[%s4210 + $0x1b8] sm:$0xff]
        %v4267 = vld [vmem:[%s4210 + $0x1c0] sm:$0xff]
        %v4268 = vld [vmem:[%s4210 + $0x1c8] sm:$0xff]
        %v4269 = vld [vmem:[%s4210 + $0x1d0] sm:$0xff]
        %v4270 = vld [vmem:[%s4210 + $0x1d8] sm:$0xff]
        %v4271 = vld [vmem:[%s4210 + $0x1e0] sm:$0xff]
        %v4272 = vld [vmem:[%s4210 + $0x1e8] sm:$0xff]
        %v4273 = vld [vmem:[%s4210 + $0x1f0] sm:$0xff]
        %v4274 = vld [vmem:[%s4210 + $0x1f8] sm:$0xff]
        %v4275 = vld [vmem:[%s4210 + $0x200] sm:$0xff]
        %v4276 = vld [vmem:[%s4210 + $0x208] sm:$0xff]
        %v4277 = vld [vmem:[%s4210 + $0x210] sm:$0xff]
        %v4278 = vld [vmem:[%s4210 + $0x218] sm:$0xff]
        %v4279 = vld [vmem:[%s4210 + $0x220] sm:$0xff]
        %v4280 = vld [vmem:[%s4210 + $0x228] sm:$0xff]
        %v4281 = vld [vmem:[%s4210 + $0x230] sm:$0xff]
        %v4282 = vld [vmem:[%s4210 + $0x238] sm:$0xff]
        %v4283 = vld [vmem:[%s4210 + $0x240] sm:$0xff]
        %v4284 = vld [vmem:[%s4210 + $0x248] sm:$0xff]
        %v4285 = vld [vmem:[%s4210 + $0x250] sm:$0xff]
        %v4286 = vld [vmem:[%s4210 + $0x258] sm:$0xff]
        %v4287 = vld [vmem:[%s4210 + $0x260] sm:$0xff]
        %v4288 = vld [vmem:[%s4210 + $0x268] sm:$0xff]
        %v4289 = vld [vmem:[%s4210 + $0x270] sm:$0xff]
        %v4290 = vld [vmem:[%s4210 + $0x278] sm:$0xff]
        %v4291 = vld [vmem:[%s4210 + $0x280] sm:$0xff]
        %v4292 = vld [vmem:[%s4210 + $0x288] sm:$0xff]
        %v4293 = vld [vmem:[%s4210 + $0x290] sm:$0xff]
        %v4294 = vld [vmem:[%s4210 + $0x298] sm:$0xff]
        %v4295 = vld [vmem:[%s4210 + $0x2a0] sm:$0xff]
        %v4296 = vld [vmem:[%s4210 + $0x2a8] sm:$0xff]
        %v4297 = vld [vmem:[%s4210 + $0x2b0] sm:$0xff]
        %v4298 = vld [vmem:[%s4210 + $0x2b8] sm:$0xff]
        %v4299 = vld [vmem:[%s4210 + $0x2c0] sm:$0xff]
        %v4300 = vld [vmem:[%s4210 + $0x2c8] sm:$0xff]
        %v4301 = vld [vmem:[%s4210 + $0x2d0] sm:$0xff]
        %v4302 = vld [vmem:[%s4210 + $0x2d8] sm:$0xff]
        %v4303 = vld [vmem:[%s4210 + $0x2e0] sm:$0xff]
        %v4304 = vld [vmem:[%s4210 + $0x2e8] sm:$0xff]
        %v4305 = vld [vmem:[%s4210 + $0x2f0] sm:$0xff]
        %v4306 = vld [vmem:[%s4210 + $0x2f8] sm:$0xff]
        %v4403 = vunpack.c.l.b16 %v4211
        %v4404 = vunpack.c.h.b16 %v4211
        %v4405 = vunpack.c.l.b16 %v4212
        %v4406 = vunpack.c.h.b16 %v4212
        %v4407 = vunpack.c.l.b16 %v4213
        %v4408 = vunpack.c.h.b16 %v4213
        %v4409 = vunpack.c.l.b16 %v4214
        %v4410 = vunpack.c.h.b16 %v4214
        %v4411 = vunpack.c.l.b16 %v4215
        %v4412 = vunpack.c.h.b16 %v4215
        %v4413 = vunpack.c.l.b16 %v4216
        %v4414 = vunpack.c.h.b16 %v4216
        %v4415 = vunpack.c.l.b16 %v4217
        %v4416 = vunpack.c.h.b16 %v4217
        %v4417 = vunpack.c.l.b16 %v4218
        %v4418 = vunpack.c.h.b16 %v4218
        %v4419 = vunpack.c.l.b16 %v4219
        %v4420 = vunpack.c.h.b16 %v4219
        %v4421 = vunpack.c.l.b16 %v4220
        %v4422 = vunpack.c.h.b16 %v4220
        %v4423 = vunpack.c.l.b16 %v4221
        %v4424 = vunpack.c.h.b16 %v4221
        %v4425 = vunpack.c.l.b16 %v4222
        %v4426 = vunpack.c.h.b16 %v4222
        %v4427 = vunpack.c.l.b16 %v4223
        %v4428 = vunpack.c.h.b16 %v4223
        %v4429 = vunpack.c.l.b16 %v4224
        %v4430 = vunpack.c.h.b16 %v4224
        %v4431 = vunpack.c.l.b16 %v4225
        %v4432 = vunpack.c.h.b16 %v4225
        %v4433 = vunpack.c.l.b16 %v4226
        %v4434 = vunpack.c.h.b16 %v4226
        %v4435 = vunpack.c.l.b16 %v4227
        %v4436 = vunpack.c.h.b16 %v4227
        %v4437 = vunpack.c.l.b16 %v4228
        %v4438 = vunpack.c.h.b16 %v4228
        %v4439 = vunpack.c.l.b16 %v4229
        %v4440 = vunpack.c.h.b16 %v4229
        %v4441 = vunpack.c.l.b16 %v4230
        %v4442 = vunpack.c.h.b16 %v4230
        %v4443 = vunpack.c.l.b16 %v4231
        %v4444 = vunpack.c.h.b16 %v4231
        %v4445 = vunpack.c.l.b16 %v4232
        %v4446 = vunpack.c.h.b16 %v4232
        %v4447 = vunpack.c.l.b16 %v4233
        %v4448 = vunpack.c.h.b16 %v4233
        %v4449 = vunpack.c.l.b16 %v4234
        %v4450 = vunpack.c.h.b16 %v4234
        %v4451 = vunpack.c.l.b16 %v4235
        %v4452 = vunpack.c.h.b16 %v4235
        %v4453 = vunpack.c.l.b16 %v4236
        %v4454 = vunpack.c.h.b16 %v4236
        %v4455 = vunpack.c.l.b16 %v4237
        %v4456 = vunpack.c.h.b16 %v4237
        %v4457 = vunpack.c.l.b16 %v4238
        %v4458 = vunpack.c.h.b16 %v4238
        %v4459 = vunpack.c.l.b16 %v4239
        %v4460 = vunpack.c.h.b16 %v4239
        %v4461 = vunpack.c.l.b16 %v4240
        %v4462 = vunpack.c.h.b16 %v4240
        %v4463 = vunpack.c.l.b16 %v4241
        %v4464 = vunpack.c.h.b16 %v4241
        %v4465 = vunpack.c.l.b16 %v4242
        %v4466 = vunpack.c.h.b16 %v4242
        %v4467 = vunpack.c.l.b16 %v4243
        %v4468 = vunpack.c.h.b16 %v4243
        %v4469 = vunpack.c.l.b16 %v4244
        %v4470 = vunpack.c.h.b16 %v4244
        %v4471 = vunpack.c.l.b16 %v4245
        %v4472 = vunpack.c.h.b16 %v4245
        %v4473 = vunpack.c.l.b16 %v4246
        %v4474 = vunpack.c.h.b16 %v4246
        %v4475 = vunpack.c.l.b16 %v4247
        %v4476 = vunpack.c.h.b16 %v4247
        %v4477 = vunpack.c.l.b16 %v4248
        %v4478 = vunpack.c.h.b16 %v4248
        %v4479 = vunpack.c.l.b16 %v4249
        %v4480 = vunpack.c.h.b16 %v4249
        %v4481 = vunpack.c.l.b16 %v4250
        %v4482 = vunpack.c.h.b16 %v4250
        %v4483 = vunpack.c.l.b16 %v4251
        %v4484 = vunpack.c.h.b16 %v4251
        %v4485 = vunpack.c.l.b16 %v4252
        %v4486 = vunpack.c.h.b16 %v4252
        %v4487 = vunpack.c.l.b16 %v4253
        %v4488 = vunpack.c.h.b16 %v4253
        %v4489 = vunpack.c.l.b16 %v4254
        %v4490 = vunpack.c.h.b16 %v4254
        %v4491 = vunpack.c.l.b16 %v4255
        %v4492 = vunpack.c.h.b16 %v4255
        %v4493 = vunpack.c.l.b16 %v4256
        %v4494 = vunpack.c.h.b16 %v4256
        %v4495 = vunpack.c.l.b16 %v4257
        %v4496 = vunpack.c.h.b16 %v4257
        %v4497 = vunpack.c.l.b16 %v4258
        %v4498 = vunpack.c.h.b16 %v4258
        %v4499 = vunpack.c.l.b16 %v4259
        %v4500 = vunpack.c.h.b16 %v4259
        %v4501 = vunpack.c.l.b16 %v4260
        %v4502 = vunpack.c.h.b16 %v4260
        %v4503 = vunpack.c.l.b16 %v4261
        %v4504 = vunpack.c.h.b16 %v4261
        %v4505 = vunpack.c.l.b16 %v4262
        %v4506 = vunpack.c.h.b16 %v4262
        %v4507 = vunpack.c.l.b16 %v4263
        %v4508 = vunpack.c.h.b16 %v4263
        %v4509 = vunpack.c.l.b16 %v4264
        %v4510 = vunpack.c.h.b16 %v4264
        %v4511 = vunpack.c.l.b16 %v4265
        %v4512 = vunpack.c.h.b16 %v4265
        %v4513 = vunpack.c.l.b16 %v4266
        %v4514 = vunpack.c.h.b16 %v4266
        %v4515 = vunpack.c.l.b16 %v4267
        %v4516 = vunpack.c.h.b16 %v4267
        %v4517 = vunpack.c.l.b16 %v4268
        %v4518 = vunpack.c.h.b16 %v4268
        %v4519 = vunpack.c.l.b16 %v4269
        %v4520 = vunpack.c.h.b16 %v4269
        %v4521 = vunpack.c.l.b16 %v4270
        %v4522 = vunpack.c.h.b16 %v4270
        %v4523 = vunpack.c.l.b16 %v4271
        %v4524 = vunpack.c.h.b16 %v4271
        %v4525 = vunpack.c.l.b16 %v4272
        %v4526 = vunpack.c.h.b16 %v4272
        %v4527 = vunpack.c.l.b16 %v4273
        %v4528 = vunpack.c.h.b16 %v4273
        %v4529 = vunpack.c.l.b16 %v4274
        %v4530 = vunpack.c.h.b16 %v4274
        %v4531 = vunpack.c.l.b16 %v4275
        %v4532 = vunpack.c.h.b16 %v4275
        %v4533 = vunpack.c.l.b16 %v4276
        %v4534 = vunpack.c.h.b16 %v4276
        %v4535 = vunpack.c.l.b16 %v4277
        %v4536 = vunpack.c.h.b16 %v4277
        %v4537 = vunpack.c.l.b16 %v4278
        %v4538 = vunpack.c.h.b16 %v4278
        %v4539 = vunpack.c.l.b16 %v4279
        %v4540 = vunpack.c.h.b16 %v4279
        %v4541 = vunpack.c.l.b16 %v4280
        %v4542 = vunpack.c.h.b16 %v4280
        %v4543 = vunpack.c.l.b16 %v4281
        %v4544 = vunpack.c.h.b16 %v4281
        %v4545 = vunpack.c.l.b16 %v4282
        %v4546 = vunpack.c.h.b16 %v4282
        %v4547 = vunpack.c.l.b16 %v4283
        %v4548 = vunpack.c.h.b16 %v4283
        %v4549 = vunpack.c.l.b16 %v4284
        %v4550 = vunpack.c.h.b16 %v4284
        %v4551 = vunpack.c.l.b16 %v4285
        %v4552 = vunpack.c.h.b16 %v4285
        %v4553 = vunpack.c.l.b16 %v4286
        %v4554 = vunpack.c.h.b16 %v4286
        %v4555 = vunpack.c.l.b16 %v4287
        %v4556 = vunpack.c.h.b16 %v4287
        %v4557 = vunpack.c.l.b16 %v4288
        %v4558 = vunpack.c.h.b16 %v4288
        %v4559 = vunpack.c.l.b16 %v4289
        %v4560 = vunpack.c.h.b16 %v4289
        %v4561 = vunpack.c.l.b16 %v4290
        %v4562 = vunpack.c.h.b16 %v4290
        %v4563 = vunpack.c.l.b16 %v4291
        %v4564 = vunpack.c.h.b16 %v4291
        %v4565 = vunpack.c.l.b16 %v4292
        %v4566 = vunpack.c.h.b16 %v4292
        %v4567 = vunpack.c.l.b16 %v4293
        %v4568 = vunpack.c.h.b16 %v4293
        %v4569 = vunpack.c.l.b16 %v4294
        %v4570 = vunpack.c.h.b16 %v4294
        %v4571 = vunpack.c.l.b16 %v4295
        %v4572 = vunpack.c.h.b16 %v4295
        %v4573 = vunpack.c.l.b16 %v4296
        %v4574 = vunpack.c.h.b16 %v4296
        %v4575 = vunpack.c.l.b16 %v4297
        %v4576 = vunpack.c.h.b16 %v4297
        %v4577 = vunpack.c.l.b16 %v4298
        %v4578 = vunpack.c.h.b16 %v4298
        %v4579 = vunpack.c.l.b16 %v4299
        %v4580 = vunpack.c.h.b16 %v4299
        %v4581 = vunpack.c.l.b16 %v4300
        %v4582 = vunpack.c.h.b16 %v4300
        %v4583 = vunpack.c.l.b16 %v4301
        %v4584 = vunpack.c.h.b16 %v4301
        %v4585 = vunpack.c.l.b16 %v4302
        %v4586 = vunpack.c.h.b16 %v4302
        %v4587 = vunpack.c.l.b16 %v4303
        %v4588 = vunpack.c.h.b16 %v4303
        %v4589 = vunpack.c.l.b16 %v4304
        %v4590 = vunpack.c.h.b16 %v4304
        %v4591 = vunpack.c.l.b16 %v4305
        %v4592 = vunpack.c.h.b16 %v4305
        %v4593 = vunpack.c.l.b16 %v4306
        %v4594 = vunpack.c.h.b16 %v4306
        %v4595 = vpack.c.b16 %v4405, %v4403
        %v4596 = vpack.c.b16 %v4406, %v4404
        %v4597 = vpack.c.b16 %v4409, %v4407
        %v4598 = vpack.c.b16 %v4410, %v4408
        %v4599 = vpack.c.b16 %v4413, %v4411
        %v4600 = vpack.c.b16 %v4414, %v4412
        %v4601 = vpack.c.b16 %v4417, %v4415
        %v4602 = vpack.c.b16 %v4418, %v4416
        %v4603 = vpack.c.b16 %v4421, %v4419
        %v4604 = vpack.c.b16 %v4422, %v4420
        %v4605 = vpack.c.b16 %v4425, %v4423
        %v4606 = vpack.c.b16 %v4426, %v4424
        %v4607 = vpack.c.b16 %v4429, %v4427
        %v4608 = vpack.c.b16 %v4430, %v4428
        %v4609 = vpack.c.b16 %v4433, %v4431
        %v4610 = vpack.c.b16 %v4434, %v4432
        %v4611 = vpack.c.b16 %v4437, %v4435
        %v4612 = vpack.c.b16 %v4438, %v4436
        %v4613 = vpack.c.b16 %v4441, %v4439
        %v4614 = vpack.c.b16 %v4442, %v4440
        %v4615 = vpack.c.b16 %v4445, %v4443
        %v4616 = vpack.c.b16 %v4446, %v4444
        %v4617 = vpack.c.b16 %v4449, %v4447
        %v4618 = vpack.c.b16 %v4450, %v4448
        %v4619 = vpack.c.b16 %v4453, %v4451
        %v4620 = vpack.c.b16 %v4454, %v4452
        %v4621 = vpack.c.b16 %v4457, %v4455
        %v4622 = vpack.c.b16 %v4458, %v4456
        %v4623 = vpack.c.b16 %v4461, %v4459
        %v4624 = vpack.c.b16 %v4462, %v4460
        %v4625 = vpack.c.b16 %v4465, %v4463
        %v4626 = vpack.c.b16 %v4466, %v4464
        %v4627 = vpack.c.b16 %v4469, %v4467
        %v4628 = vpack.c.b16 %v4470, %v4468
        %v4629 = vpack.c.b16 %v4473, %v4471
        %v4630 = vpack.c.b16 %v4474, %v4472
        %v4631 = vpack.c.b16 %v4477, %v4475
        %v4632 = vpack.c.b16 %v4478, %v4476
        %v4633 = vpack.c.b16 %v4481, %v4479
        %v4634 = vpack.c.b16 %v4482, %v4480
        %v4635 = vpack.c.b16 %v4485, %v4483
        %v4636 = vpack.c.b16 %v4486, %v4484
        %v4637 = vpack.c.b16 %v4489, %v4487
        %v4638 = vpack.c.b16 %v4490, %v4488
        %v4639 = vpack.c.b16 %v4493, %v4491
        %v4640 = vpack.c.b16 %v4494, %v4492
        %v4641 = vpack.c.b16 %v4497, %v4495
        %v4642 = vpack.c.b16 %v4498, %v4496
        %v4643 = vpack.c.b16 %v4501, %v4499
        %v4644 = vpack.c.b16 %v4502, %v4500
        %v4645 = vpack.c.b16 %v4505, %v4503
        %v4646 = vpack.c.b16 %v4506, %v4504
        %v4647 = vpack.c.b16 %v4509, %v4507
        %v4648 = vpack.c.b16 %v4510, %v4508
        %v4649 = vpack.c.b16 %v4513, %v4511
        %v4650 = vpack.c.b16 %v4514, %v4512
        %v4651 = vpack.c.b16 %v4517, %v4515
        %v4652 = vpack.c.b16 %v4518, %v4516
        %v4653 = vpack.c.b16 %v4521, %v4519
        %v4654 = vpack.c.b16 %v4522, %v4520
        %v4655 = vpack.c.b16 %v4525, %v4523
        %v4656 = vpack.c.b16 %v4526, %v4524
        %v4657 = vpack.c.b16 %v4529, %v4527
        %v4658 = vpack.c.b16 %v4530, %v4528
        %v4659 = vpack.c.b16 %v4533, %v4531
        %v4660 = vpack.c.b16 %v4534, %v4532
        %v4661 = vpack.c.b16 %v4537, %v4535
        %v4662 = vpack.c.b16 %v4538, %v4536
        %v4663 = vpack.c.b16 %v4541, %v4539
        %v4664 = vpack.c.b16 %v4542, %v4540
        %v4665 = vpack.c.b16 %v4545, %v4543
        %v4666 = vpack.c.b16 %v4546, %v4544
        %v4667 = vpack.c.b16 %v4549, %v4547
        %v4668 = vpack.c.b16 %v4550, %v4548
        %v4669 = vpack.c.b16 %v4553, %v4551
        %v4670 = vpack.c.b16 %v4554, %v4552
        %v4671 = vpack.c.b16 %v4557, %v4555
        %v4672 = vpack.c.b16 %v4558, %v4556
        %v4673 = vpack.c.b16 %v4561, %v4559
        %v4674 = vpack.c.b16 %v4562, %v4560
        %v4675 = vpack.c.b16 %v4565, %v4563
        %v4676 = vpack.c.b16 %v4566, %v4564
        %v4677 = vpack.c.b16 %v4569, %v4567
        %v4678 = vpack.c.b16 %v4570, %v4568
        %v4679 = vpack.c.b16 %v4573, %v4571
        %v4680 = vpack.c.b16 %v4574, %v4572
        %v4681 = vpack.c.b16 %v4577, %v4575
        %v4682 = vpack.c.b16 %v4578, %v4576
        %v4683 = vpack.c.b16 %v4581, %v4579
        %v4684 = vpack.c.b16 %v4582, %v4580
        %v4685 = vpack.c.b16 %v4585, %v4583
        %v4686 = vpack.c.b16 %v4586, %v4584
        %v4687 = vpack.c.b16 %v4589, %v4587
        %v4688 = vpack.c.b16 %v4590, %v4588
        %v4689 = vpack.c.b16 %v4593, %v4591
        %v4690 = vpack.c.b16 %v4594, %v4592
        %4787 = vmatprep.subr.bf16.mxu0 %v4596
        %4788 = vmatpush1.bf16.msra.mxu0 %v4595
        %4789 = vmatprep.subr.bf16.mxu0 %v4598
        %4790 = vmatpush1.bf16.msra.mxu0 %v4597
        %4791 = vmatprep.subr.bf16.mxu0 %v4600
        %4792 = vmatpush1.bf16.msra.mxu0 %v4599
        %4793 = vmatprep.subr.bf16.mxu0 %v4602
        %4794 = vmatpush1.bf16.msra.mxu0 %v4601
        %4795 = vmatprep.subr.bf16.mxu0 %v4604
        %4796 = vmatpush1.bf16.msra.mxu0 %v4603
        %4797 = vmatprep.subr.bf16.mxu0 %v4606
        %4798 = vmatpush1.bf16.msra.mxu0 %v4605
        %4799 = vmatprep.subr.bf16.mxu0 %v4608
        %4800 = vmatpush1.bf16.msra.mxu0 %v4607
        %4801 = vmatprep.subr.bf16.mxu0 %v4610
        %4802 = vmatpush1.bf16.msra.mxu0 %v4609
        %4803 = vmatprep.subr.bf16.mxu0 %v4612
        %4804 = vmatpush1.bf16.msra.mxu0 %v4611
        %4805 = vmatprep.subr.bf16.mxu0 %v4614
        %4806 = vmatpush1.bf16.msra.mxu0 %v4613
        %4807 = vmatprep.subr.bf16.mxu0 %v4616
        %4808 = vmatpush1.bf16.msra.mxu0 %v4615
        %4809 = vmatprep.subr.bf16.mxu0 %v4618
        %4810 = vmatpush1.bf16.msra.mxu0 %v4617
        %4811 = vmatprep.subr.bf16.mxu0 %v4620
        %4812 = vmatpush1.bf16.msra.mxu0 %v4619
        %4813 = vmatprep.subr.bf16.mxu0 %v4622
        %4814 = vmatpush1.bf16.msra.mxu0 %v4621
        %4815 = vmatprep.subr.bf16.mxu0 %v4624
        %4816 = vmatpush1.bf16.msra.mxu0 %v4623
        %4817 = vmatprep.subr.bf16.mxu0 %v4626
        %4818 = vmatpush1.bf16.msra.mxu0 %v4625
        %4819 = vmatprep.mubr.bf16.mxu0 %v4115
        %4820 = vmatmul.mubr.bf16.gmra.mrb[0].mxu0 %v4114
        %v4821 = vpop.f32.mrb[0].mxu0
        %v4822 = vadd.f32 0.0, %v4821
        %v4823 = vpop.f32.mrb[0].mxu0
        %v4824 = vadd.f32 0.0, %v4823
        %v4825 = vpop.f32.mrb[0].mxu0
        %v4826 = vadd.f32 0.0, %v4825
        %v4827 = vpop.f32.mrb[0].mxu0
        %v4828 = vadd.f32 0.0, %v4827
        %4829 = vmatprep.mubr.bf16.mxu0 %v4121
        %4830 = vmatmul.mubr.bf16.gmra.mrb[0].mxu0 %v4120
        %v4831 = vpop.f32.mrb[0].mxu0
        %v4832 = vadd.f32 0.0, %v4831
        %v4833 = vpop.f32.mrb[0].mxu0
        %v4834 = vadd.f32 0.0, %v4833
        %v4835 = vpop.f32.mrb[0].mxu0
        %v4836 = vadd.f32 0.0, %v4835
        %v4837 = vpop.f32.mrb[0].mxu0
        %v4838 = vadd.f32 0.0, %v4837
        %4839 = vmatprep.mubr.bf16.mxu0 %v4127
        %4840 = vmatmul.mubr.bf16.gmra.mrb[0].mxu0 %v4126
        %v4841 = vpop.f32.mrb[0].mxu0
        %v4842 = vadd.f32 0.0, %v4841
        %v4843 = vpop.f32.mrb[0].mxu0
        %v4844 = vadd.f32 0.0, %v4843
        %v4845 = vpop.f32.mrb[0].mxu0
        %v4846 = vadd.f32 0.0, %v4845
        %v4847 = vpop.f32.mrb[0].mxu0
        %v4848 = vadd.f32 0.0, %v4847
        %4849 = vmatprep.mubr.bf16.mxu0 %v4133
        %4850 = vmatmul.mubr.bf16.gmra.mrb[0].mxu0 %v4132
        %v4851 = vpop.f32.mrb[0].mxu0
        %v4852 = vadd.f32 0.0, %v4851
        %v4853 = vpop.f32.mrb[0].mxu0
        %v4854 = vadd.f32 0.0, %v4853
        %v4855 = vpop.f32.mrb[0].mxu0
        %v4856 = vadd.f32 0.0, %v4855
        %v4857 = vpop.f32.mrb[0].mxu0
        %v4858 = vadd.f32 0.0, %v4857
        %4859 = vmatprep.mubr.bf16.mxu0 %v4139
        %4860 = vmatmul.mubr.bf16.gmra.mrb[0].mxu0 %v4138
        %v4861 = vpop.f32.mrb[0].mxu0
        %v4862 = vadd.f32 0.0, %v4861
        %v4863 = vpop.f32.mrb[0].mxu0
        %v4864 = vadd.f32 0.0, %v4863
        %v4865 = vpop.f32.mrb[0].mxu0
        %v4866 = vadd.f32 0.0, %v4865
        %v4867 = vpop.f32.mrb[0].mxu0
        %v4868 = vadd.f32 0.0, %v4867
        %4869 = vmatprep.mubr.bf16.mxu0 %v4145
        %4870 = vmatmul.mubr.bf16.gmra.mrb[0].mxu0 %v4144
        %v4871 = vpop.f32.mrb[0].mxu0
        %v4872 = vadd.f32 0.0, %v4871
        %v4873 = vpop.f32.mrb[0].mxu0
        %v4874 = vadd.f32 0.0, %v4873
        %v4875 = vpop.f32.mrb[0].mxu0
        %v4876 = vadd.f32 0.0, %v4875
        %v4877 = vpop.f32.mrb[0].mxu0
        %v4878 = vadd.f32 0.0, %v4877
        %4879 = vmatprep.mubr.bf16.mxu0 %v4151
        %4880 = vmatmul.mubr.bf16.gmra.mrb[0].mxu0 %v4150
        %v4881 = vpop.f32.mrb[0].mxu0
        %v4882 = vadd.f32 0.0, %v4881
        %v4883 = vpop.f32.mrb[0].mxu0
        %v4884 = vadd.f32 0.0, %v4883
        %v4885 = vpop.f32.mrb[0].mxu0
        %v4886 = vadd.f32 0.0, %v4885
        %v4887 = vpop.f32.mrb[0].mxu0
        %v4888 = vadd.f32 0.0, %v4887
        %4889 = vmatprep.mubr.bf16.mxu0 %v4157
        %4890 = vmatmul.mubr.bf16.gmra.mrb[0].mxu0 %v4156
        %v4891 = vpop.f32.mrb[0].mxu0
        %v4892 = vadd.f32 0.0, %v4891
        %v4893 = vpop.f32.mrb[0].mxu0
        %v4894 = vadd.f32 0.0, %v4893
        %v4895 = vpop.f32.mrb[0].mxu0
        %v4896 = vadd.f32 0.0, %v4895
        %v4897 = vpop.f32.mrb[0].mxu0
        %v4898 = vadd.f32 0.0, %v4897
        %4899 = vmatprep.mubr.bf16.mxu0 %v4163
        %4900 = vmatmul.mubr.bf16.gmra.mrb[0].mxu0 %v4162
        %v4901 = vpop.f32.mrb[0].mxu0
        %v4902 = vadd.f32 0.0, %v4901
        %v4903 = vpop.f32.mrb[0].mxu0
        %v4904 = vadd.f32 0.0, %v4903
        %v4905 = vpop.f32.mrb[0].mxu0
        %v4906 = vadd.f32 0.0, %v4905
        %v4907 = vpop.f32.mrb[0].mxu0
        %v4908 = vadd.f32 0.0, %v4907
        %4909 = vmatprep.mubr.bf16.mxu0 %v4169
        %4910 = vmatmul.mubr.bf16.gmra.mrb[0].mxu0 %v4168
        %v4911 = vpop.f32.mrb[0].mxu0
        %v4912 = vadd.f32 0.0, %v4911
        %v4913 = vpop.f32.mrb[0].mxu0
        %v4914 = vadd.f32 0.0, %v4913
        %v4915 = vpop.f32.mrb[0].mxu0
        %v4916 = vadd.f32 0.0, %v4915
        %v4917 = vpop.f32.mrb[0].mxu0
        %v4918 = vadd.f32 0.0, %v4917
        %4919 = vmatprep.mubr.bf16.mxu0 %v4175
        %4920 = vmatmul.mubr.bf16.gmra.mrb[0].mxu0 %v4174
        %v4921 = vpop.f32.mrb[0].mxu0
        %v4922 = vadd.f32 0.0, %v4921
        %v4923 = vpop.f32.mrb[0].mxu0
        %v4924 = vadd.f32 0.0, %v4923
        %v4925 = vpop.f32.mrb[0].mxu0
        %v4926 = vadd.f32 0.0, %v4925
        %v4927 = vpop.f32.mrb[0].mxu0
        %v4928 = vadd.f32 0.0, %v4927
        %4929 = vmatprep.mubr.bf16.mxu0 %v4181
        %4930 = vmatmul.mubr.bf16.gmra.mrb[0].mxu0 %v4180
        %v4931 = vpop.f32.mrb[0].mxu0
        %v4932 = vadd.f32 0.0, %v4931
        %v4933 = vpop.f32.mrb[0].mxu0
        %v4934 = vadd.f32 0.0, %v4933
        %v4935 = vpop.f32.mrb[0].mxu0
        %v4936 = vadd.f32 0.0, %v4935
        %v4937 = vpop.f32.mrb[0].mxu0
        %v4938 = vadd.f32 0.0, %v4937
        %4939 = vmatprep.mubr.bf16.mxu0 %v4187
        %4940 = vmatmul.mubr.bf16.gmra.mrb[0].mxu0 %v4186
        %v4941 = vpop.f32.mrb[0].mxu0
        %v4942 = vadd.f32 0.0, %v4941
        %v4943 = vpop.f32.mrb[0].mxu0
        %v4944 = vadd.f32 0.0, %v4943
        %v4945 = vpop.f32.mrb[0].mxu0
        %v4946 = vadd.f32 0.0, %v4945
        %v4947 = vpop.f32.mrb[0].mxu0
        %v4948 = vadd.f32 0.0, %v4947
        %4949 = vmatprep.mubr.bf16.mxu0 %v4193
        %4950 = vmatmul.mubr.bf16.gmra.mrb[0].mxu0 %v4192
        %v4951 = vpop.f32.mrb[0].mxu0
        %v4952 = vadd.f32 0.0, %v4951
        %v4953 = vpop.f32.mrb[0].mxu0
        %v4954 = vadd.f32 0.0, %v4953
        %v4955 = vpop.f32.mrb[0].mxu0
        %v4956 = vadd.f32 0.0, %v4955
        %v4957 = vpop.f32.mrb[0].mxu0
        %v4958 = vadd.f32 0.0, %v4957
        %4959 = vmatprep.mubr.bf16.mxu0 %v4199
        %4960 = vmatmul.mubr.bf16.gmra.mrb[0].mxu0 %v4198
        %v4961 = vpop.f32.mrb[0].mxu0
        %v4962 = vadd.f32 0.0, %v4961
        %v4963 = vpop.f32.mrb[0].mxu0
        %v4964 = vadd.f32 0.0, %v4963
        %v4965 = vpop.f32.mrb[0].mxu0
        %v4966 = vadd.f32 0.0, %v4965
        %v4967 = vpop.f32.mrb[0].mxu0
        %v4968 = vadd.f32 0.0, %v4967
        %4969 = vmatprep.mubr.bf16.mxu0 %v4205
        %4970 = vmatmul.mubr.bf16.gmra.mrb[0].mxu0 %v4204
        %v4971 = vpop.f32.mrb[0].mxu0
        %v4972 = vadd.f32 0.0, %v4971
        %v4973 = vpop.f32.mrb[0].mxu0
        %v4974 = vadd.f32 0.0, %v4973
        %v4975 = vpop.f32.mrb[0].mxu0
        %v4976 = vadd.f32 0.0, %v4975
        %v4977 = vpop.f32.mrb[0].mxu0
        %v4978 = vadd.f32 0.0, %v4977
        %4979 = vdwg.mxu0
        %4980 = vmatprep.subr.bf16.mxu0 %v4628
        %4981 = vmatpush1.bf16.msra.mxu0 %v4627
        %4982 = vmatprep.subr.bf16.mxu0 %v4630
        %4983 = vmatpush1.bf16.msra.mxu0 %v4629
        %4984 = vmatprep.subr.bf16.mxu0 %v4632
        %4985 = vmatpush1.bf16.msra.mxu0 %v4631
        %4986 = vmatprep.subr.bf16.mxu0 %v4634
        %4987 = vmatpush1.bf16.msra.mxu0 %v4633
        %4988 = vmatprep.subr.bf16.mxu0 %v4636
        %4989 = vmatpush1.bf16.msra.mxu0 %v4635
        %4990 = vmatprep.subr.bf16.mxu0 %v4638
        %4991 = vmatpush1.bf16.msra.mxu0 %v4637
        %4992 = vmatprep.subr.bf16.mxu0 %v4640
        %4993 = vmatpush1.bf16.msra.mxu0 %v4639
        %4994 = vmatprep.subr.bf16.mxu0 %v4642
        %4995 = vmatpush1.bf16.msra.mxu0 %v4641
        %4996 = vmatprep.subr.bf16.mxu0 %v4644
        %4997 = vmatpush1.bf16.msra.mxu0 %v4643
        %4998 = vmatprep.subr.bf16.mxu0 %v4646
        %4999 = vmatpush1.bf16.msra.mxu0 %v4645
        %5000 = vmatprep.subr.bf16.mxu0 %v4648
        %5001 = vmatpush1.bf16.msra.mxu0 %v4647
        %5002 = vmatprep.subr.bf16.mxu0 %v4650
        %5003 = vmatpush1.bf16.msra.mxu0 %v4649
        %5004 = vmatprep.subr.bf16.mxu0 %v4652
        %5005 = vmatpush1.bf16.msra.mxu0 %v4651
        %5006 = vmatprep.subr.bf16.mxu0 %v4654
        %5007 = vmatpush1.bf16.msra.mxu0 %v4653
        %5008 = vmatprep.subr.bf16.mxu0 %v4656
        %5009 = vmatpush1.bf16.msra.mxu0 %v4655
        %5010 = vmatprep.subr.bf16.mxu0 %v4658
        %5011 = vmatpush1.bf16.msra.mxu0 %v4657
        %5012 = vmatprep.mubr.bf16.mxu0 %v4117
        %5013 = vmatmul.mubr.bf16.gmra.mrb[0].mxu0 %v4116
        %v5014 = vpop.f32.mrb[0].mxu0
        %v5015 = vadd.f32 %v4822, %v5014
        %v5016 = vpop.f32.mrb[0].mxu0
        %v5017 = vadd.f32 %v4824, %v5016
        %v5018 = vpop.f32.mrb[0].mxu0
        %v5019 = vadd.f32 %v4826, %v5018
        %v5020 = vpop.f32.mrb[0].mxu0
        %v5021 = vadd.f32 %v4828, %v5020
        %5022 = vmatprep.mubr.bf16.mxu0 %v4123
        %5023 = vmatmul.mubr.bf16.gmra.mrb[0].mxu0 %v4122
        %v5024 = vpop.f32.mrb[0].mxu0
        %v5025 = vadd.f32 %v4832, %v5024
        %v5026 = vpop.f32.mrb[0].mxu0
        %v5027 = vadd.f32 %v4834, %v5026
        %v5028 = vpop.f32.mrb[0].mxu0
        %v5029 = vadd.f32 %v4836, %v5028
        %v5030 = vpop.f32.mrb[0].mxu0
        %v5031 = vadd.f32 %v4838, %v5030
        %5032 = vmatprep.mubr.bf16.mxu0 %v4129
        %5033 = vmatmul.mubr.bf16.gmra.mrb[0].mxu0 %v4128
        %v5034 = vpop.f32.mrb[0].mxu0
        %v5035 = vadd.f32 %v4842, %v5034
        %v5036 = vpop.f32.mrb[0].mxu0
        %v5037 = vadd.f32 %v4844, %v5036
        %v5038 = vpop.f32.mrb[0].mxu0
        %v5039 = vadd.f32 %v4846, %v5038
        %v5040 = vpop.f32.mrb[0].mxu0
        %v5041 = vadd.f32 %v4848, %v5040
        %5042 = vmatprep.mubr.bf16.mxu0 %v4135
        %5043 = vmatmul.mubr.bf16.gmra.mrb[0].mxu0 %v4134
        %v5044 = vpop.f32.mrb[0].mxu0
        %v5045 = vadd.f32 %v4852, %v5044
        %v5046 = vpop.f32.mrb[0].mxu0
        %v5047 = vadd.f32 %v4854, %v5046
        %v5048 = vpop.f32.mrb[0].mxu0
        %v5049 = vadd.f32 %v4856, %v5048
        %v5050 = vpop.f32.mrb[0].mxu0
        %v5051 = vadd.f32 %v4858, %v5050
        %5052 = vmatprep.mubr.bf16.mxu0 %v4141
        %5053 = vmatmul.mubr.bf16.gmra.mrb[0].mxu0 %v4140
        %v5054 = vpop.f32.mrb[0].mxu0
        %v5055 = vadd.f32 %v4862, %v5054
        %v5056 = vpop.f32.mrb[0].mxu0
        %v5057 = vadd.f32 %v4864, %v5056
        %v5058 = vpop.f32.mrb[0].mxu0
        %v5059 = vadd.f32 %v4866, %v5058
        %v5060 = vpop.f32.mrb[0].mxu0
        %v5061 = vadd.f32 %v4868, %v5060
        %5062 = vmatprep.mubr.bf16.mxu0 %v4147
        %5063 = vmatmul.mubr.bf16.gmra.mrb[0].mxu0 %v4146
        %v5064 = vpop.f32.mrb[0].mxu0
        %v5065 = vadd.f32 %v4872, %v5064
        %v5066 = vpop.f32.mrb[0].mxu0
        %v5067 = vadd.f32 %v4874, %v5066
        %v5068 = vpop.f32.mrb[0].mxu0
        %v5069 = vadd.f32 %v4876, %v5068
        %v5070 = vpop.f32.mrb[0].mxu0
        %v5071 = vadd.f32 %v4878, %v5070
        %5072 = vmatprep.mubr.bf16.mxu0 %v4153
        %5073 = vmatmul.mubr.bf16.gmra.mrb[0].mxu0 %v4152
        %v5074 = vpop.f32.mrb[0].mxu0
        %v5075 = vadd.f32 %v4882, %v5074
        %v5076 = vpop.f32.mrb[0].mxu0
        %v5077 = vadd.f32 %v4884, %v5076
        %v5078 = vpop.f32.mrb[0].mxu0
        %v5079 = vadd.f32 %v4886, %v5078
        %v5080 = vpop.f32.mrb[0].mxu0
        %v5081 = vadd.f32 %v4888, %v5080
        %5082 = vmatprep.mubr.bf16.mxu0 %v4159
        %5083 = vmatmul.mubr.bf16.gmra.mrb[0].mxu0 %v4158
        %v5084 = vpop.f32.mrb[0].mxu0
        %v5085 = vadd.f32 %v4892, %v5084
        %v5086 = vpop.f32.mrb[0].mxu0
        %v5087 = vadd.f32 %v4894, %v5086
        %v5088 = vpop.f32.mrb[0].mxu0
        %v5089 = vadd.f32 %v4896, %v5088
        %v5090 = vpop.f32.mrb[0].mxu0
        %v5091 = vadd.f32 %v4898, %v5090
        %5092 = vmatprep.mubr.bf16.mxu0 %v4165
        %5093 = vmatmul.mubr.bf16.gmra.mrb[0].mxu0 %v4164
        %v5094 = vpop.f32.mrb[0].mxu0
        %v5095 = vadd.f32 %v4902, %v5094
        %v5096 = vpop.f32.mrb[0].mxu0
        %v5097 = vadd.f32 %v4904, %v5096
        %v5098 = vpop.f32.mrb[0].mxu0
        %v5099 = vadd.f32 %v4906, %v5098
        %v5100 = vpop.f32.mrb[0].mxu0
        %v5101 = vadd.f32 %v4908, %v5100
        %5102 = vmatprep.mubr.bf16.mxu0 %v4171
        %5103 = vmatmul.mubr.bf16.gmra.mrb[0].mxu0 %v4170
        %v5104 = vpop.f32.mrb[0].mxu0
        %v5105 = vadd.f32 %v4912, %v5104
        %v5106 = vpop.f32.mrb[0].mxu0
        %v5107 = vadd.f32 %v4914, %v5106
        %v5108 = vpop.f32.mrb[0].mxu0
        %v5109 = vadd.f32 %v4916, %v5108
        %v5110 = vpop.f32.mrb[0].mxu0
        %v5111 = vadd.f32 %v4918, %v5110
        %5112 = vmatprep.mubr.bf16.mxu0 %v4177
        %5113 = vmatmul.mubr.bf16.gmra.mrb[0].mxu0 %v4176
        %v5114 = vpop.f32.mrb[0].mxu0
        %v5115 = vadd.f32 %v4922, %v5114
        %v5116 = vpop.f32.mrb[0].mxu0
        %v5117 = vadd.f32 %v4924, %v5116
        %v5118 = vpop.f32.mrb[0].mxu0
        %v5119 = vadd.f32 %v4926, %v5118
        %v5120 = vpop.f32.mrb[0].mxu0
        %v5121 = vadd.f32 %v4928, %v5120
        %5122 = vmatprep.mubr.bf16.mxu0 %v4183
        %5123 = vmatmul.mubr.bf16.gmra.mrb[0].mxu0 %v4182
        %v5124 = vpop.f32.mrb[0].mxu0
        %v5125 = vadd.f32 %v4932, %v5124
        %v5126 = vpop.f32.mrb[0].mxu0
        %v5127 = vadd.f32 %v4934, %v5126
        %v5128 = vpop.f32.mrb[0].mxu0
        %v5129 = vadd.f32 %v4936, %v5128
        %v5130 = vpop.f32.mrb[0].mxu0
        %v5131 = vadd.f32 %v4938, %v5130
        %5132 = vmatprep.mubr.bf16.mxu0 %v4189
        %5133 = vmatmul.mubr.bf16.gmra.mrb[0].mxu0 %v4188
        %v5134 = vpop.f32.mrb[0].mxu0
        %v5135 = vadd.f32 %v4942, %v5134
        %v5136 = vpop.f32.mrb[0].mxu0
        %v5137 = vadd.f32 %v4944, %v5136
        %v5138 = vpop.f32.mrb[0].mxu0
        %v5139 = vadd.f32 %v4946, %v5138
        %v5140 = vpop.f32.mrb[0].mxu0
        %v5141 = vadd.f32 %v4948, %v5140
        %5142 = vmatprep.mubr.bf16.mxu0 %v4195
        %5143 = vmatmul.mubr.bf16.gmra.mrb[0].mxu0 %v4194
        %v5144 = vpop.f32.mrb[0].mxu0
        %v5145 = vadd.f32 %v4952, %v5144
        %v5146 = vpop.f32.mrb[0].mxu0
        %v5147 = vadd.f32 %v4954, %v5146
        %v5148 = vpop.f32.mrb[0].mxu0
        %v5149 = vadd.f32 %v4956, %v5148
        %v5150 = vpop.f32.mrb[0].mxu0
        %v5151 = vadd.f32 %v4958, %v5150
        %5152 = vmatprep.mubr.bf16.mxu0 %v4201
        %5153 = vmatmul.mubr.bf16.gmra.mrb[0].mxu0 %v4200
        %v5154 = vpop.f32.mrb[0].mxu0
        %v5155 = vadd.f32 %v4962, %v5154
        %v5156 = vpop.f32.mrb[0].mxu0
        %v5157 = vadd.f32 %v4964, %v5156
        %v5158 = vpop.f32.mrb[0].mxu0
        %v5159 = vadd.f32 %v4966, %v5158
        %v5160 = vpop.f32.mrb[0].mxu0
        %v5161 = vadd.f32 %v4968, %v5160
        %5162 = vmatprep.mubr.bf16.mxu0 %v4207
        %5163 = vmatmul.mubr.bf16.gmra.mrb[0].mxu0 %v4206
        %v5164 = vpop.f32.mrb[0].mxu0
        %v5165 = vadd.f32 %v4972, %v5164
        %v5166 = vpop.f32.mrb[0].mxu0
        %v5167 = vadd.f32 %v4974, %v5166
        %v5168 = vpop.f32.mrb[0].mxu0
        %v5169 = vadd.f32 %v4976, %v5168
        %v5170 = vpop.f32.mrb[0].mxu0
        %v5171 = vadd.f32 %v4978, %v5170
        %5172 = vdwg.mxu0
        %5173 = vmatprep.subr.bf16.mxu0 %v4660
        %5174 = vmatpush1.bf16.msra.mxu0 %v4659
        %5175 = vmatprep.subr.bf16.mxu0 %v4662
        %5176 = vmatpush1.bf16.msra.mxu0 %v4661
        %5177 = vmatprep.subr.bf16.mxu0 %v4664
        %5178 = vmatpush1.bf16.msra.mxu0 %v4663
        %5179 = vmatprep.subr.bf16.mxu0 %v4666
        %5180 = vmatpush1.bf16.msra.mxu0 %v4665
        %5181 = vmatprep.subr.bf16.mxu0 %v4668
        %5182 = vmatpush1.bf16.msra.mxu0 %v4667
        %5183 = vmatprep.subr.bf16.mxu0 %v4670
        %5184 = vmatpush1.bf16.msra.mxu0 %v4669
        %5185 = vmatprep.subr.bf16.mxu0 %v4672
        %5186 = vmatpush1.bf16.msra.mxu0 %v4671
        %5187 = vmatprep.subr.bf16.mxu0 %v4674
        %5188 = vmatpush1.bf16.msra.mxu0 %v4673
        %5189 = vmatprep.subr.bf16.mxu0 %v4676
        %5190 = vmatpush1.bf16.msra.mxu0 %v4675
        %5191 = vmatprep.subr.bf16.mxu0 %v4678
        %5192 = vmatpush1.bf16.msra.mxu0 %v4677
        %5193 = vmatprep.subr.bf16.mxu0 %v4680
        %5194 = vmatpush1.bf16.msra.mxu0 %v4679
        %5195 = vmatprep.subr.bf16.mxu0 %v4682
        %5196 = vmatpush1.bf16.msra.mxu0 %v4681
        %5197 = vmatprep.subr.bf16.mxu0 %v4684
        %5198 = vmatpush1.bf16.msra.mxu0 %v4683
        %5199 = vmatprep.subr.bf16.mxu0 %v4686
        %5200 = vmatpush1.bf16.msra.mxu0 %v4685
        %5201 = vmatprep.subr.bf16.mxu0 %v4688
        %5202 = vmatpush1.bf16.msra.mxu0 %v4687
        %5203 = vmatprep.subr.bf16.mxu0 %v4690
        %5204 = vmatpush1.bf16.msra.mxu0 %v4689
        %5205 = vmatprep.mubr.bf16.mxu0 %v4119
        %5206 = vmatmul.mubr.bf16.gmra.mrb[0].mxu0 %v4118
        %v5207 = vpop.f32.mrb[0].mxu0
        %v5208 = vadd.f32 %v5015, %v5207
        %v5209 = vpop.f32.mrb[0].mxu0
        %v5210 = vadd.f32 %v5017, %v5209
        %v5211 = vpop.f32.mrb[0].mxu0
        %v5212 = vadd.f32 %v5019, %v5211
        %v5213 = vpop.f32.mrb[0].mxu0
        %v5214 = vadd.f32 %v5021, %v5213
        %5215 = vmatprep.mubr.bf16.mxu0 %v4125
        %5216 = vmatmul.mubr.bf16.gmra.mrb[0].mxu0 %v4124
        %v5217 = vpop.f32.mrb[0].mxu0
        %v5218 = vadd.f32 %v5025, %v5217
        %v5219 = vpop.f32.mrb[0].mxu0
        %v5220 = vadd.f32 %v5027, %v5219
        %v5221 = vpop.f32.mrb[0].mxu0
        %v5222 = vadd.f32 %v5029, %v5221
        %v5223 = vpop.f32.mrb[0].mxu0
        %v5224 = vadd.f32 %v5031, %v5223
        %5225 = vmatprep.mubr.bf16.mxu0 %v4131
        %5226 = vmatmul.mubr.bf16.gmra.mrb[0].mxu0 %v4130
        %v5227 = vpop.f32.mrb[0].mxu0
        %v5228 = vadd.f32 %v5035, %v5227
        %v5229 = vpop.f32.mrb[0].mxu0
        %v5230 = vadd.f32 %v5037, %v5229
        %v5231 = vpop.f32.mrb[0].mxu0
        %v5232 = vadd.f32 %v5039, %v5231
        %v5233 = vpop.f32.mrb[0].mxu0
        %v5234 = vadd.f32 %v5041, %v5233
        %5235 = vmatprep.mubr.bf16.mxu0 %v4137
        %5236 = vmatmul.mubr.bf16.gmra.mrb[0].mxu0 %v4136
        %v5237 = vpop.f32.mrb[0].mxu0
        %v5238 = vadd.f32 %v5045, %v5237
        %v5239 = vpop.f32.mrb[0].mxu0
        %v5240 = vadd.f32 %v5047, %v5239
        %v5241 = vpop.f32.mrb[0].mxu0
        %v5242 = vadd.f32 %v5049, %v5241
        %v5243 = vpop.f32.mrb[0].mxu0
        %v5244 = vadd.f32 %v5051, %v5243
        %5245 = vmatprep.mubr.bf16.mxu0 %v4143
        %5246 = vmatmul.mubr.bf16.gmra.mrb[0].mxu0 %v4142
        %v5247 = vpop.f32.mrb[0].mxu0
        %v5248 = vadd.f32 %v5055, %v5247
        %v5249 = vpop.f32.mrb[0].mxu0
        %v5250 = vadd.f32 %v5057, %v5249
        %v5251 = vpop.f32.mrb[0].mxu0
        %v5252 = vadd.f32 %v5059, %v5251
        %v5253 = vpop.f32.mrb[0].mxu0
        %v5254 = vadd.f32 %v5061, %v5253
        %5255 = vmatprep.mubr.bf16.mxu0 %v4149
        %5256 = vmatmul.mubr.bf16.gmra.mrb[0].mxu0 %v4148
        %v5257 = vpop.f32.mrb[0].mxu0
        %v5258 = vadd.f32 %v5065, %v5257
        %v5259 = vpop.f32.mrb[0].mxu0
        %v5260 = vadd.f32 %v5067, %v5259
        %v5261 = vpop.f32.mrb[0].mxu0
        %v5262 = vadd.f32 %v5069, %v5261
        %v5263 = vpop.f32.mrb[0].mxu0
        %v5264 = vadd.f32 %v5071, %v5263
        %5265 = vmatprep.mubr.bf16.mxu0 %v4155
        %5266 = vmatmul.mubr.bf16.gmra.mrb[0].mxu0 %v4154
        %v5267 = vpop.f32.mrb[0].mxu0
        %v5268 = vadd.f32 %v5075, %v5267
        %v5269 = vpop.f32.mrb[0].mxu0
        %v5270 = vadd.f32 %v5077, %v5269
        %v5271 = vpop.f32.mrb[0].mxu0
        %v5272 = vadd.f32 %v5079, %v5271
        %v5273 = vpop.f32.mrb[0].mxu0
        %v5274 = vadd.f32 %v5081, %v5273
        %5275 = vmatprep.mubr.bf16.mxu0 %v4161
        %5276 = vmatmul.mubr.bf16.gmra.mrb[0].mxu0 %v4160
        %v5277 = vpop.f32.mrb[0].mxu0
        %v5278 = vadd.f32 %v5085, %v5277
        %v5279 = vpop.f32.mrb[0].mxu0
        %v5280 = vadd.f32 %v5087, %v5279
        %v5281 = vpop.f32.mrb[0].mxu0
        %v5282 = vadd.f32 %v5089, %v5281
        %v5283 = vpop.f32.mrb[0].mxu0
        %v5284 = vadd.f32 %v5091, %v5283
        %5285 = vmatprep.mubr.bf16.mxu0 %v4167
        %5286 = vmatmul.mubr.bf16.gmra.mrb[0].mxu0 %v4166
        %v5287 = vpop.f32.mrb[0].mxu0
        %v5288 = vadd.f32 %v5095, %v5287
        %v5289 = vpop.f32.mrb[0].mxu0
        %v5290 = vadd.f32 %v5097, %v5289
        %v5291 = vpop.f32.mrb[0].mxu0
        %v5292 = vadd.f32 %v5099, %v5291
        %v5293 = vpop.f32.mrb[0].mxu0
        %v5294 = vadd.f32 %v5101, %v5293
        %5295 = vmatprep.mubr.bf16.mxu0 %v4173
        %5296 = vmatmul.mubr.bf16.gmra.mrb[0].mxu0 %v4172
        %v5297 = vpop.f32.mrb[0].mxu0
        %v5298 = vadd.f32 %v5105, %v5297
        %v5299 = vpop.f32.mrb[0].mxu0
        %v5300 = vadd.f32 %v5107, %v5299
        %v5301 = vpop.f32.mrb[0].mxu0
        %v5302 = vadd.f32 %v5109, %v5301
        %v5303 = vpop.f32.mrb[0].mxu0
        %v5304 = vadd.f32 %v5111, %v5303
        %5305 = vmatprep.mubr.bf16.mxu0 %v4179
        %5306 = vmatmul.mubr.bf16.gmra.mrb[0].mxu0 %v4178
        %v5307 = vpop.f32.mrb[0].mxu0
        %v5308 = vadd.f32 %v5115, %v5307
        %v5309 = vpop.f32.mrb[0].mxu0
        %v5310 = vadd.f32 %v5117, %v5309
        %v5311 = vpop.f32.mrb[0].mxu0
        %v5312 = vadd.f32 %v5119, %v5311
        %v5313 = vpop.f32.mrb[0].mxu0
        %v5314 = vadd.f32 %v5121, %v5313
        %5315 = vmatprep.mubr.bf16.mxu0 %v4185
        %5316 = vmatmul.mubr.bf16.gmra.mrb[0].mxu0 %v4184
        %v5317 = vpop.f32.mrb[0].mxu0
        %v5318 = vadd.f32 %v5125, %v5317
        %v5319 = vpop.f32.mrb[0].mxu0
        %v5320 = vadd.f32 %v5127, %v5319
        %v5321 = vpop.f32.mrb[0].mxu0
        %v5322 = vadd.f32 %v5129, %v5321
        %v5323 = vpop.f32.mrb[0].mxu0
        %v5324 = vadd.f32 %v5131, %v5323
        %5325 = vmatprep.mubr.bf16.mxu0 %v4191
        %5326 = vmatmul.mubr.bf16.gmra.mrb[0].mxu0 %v4190
        %v5327 = vpop.f32.mrb[0].mxu0
        %v5328 = vadd.f32 %v5135, %v5327
        %v5329 = vpop.f32.mrb[0].mxu0
        %v5330 = vadd.f32 %v5137, %v5329
        %v5331 = vpop.f32.mrb[0].mxu0
        %v5332 = vadd.f32 %v5139, %v5331
        %v5333 = vpop.f32.mrb[0].mxu0
        %v5334 = vadd.f32 %v5141, %v5333
        %5335 = vmatprep.mubr.bf16.mxu0 %v4197
        %5336 = vmatmul.mubr.bf16.gmra.mrb[0].mxu0 %v4196
        %v5337 = vpop.f32.mrb[0].mxu0
        %v5338 = vadd.f32 %v5145, %v5337
        %v5339 = vpop.f32.mrb[0].mxu0
        %v5340 = vadd.f32 %v5147, %v5339
        %v5341 = vpop.f32.mrb[0].mxu0
        %v5342 = vadd.f32 %v5149, %v5341
        %v5343 = vpop.f32.mrb[0].mxu0
        %v5344 = vadd.f32 %v5151, %v5343
        %5345 = vmatprep.mubr.bf16.mxu0 %v4203
        %5346 = vmatmul.mubr.bf16.gmra.mrb[0].mxu0 %v4202
        %v5347 = vpop.f32.mrb[0].mxu0
        %v5348 = vadd.f32 %v5155, %v5347
        %v5349 = vpop.f32.mrb[0].mxu0
        %v5350 = vadd.f32 %v5157, %v5349
        %v5351 = vpop.f32.mrb[0].mxu0
        %v5352 = vadd.f32 %v5159, %v5351
        %v5353 = vpop.f32.mrb[0].mxu0
        %v5354 = vadd.f32 %v5161, %v5353
        %5355 = vmatprep.mubr.bf16.mxu0 %v4209
        %5356 = vmatmul.mubr.bf16.gmra.mrb[0].mxu0 %v4208
        %v5357 = vpop.f32.mrb[0].mxu0
        %v5358 = vadd.f32 %v5165, %v5357
        %v5359 = vpop.f32.mrb[0].mxu0
        %v5360 = vadd.f32 %v5167, %v5359
        %v5361 = vpop.f32.mrb[0].mxu0
        %v5362 = vadd.f32 %v5169, %v5361
        %v5363 = vpop.f32.mrb[0].mxu0
        %v5364 = vadd.f32 %v5171, %v5363
        %5365 = vdwg.mxu0
        %v5366 = vadd.f32 %v4050, %v5208
        %v5367 = vadd.f32 %v4051, %v5210
        %v5368 = vadd.f32 %v4052, %v5212
        %v5369 = vadd.f32 %v4053, %v5214
        %v5370 = vadd.f32 %v4054, %v5218
        %v5371 = vadd.f32 %v4055, %v5220
        %v5372 = vadd.f32 %v4056, %v5222
        %v5373 = vadd.f32 %v4057, %v5224
        %v5374 = vadd.f32 %v4058, %v5228
        %v5375 = vadd.f32 %v4059, %v5230
        %v5376 = vadd.f32 %v4060, %v5232
        %v5377 = vadd.f32 %v4061, %v5234
        %v5378 = vadd.f32 %v4062, %v5238
        %v5379 = vadd.f32 %v4063, %v5240
        %v5380 = vadd.f32 %v4064, %v5242
        %v5381 = vadd.f32 %v4065, %v5244
        %v5382 = vadd.f32 %v4066, %v5248
        %v5383 = vadd.f32 %v4067, %v5250
        %v5384 = vadd.f32 %v4068, %v5252
        %v5385 = vadd.f32 %v4069, %v5254
        %v5386 = vadd.f32 %v4070, %v5258
        %v5387 = vadd.f32 %v4071, %v5260
        %v5388 = vadd.f32 %v4072, %v5262
        %v5389 = vadd.f32 %v4073, %v5264
        %v5390 = vadd.f32 %v4074, %v5268
        %v5391 = vadd.f32 %v4075, %v5270
        %v5392 = vadd.f32 %v4076, %v5272
        %v5393 = vadd.f32 %v4077, %v5274
        %v5394 = vadd.f32 %v4078, %v5278
        %v5395 = vadd.f32 %v4079, %v5280
        %v5396 = vadd.f32 %v4080, %v5282
        %v5397 = vadd.f32 %v4081, %v5284
        %v5398 = vadd.f32 %v4082, %v5288
        %v5399 = vadd.f32 %v4083, %v5290
        %v5400 = vadd.f32 %v4084, %v5292
        %v5401 = vadd.f32 %v4085, %v5294
        %v5402 = vadd.f32 %v4086, %v5298
        %v5403 = vadd.f32 %v4087, %v5300
        %v5404 = vadd.f32 %v4088, %v5302
        %v5405 = vadd.f32 %v4089, %v5304
        %v5406 = vadd.f32 %v4090, %v5308
        %v5407 = vadd.f32 %v4091, %v5310
        %v5408 = vadd.f32 %v4092, %v5312
        %v5409 = vadd.f32 %v4093, %v5314
        %v5410 = vadd.f32 %v4094, %v5318
        %v5411 = vadd.f32 %v4095, %v5320
        %v5412 = vadd.f32 %v4096, %v5322
        %v5413 = vadd.f32 %v4097, %v5324
        %v5414 = vadd.f32 %v4098, %v5328
        %v5415 = vadd.f32 %v4099, %v5330
        %v5416 = vadd.f32 %v4100, %v5332
        %v5417 = vadd.f32 %v4101, %v5334
        %v5418 = vadd.f32 %v4102, %v5338
        %v5419 = vadd.f32 %v4103, %v5340
        %v5420 = vadd.f32 %v4104, %v5342
        %v5421 = vadd.f32 %v4105, %v5344
        %v5422 = vadd.f32 %v4106, %v5348
        %v5423 = vadd.f32 %v4107, %v5350
        %v5424 = vadd.f32 %v4108, %v5352
        %v5425 = vadd.f32 %v4109, %v5354
        %v5426 = vadd.f32 %v4110, %v5358
        %v5427 = vadd.f32 %v4111, %v5360
        %v5428 = vadd.f32 %v4112, %v5362
        %v5429 = vadd.f32 %v4113, %v5364
        %v5430 = vld [vmem:[%s2] sm:$0x3]
        %v5432 = vlaneseq
        %v5433 = vshrl.u32 %v5432, 7
        %v5434 = vsub.s32 0, %v5433
        %v5435 = vrot.slane %v5430, %v5434
        %v5436 = vlaneseq
        %v5437 = vshrl.u32 %v5436, 7
        %v5438 = vsub.s32 1, %v5437
        %v5439 = vrot.slane %v5430, %v5438
        %v5442 = vmul.f32 %v5366, %v5435
        %v5443 = vmul.f32 %v5367, %v5439
        %v5444 = vmul.f32 %v5368, %v5435
        %v5445 = vmul.f32 %v5369, %v5439
        %v5446 = vmul.f32 %v5370, %v5435
        %v5447 = vmul.f32 %v5371, %v5439
        %v5448 = vmul.f32 %v5372, %v5435
        %v5449 = vmul.f32 %v5373, %v5439
        %v5450 = vmul.f32 %v5374, %v5435
        %v5451 = vmul.f32 %v5375, %v5439
        %v5452 = vmul.f32 %v5376, %v5435
        %v5453 = vmul.f32 %v5377, %v5439
        %v5454 = vmul.f32 %v5378, %v5435
        %v5455 = vmul.f32 %v5379, %v5439
        %v5456 = vmul.f32 %v5380, %v5435
        %v5457 = vmul.f32 %v5381, %v5439
        %v5458 = vmul.f32 %v5382, %v5435
        %v5459 = vmul.f32 %v5383, %v5439
        %v5460 = vmul.f32 %v5384, %v5435
        %v5461 = vmul.f32 %v5385, %v5439
        %v5462 = vmul.f32 %v5386, %v5435
        %v5463 = vmul.f32 %v5387, %v5439
        %v5464 = vmul.f32 %v5388, %v5435
        %v5465 = vmul.f32 %v5389, %v5439
        %v5466 = vmul.f32 %v5390, %v5435
        %v5467 = vmul.f32 %v5391, %v5439
        %v5468 = vmul.f32 %v5392, %v5435
        %v5469 = vmul.f32 %v5393, %v5439
        %v5470 = vmul.f32 %v5394, %v5435
        %v5471 = vmul.f32 %v5395, %v5439
        %v5472 = vmul.f32 %v5396, %v5435
        %v5473 = vmul.f32 %v5397, %v5439
        %v5474 = vmul.f32 %v5398, %v5435
        %v5475 = vmul.f32 %v5399, %v5439
        %v5476 = vmul.f32 %v5400, %v5435
        %v5477 = vmul.f32 %v5401, %v5439
        %v5478 = vmul.f32 %v5402, %v5435
        %v5479 = vmul.f32 %v5403, %v5439
        %v5480 = vmul.f32 %v5404, %v5435
        %v5481 = vmul.f32 %v5405, %v5439
        %v5482 = vmul.f32 %v5406, %v5435
        %v5483 = vmul.f32 %v5407, %v5439
        %v5484 = vmul.f32 %v5408, %v5435
        %v5485 = vmul.f32 %v5409, %v5439
        %v5486 = vmul.f32 %v5410, %v5435
        %v5487 = vmul.f32 %v5411, %v5439
        %v5488 = vmul.f32 %v5412, %v5435
        %v5489 = vmul.f32 %v5413, %v5439
        %v5490 = vmul.f32 %v5414, %v5435
        %v5491 = vmul.f32 %v5415, %v5439
        %v5492 = vmul.f32 %v5416, %v5435
        %v5493 = vmul.f32 %v5417, %v5439
        %v5494 = vmul.f32 %v5418, %v5435
        %v5495 = vmul.f32 %v5419, %v5439
        %v5496 = vmul.f32 %v5420, %v5435
        %v5497 = vmul.f32 %v5421, %v5439
        %v5498 = vmul.f32 %v5422, %v5435
        %v5499 = vmul.f32 %v5423, %v5439
        %v5500 = vmul.f32 %v5424, %v5435
        %v5501 = vmul.f32 %v5425, %v5439
        %v5502 = vmul.f32 %v5426, %v5435
        %v5503 = vmul.f32 %v5427, %v5439
        %v5504 = vmul.f32 %v5428, %v5435
        %v5505 = vmul.f32 %v5429, %v5439
        %v5506 = vld [vmem:[%s3] sm:$0x3]
        %v5508 = vlaneseq
        %v5509 = vshrl.u32 %v5508, 7
        %v5510 = vsub.s32 0, %v5509
        %v5511 = vrot.slane %v5506, %v5510
        %v5512 = vlaneseq
        %v5513 = vshrl.u32 %v5512, 7
        %v5514 = vsub.s32 1, %v5513
        %v5515 = vrot.slane %v5506, %v5514
        %v5518 = vadd.f32 %v5442, %v5511
        %v5519 = vadd.f32 %v5443, %v5515
        %v5520 = vadd.f32 %v5444, %v5511
        %v5521 = vadd.f32 %v5445, %v5515
        %v5522 = vadd.f32 %v5446, %v5511
        %v5523 = vadd.f32 %v5447, %v5515
        %v5524 = vadd.f32 %v5448, %v5511
        %v5525 = vadd.f32 %v5449, %v5515
        %v5526 = vadd.f32 %v5450, %v5511
        %v5527 = vadd.f32 %v5451, %v5515
        %v5528 = vadd.f32 %v5452, %v5511
        %v5529 = vadd.f32 %v5453, %v5515
        %v5530 = vadd.f32 %v5454, %v5511
        %v5531 = vadd.f32 %v5455, %v5515
        %v5532 = vadd.f32 %v5456, %v5511
        %v5533 = vadd.f32 %v5457, %v5515
        %v5534 = vadd.f32 %v5458, %v5511
        %v5535 = vadd.f32 %v5459, %v5515
        %v5536 = vadd.f32 %v5460, %v5511
        %v5537 = vadd.f32 %v5461, %v5515
        %v5538 = vadd.f32 %v5462, %v5511
        %v5539 = vadd.f32 %v5463, %v5515
        %v5540 = vadd.f32 %v5464, %v5511
        %v5541 = vadd.f32 %v5465, %v5515
        %v5542 = vadd.f32 %v5466, %v5511
        %v5543 = vadd.f32 %v5467, %v5515
        %v5544 = vadd.f32 %v5468, %v5511
        %v5545 = vadd.f32 %v5469, %v5515
        %v5546 = vadd.f32 %v5470, %v5511
        %v5547 = vadd.f32 %v5471, %v5515
        %v5548 = vadd.f32 %v5472, %v5511
        %v5549 = vadd.f32 %v5473, %v5515
        %v5550 = vadd.f32 %v5474, %v5511
        %v5551 = vadd.f32 %v5475, %v5515
        %v5552 = vadd.f32 %v5476, %v5511
        %v5553 = vadd.f32 %v5477, %v5515
        %v5554 = vadd.f32 %v5478, %v5511
        %v5555 = vadd.f32 %v5479, %v5515
        %v5556 = vadd.f32 %v5480, %v5511
        %v5557 = vadd.f32 %v5481, %v5515
        %v5558 = vadd.f32 %v5482, %v5511
        %v5559 = vadd.f32 %v5483, %v5515
        %v5560 = vadd.f32 %v5484, %v5511
        %v5561 = vadd.f32 %v5485, %v5515
        %v5562 = vadd.f32 %v5486, %v5511
        %v5563 = vadd.f32 %v5487, %v5515
        %v5564 = vadd.f32 %v5488, %v5511
        %v5565 = vadd.f32 %v5489, %v5515
        %v5566 = vadd.f32 %v5490, %v5511
        %v5567 = vadd.f32 %v5491, %v5515
        %v5568 = vadd.f32 %v5492, %v5511
        %v5569 = vadd.f32 %v5493, %v5515
        %v5570 = vadd.f32 %v5494, %v5511
        %v5571 = vadd.f32 %v5495, %v5515
        %v5572 = vadd.f32 %v5496, %v5511
        %v5573 = vadd.f32 %v5497, %v5515
        %v5574 = vadd.f32 %v5498, %v5511
        %v5575 = vadd.f32 %v5499, %v5515
        %v5576 = vadd.f32 %v5500, %v5511
        %v5577 = vadd.f32 %v5501, %v5515
        %v5578 = vadd.f32 %v5502, %v5511
        %v5579 = vadd.f32 %v5503, %v5515
        %v5580 = vadd.f32 %v5504, %v5511
        %v5581 = vadd.f32 %v5505, %v5515
        %v5582 = vmax.f32 %v5518, 0.0
        %v5583 = vmax.f32 %v5519, 0.0
        %v5584 = vmax.f32 %v5520, 0.0
        %v5585 = vmax.f32 %v5521, 0.0
        %v5586 = vmax.f32 %v5522, 0.0
        %v5587 = vmax.f32 %v5523, 0.0
        %v5588 = vmax.f32 %v5524, 0.0
        %v5589 = vmax.f32 %v5525, 0.0
        %v5590 = vmax.f32 %v5526, 0.0
        %v5591 = vmax.f32 %v5527, 0.0
        %v5592 = vmax.f32 %v5528, 0.0
        %v5593 = vmax.f32 %v5529, 0.0
        %v5594 = vmax.f32 %v5530, 0.0
        %v5595 = vmax.f32 %v5531, 0.0
        %v5596 = vmax.f32 %v5532, 0.0
        %v5597 = vmax.f32 %v5533, 0.0
        %v5598 = vmax.f32 %v5534, 0.0
        %v5599 = vmax.f32 %v5535, 0.0
        %v5600 = vmax.f32 %v5536, 0.0
        %v5601 = vmax.f32 %v5537, 0.0
        %v5602 = vmax.f32 %v5538, 0.0
        %v5603 = vmax.f32 %v5539, 0.0
        %v5604 = vmax.f32 %v5540, 0.0
        %v5605 = vmax.f32 %v5541, 0.0
        %v5606 = vmax.f32 %v5542, 0.0
        %v5607 = vmax.f32 %v5543, 0.0
        %v5608 = vmax.f32 %v5544, 0.0
        %v5609 = vmax.f32 %v5545, 0.0
        %v5610 = vmax.f32 %v5546, 0.0
        %v5611 = vmax.f32 %v5547, 0.0
        %v5612 = vmax.f32 %v5548, 0.0
        %v5613 = vmax.f32 %v5549, 0.0
        %v5614 = vmax.f32 %v5550, 0.0
        %v5615 = vmax.f32 %v5551, 0.0
        %v5616 = vmax.f32 %v5552, 0.0
        %v5617 = vmax.f32 %v5553, 0.0
        %v5618 = vmax.f32 %v5554, 0.0
        %v5619 = vmax.f32 %v5555, 0.0
        %v5620 = vmax.f32 %v5556, 0.0
        %v5621 = vmax.f32 %v5557, 0.0
        %v5622 = vmax.f32 %v5558, 0.0
        %v5623 = vmax.f32 %v5559, 0.0
        %v5624 = vmax.f32 %v5560, 0.0
        %v5625 = vmax.f32 %v5561, 0.0
        %v5626 = vmax.f32 %v5562, 0.0
        %v5627 = vmax.f32 %v5563, 0.0
        %v5628 = vmax.f32 %v5564, 0.0
        %v5629 = vmax.f32 %v5565, 0.0
        %v5630 = vmax.f32 %v5566, 0.0
        %v5631 = vmax.f32 %v5567, 0.0
        %v5632 = vmax.f32 %v5568, 0.0
        %v5633 = vmax.f32 %v5569, 0.0
        %v5634 = vmax.f32 %v5570, 0.0
        %v5635 = vmax.f32 %v5571, 0.0
        %v5636 = vmax.f32 %v5572, 0.0
        %v5637 = vmax.f32 %v5573, 0.0
        %v5638 = vmax.f32 %v5574, 0.0
        %v5639 = vmax.f32 %v5575, 0.0
        %v5640 = vmax.f32 %v5576, 0.0
        %v5641 = vmax.f32 %v5577, 0.0
        %v5642 = vmax.f32 %v5578, 0.0
        %v5643 = vmax.f32 %v5579, 0.0
        %v5644 = vmax.f32 %v5580, 0.0
        %v5645 = vmax.f32 %v5581, 0.0
        %5646 = vst [vmem:[%s244] sm:$0xff] %v5582
        %5647 = vst [vmem:[%s244 + $0x8] sm:$0xff] %v5583
        %5648 = vst [vmem:[%s244 + $0x10] sm:$0xff] %v5584
        %5649 = vst [vmem:[%s244 + $0x18] sm:$0xff] %v5585
        %5650 = vst [vmem:[%s244 + $0x20] sm:$0xff] %v5586
        %5651 = vst [vmem:[%s244 + $0x28] sm:$0xff] %v5587
        %5652 = vst [vmem:[%s244 + $0x30] sm:$0xff] %v5588
        %5653 = vst [vmem:[%s244 + $0x38] sm:$0xff] %v5589
        %5654 = vst [vmem:[%s244 + $0x40] sm:$0xff] %v5590
        %5655 = vst [vmem:[%s244 + $0x48] sm:$0xff] %v5591
        %5656 = vst [vmem:[%s244 + $0x50] sm:$0xff] %v5592
        %5657 = vst [vmem:[%s244 + $0x58] sm:$0xff] %v5593
        %5658 = vst [vmem:[%s244 + $0x60] sm:$0xff] %v5594
        %5659 = vst [vmem:[%s244 + $0x68] sm:$0xff] %v5595
        %5660 = vst [vmem:[%s244 + $0x70] sm:$0xff] %v5596
        %5661 = vst [vmem:[%s244 + $0x78] sm:$0xff] %v5597
        %5662 = vst [vmem:[%s244 + $0x80] sm:$0xff] %v5598
        %5663 = vst [vmem:[%s244 + $0x88] sm:$0xff] %v5599
        %5664 = vst [vmem:[%s244 + $0x90] sm:$0xff] %v5600
        %5665 = vst [vmem:[%s244 + $0x98] sm:$0xff] %v5601
        %5666 = vst [vmem:[%s244 + $0xa0] sm:$0xff] %v5602
        %5667 = vst [vmem:[%s244 + $0xa8] sm:$0xff] %v5603
        %5668 = vst [vmem:[%s244 + $0xb0] sm:$0xff] %v5604
        %5669 = vst [vmem:[%s244 + $0xb8] sm:$0xff] %v5605
        %5670 = vst [vmem:[%s244 + $0xc0] sm:$0xff] %v5606
        %5671 = vst [vmem:[%s244 + $0xc8] sm:$0xff] %v5607
        %5672 = vst [vmem:[%s244 + $0xd0] sm:$0xff] %v5608
        %5673 = vst [vmem:[%s244 + $0xd8] sm:$0xff] %v5609
        %5674 = vst [vmem:[%s244 + $0xe0] sm:$0xff] %v5610
        %5675 = vst [vmem:[%s244 + $0xe8] sm:$0xff] %v5611
        %5676 = vst [vmem:[%s244 + $0xf0] sm:$0xff] %v5612
        %5677 = vst [vmem:[%s244 + $0xf8] sm:$0xff] %v5613
        %5678 = vst [vmem:[%s244 + $0x100] sm:$0xff] %v5614
        %5679 = vst [vmem:[%s244 + $0x108] sm:$0xff] %v5615
        %5680 = vst [vmem:[%s244 + $0x110] sm:$0xff] %v5616
        %5681 = vst [vmem:[%s244 + $0x118] sm:$0xff] %v5617
        %5682 = vst [vmem:[%s244 + $0x120] sm:$0xff] %v5618
        %5683 = vst [vmem:[%s244 + $0x128] sm:$0xff] %v5619
        %5684 = vst [vmem:[%s244 + $0x130] sm:$0xff] %v5620
        %5685 = vst [vmem:[%s244 + $0x138] sm:$0xff] %v5621
        %5686 = vst [vmem:[%s244 + $0x140] sm:$0xff] %v5622
        %5687 = vst [vmem:[%s244 + $0x148] sm:$0xff] %v5623
        %5688 = vst [vmem:[%s244 + $0x150] sm:$0xff] %v5624
        %5689 = vst [vmem:[%s244 + $0x158] sm:$0xff] %v5625
        %5690 = vst [vmem:[%s244 + $0x160] sm:$0xff] %v5626
        %5691 = vst [vmem:[%s244 + $0x168] sm:$0xff] %v5627
        %5692 = vst [vmem:[%s244 + $0x170] sm:$0xff] %v5628
        %5693 = vst [vmem:[%s244 + $0x178] sm:$0xff] %v5629
        %5694 = vst [vmem:[%s244 + $0x180] sm:$0xff] %v5630
        %5695 = vst [vmem:[%s244 + $0x188] sm:$0xff] %v5631
        %5696 = vst [vmem:[%s244 + $0x190] sm:$0xff] %v5632
        %5697 = vst [vmem:[%s244 + $0x198] sm:$0xff] %v5633
        %5698 = vst [vmem:[%s244 + $0x1a0] sm:$0xff] %v5634
        %5699 = vst [vmem:[%s244 + $0x1a8] sm:$0xff] %v5635
        %5700 = vst [vmem:[%s244 + $0x1b0] sm:$0xff] %v5636
        %5701 = vst [vmem:[%s244 + $0x1b8] sm:$0xff] %v5637
        %5702 = vst [vmem:[%s244 + $0x1c0] sm:$0xff] %v5638
        %5703 = vst [vmem:[%s244 + $0x1c8] sm:$0xff] %v5639
        %5704 = vst [vmem:[%s244 + $0x1d0] sm:$0xff] %v5640
        %5705 = vst [vmem:[%s244 + $0x1d8] sm:$0xff] %v5641
        %5706 = vst [vmem:[%s244 + $0x1e0] sm:$0xff] %v5642
        %5707 = vst [vmem:[%s244 + $0x1e8] sm:$0xff] %v5643
        %5708 = vst [vmem:[%s244 + $0x1f0] sm:$0xff] %v5644
        %5709 = vst [vmem:[%s244 + $0x1f8] sm:$0xff] %v5645
        %s5710 = sand.u32 %s159, 1
        %s5711 = scalar_lea.sflag [#allocation4], %s5710
        %s5712 = sand.u32 %s159, 1
        %s5713 = smul.addr %s5712, 512
        %s5714 = scalar_lea.vmem [#allocation3], %s5713
        // Predicated region
        $region45: #{conv3x3_bn_relu_pallas.1} parent=43 // pred_check
          %p5715 = pneg %p169
        $region46: #{conv3x3_bn_relu_pallas.1} parent=43 // pred_check_branch
          %5717 = sbr.rel (%p5715) target = $region48
        $region47: #{conv3x3_bn_relu_pallas.1} parent=43 // pred_region
          %s5719 = ssub.s32 8192, 8192
          %5720 = vsyncadd %s5711, %s5719
          %s5721 = smul.addr %s20, 64
          %s5722 = smul.addr %s5721, 128
          %s5723 = scalar_lea.hbm %s6, %s5722
          %s5724 = sshll.u32 %s5714, 4
          %s5725 = int_to_ptr.vmem [resolvable:$true] %s5724
          %5730 = dma.vmem_to_hbm [thread:$0]  %s5725, 8192, %s5723, %s5711, 256, 256, 16
        $region48: #{conv3x3_bn_relu_pallas.1} parent=43 // pred_fallthru
          _
      $region44: #{conv3x3_bn_relu_pallas.1} parent=5 // pred_fallthru
        _
      %p5731 = scmp.le.s32.totalorder 2, %s15
      // Predicated region
      $region49: #{conv3x3_bn_relu_pallas.1} parent=5 // pred_check
        %p5732 = pneg %p5731
      $region50: #{conv3x3_bn_relu_pallas.1} parent=5 // pred_check_branch
        %5734 = sbr.rel (%p5732) target = $region52
      $region51: #{conv3x3_bn_relu_pallas.1} parent=5 // pred_region
        %s5735 = ssub.s32 %s15, 2
        // Predicated region
        $region53: #{conv3x3_bn_relu_pallas.1} parent=51 // pred_check
          %p5736 = pneg %p175
        $region54: #{conv3x3_bn_relu_pallas.1} parent=51 // pred_check_branch
          %5738 = sbr.rel (%p5736) target = $region56
        $region55: #{conv3x3_bn_relu_pallas.1} parent=51 // pred_region
          %s5739 = sand.u32 %s160, 1
          %s5740 = scalar_lea.sflag [#allocation4], %s5739
          %s5741 = sand.u32 %s160, 1
          %s5742 = smul.addr %s5741, 512
          %s5743 = scalar_lea.vmem [#allocation3], %s5742
          %5744 = dma.done %s5740, 8192
        $region56: #{conv3x3_bn_relu_pallas.1} parent=51 // pred_fallthru
          _
      $region52: #{conv3x3_bn_relu_pallas.1} parent=5 // pred_fallthru
        _
    $region6: #{conv3x3_bn_relu_pallas.1} parent=1 // loop_footer
      %s19 = sadd.s32 1, %s15
    $region7: #{conv3x3_bn_relu_pallas.1} parent=1 // loop_footer_branch
      %14 = sbr.rel target = $region3
    $region8: #{conv3x3_bn_relu_pallas.1} parent=1 // loop_exit
      _
    %5745 = vsyncpa [#allocation4], 1
    %s5746 = scalar_lea.sflag [#allocation4], 1
    %5747 = vsyncpa %s5746, 1

</llo_original>
